<compile_context>
chip_gen: v7x
topology: tpu7x:2x2x1
jax: 0.10.0
libtpu: 0.0.40
codegen_flags: <defaults>
</compile_context>

<pallas_src>
import jax
import jax.numpy as jnp
import numpy as np
from jax import lax
from jax.experimental import pallas as pl
from jax.experimental.pallas import tpu as pltpu

EPS = 1e-5
NEG_SLOPE = 0.2
NUM_GROUPS = 16


# ---------------------------------------------------------------------------
# In-kernel building blocks (operate on f32 / bf16 values living in VMEM/vregs)
# ---------------------------------------------------------------------------
def _gn_lrelu(y, gmat, gamma, beta):
    """GroupNorm(16, affine) + LeakyReLU(0.2) on a (HW, C) f32 tile."""
    # Fuse sum and sum-of-squares into one (2, C) @ (C, C) group-averaging dot.
    s = jnp.concatenate(
        [jnp.sum(y, axis=0, keepdims=True),
         jnp.sum(y * y, axis=0, keepdims=True)], axis=0)              # (2, C)
    gs = jnp.dot(s, gmat, preferred_element_type=jnp.float32)         # (2, C)
    mean = gs[0:1]
    var = jnp.maximum(gs[1:2] - mean * mean, 0.0)                     # clamp >= 0
    inv = lax.rsqrt(var + EPS)
    z = (y - mean) * inv * gamma + beta
    return jnp.where(z > 0, z, NEG_SLOPE * z)


def _conv9(h_bf16, g_ref, w_ref):
    """3x3 conv as 9 accumulated shift-matmuls: sum_k (G_k @ h) @ W_k.

    h_bf16: (HWin, Cin) bf16,  g_ref: (9, HWout, HWin) bf16 0/1 shift matrices,
    w_ref: (9, Cin, Cout) bf16.  Returns (HWout, Cout) f32.
    """
    hwo = g_ref.shape[1]
    cout = w_ref.shape[2]
    acc = jnp.zeros((hwo, cout), jnp.float32)
    for k in range(9):
        t = jnp.dot(g_ref[k], h_bf16, preferred_element_type=jnp.float32)
        acc = acc + jnp.dot(t.astype(jnp.bfloat16), w_ref[k],
                            preferred_element_type=jnp.float32)
    return acc


def _encoder_kernel(p1_ref, w1_ref, bgb1_ref, gm1_ref,
                    g2_ref, w2_ref, bgb2_ref, gm2_ref,
                    g3_ref, w3_ref, bgb3_ref, gm3_ref,
                    o_ref):
    """One batch element: fused (conv+GN+LeakyReLU) x 3, intermediates on-chip."""
    # ---- block 1 (nc -> nf, stride 2): one im2col matmul on the MXU ----
    y1 = jnp.dot(p1_ref[...], w1_ref[...], preferred_element_type=jnp.float32)
    y1 = y1 + bgb1_ref[0:1]
    h1 = _gn_lrelu(y1, gm1_ref[...], bgb1_ref[1:2], bgb1_ref[2:3])    # (HW1, nf) f32

    # ---- block 2 (nf -> nf, stride 1): 9 shift-matmuls, no HBM patches ----
    y2 = _conv9(h1.astype(jnp.bfloat16), g2_ref, w2_ref) + bgb2_ref[0:1]
    h2 = _gn_lrelu(y2, gm2_ref[...], bgb2_ref[1:2], bgb2_ref[2:3])    # (HW2, nf)

    # ---- block 3 (nf -> 2nf, stride 2) ----
    y3 = _conv9(h2.astype(jnp.bfloat16), g3_ref, w3_ref) + bgb3_ref[0:1]
    h3 = _gn_lrelu(y3, gm3_ref[...], bgb3_ref[1:2], bgb3_ref[2:3])    # (HW3, 2nf)

    o_ref[...] = h3.astype(o_ref.dtype)


# ---------------------------------------------------------------------------
# Static (shape-only) helpers, built in numpy at trace time
# ---------------------------------------------------------------------------
def _out_size(size, stride):
    return (size + 2 - 3) // stride + 1


def _shift_matrices(hi, wi, stride):
    """(9, HoWo, HiWi) 0/1 matrices: G_k @ x_flat == shifted+zero-padded tap k."""
    ho, wo = _out_size(hi, stride), _out_size(wi, stride)
    g = np.zeros((9, ho * wo, hi * wi), np.float32)
    for dy in range(3):
        for dx in range(3):
            k = dy * 3 + dx
            for oy in range(ho):
                iy = oy * stride + dy - 1
                if iy < 0 or iy >= hi:
                    continue
                for ox in range(wo):
                    ix = ox * stride + dx - 1
                    if ix < 0 or ix >= wi:
                        continue
                    g[k, oy * wo + ox, iy * wi + ix] = 1.0
    return g, ho, wo


def _group_mean_matrix(c, hw):
    """(C, C) matrix spreading per-channel sums into per-group means."""
    cpg = c // NUM_GROUPS
    gid = np.arange(c) // cpg
    return (gid[:, None] == gid[None, :]).astype(np.float32) / float(cpg * hw)


def _im2col_l1(x_nhwc, stride):
    """(N,H,W,C) -> (N, Ho*Wo, 9*C) patches for the first (tiny, Cin=3) conv."""
    n, h, w, c = x_nhwc.shape
    ho, wo = _out_size(h, stride), _out_size(w, stride)
    xp = jnp.pad(x_nhwc, ((0, 0), (1, 1), (1, 1), (0, 0)))
    taps = [xp[:, dy:dy + stride * ho:stride, dx:dx + stride * wo:stride, :]
            for dy in range(3) for dx in range(3)]
    p = jnp.stack(taps, axis=-2)                       # (N, Ho, Wo, 9, C)
    return p.reshape(n, ho * wo, 9 * c), ho, wo


# ---------------------------------------------------------------------------
# Forward pass
# ---------------------------------------------------------------------------
@jax.jit
def encoder_E_forward(x_nchw, params):
    n, nc, h, w = x_nchw.shape
    nf = params["c1"]["w"].shape[0]
    c1, c2, c3 = nf, nf, 2 * nf

    x = jnp.transpose(x_nchw, (0, 2, 3, 1)).astype(jnp.float32)      # NHWC

    # Layer-1 patches (the only XLA-side im2col; ~14 KB total at these shapes).
    p1, h1s, w1s = _im2col_l1(x, stride=2)
    hw1 = h1s * w1s
    k1c = 9 * nc
    p1 = p1.astype(jnp.bfloat16)

    # Static shift matrices for the in-kernel convs of layers 2 (s=1) and 3 (s=2).
    g2_np, h2s, w2s = _shift_matrices(h1s, w1s, 1)
    g3_np, h3s, w3s = _shift_matrices(h2s, w2s, 2)
    hw2, hw3 = h2s * w2s, h3s * w3s
    g2 = jnp.asarray(g2_np, jnp.bfloat16)              # 0/1 -> exact in bf16
    g3 = jnp.asarray(g3_np, jnp.bfloat16)

    def wflat(wt):        # (Cout, Cin, 3, 3) -> (9*Cin, Cout), (ky,kx,cin) order
        co, ci = wt.shape[0], wt.shape[1]
        return jnp.transpose(wt, (2, 3, 1, 0)).reshape(9 * ci, co).astype(jnp.bfloat16)

    def wtaps(wt):        # (Cout, Cin, 3, 3) -> (9, Cin, Cout)
        co, ci = wt.shape[0], wt.shape[1]
        return jnp.transpose(wt, (2, 3, 1, 0)).reshape(9, ci, co).astype(jnp.bfloat16)

    def bgb(p):           # rows: conv bias, GN gamma, GN beta  -> (3, Cout) f32
        return jnp.stack([p["b"], p["gamma"], p["beta"]], axis=0).astype(jnp.float32)

    w1, w2, w3 = wflat(params["c1"]["w"]), wtaps(params["c2"]["w"]), wtaps(params["c3"]["w"])
    bgb1, bgb2, bgb3 = bgb(params["c1"]), bgb(params["c2"]), bgb(params["c3"])
    gm1 = jnp.asarray(_group_mean_matrix(c1, hw1), jnp.float32)
    gm2 = jnp.asarray(_group_mean_matrix(c2, hw2), jnp.float32)
    gm3 = jnp.asarray(_group_mean_matrix(c3, hw3), jnp.float32)

    # Constant-index-map operands are fetched once and stay VMEM-resident.
    spec2 = lambda a: pl.BlockSpec(a.shape, lambda b: (0, 0))
    spec3 = lambda a: pl.BlockSpec(a.shape, lambda b: (0, 0, 0))

    out = pl.pallas_call(
        _encoder_kernel,
        out_shape=jax.ShapeDtypeStruct((n, hw3, c3), jnp.float32),
        grid=(n,),
        in_specs=[
            pl.BlockSpec((None, hw1, k1c), lambda b: (b, 0, 0)),      # layer-1 patches
            spec2(w1), spec2(bgb1), spec2(gm1),
            spec3(g2), spec3(w2), spec2(bgb2), spec2(gm2),
            spec3(g3), spec3(w3), spec2(bgb3), spec2(gm3),
        ],
        out_specs=pl.BlockSpec((None, hw3, c3), lambda b: (b, 0, 0)),
        compiler_params=pltpu.CompilerParams(
            dimension_semantics=("parallel",)),
    )(p1, w1, bgb1, gm1, g2, w2, bgb2, gm2, g3, w3, bgb3, gm3)

    out = out.reshape(n, h3s, w3s, c3)
    return jnp.transpose(out, (0, 3, 1, 2))            # back to NCHW


# ---------------------------------------------------------------------------
# Parameters + pure-JAX reference (correctness sanity check)
# ---------------------------------------------------------------------------
def init_params(key, nc=3, nf=32):
    """Deterministic parameter init (shapes match encoder_E.__init__)."""
    def conv_block(k, cin, cout):
        k1, k2 = jax.random.split(k)
        fan_in = cin * 9
        w = jax.random.normal(k1, (cout, cin, 3, 3), jnp.float32) * (1.0 / np.sqrt(fan_in))
        b = 0.01 * jax.random.normal(k2, (cout,), jnp.float32)
        return dict(w=w, b=b, gamma=jnp.ones((cout,), jnp.float32),
                    beta=jnp.zeros((cout,), jnp.float32))

    k1, k2, k3 = jax.random.split(key, 3)
    return dict(c1=conv_block(k1, nc, nf),
                c2=conv_block(k2, nf, nf),
                c3=conv_block(k3, nf, 2 * nf))


def _ref_block(x_nhwc, w, b, gamma, beta, stride, num_groups=NUM_GROUPS):
    y = lax.conv_general_dilated(
        x_nhwc, jnp.transpose(w, (2, 3, 1, 0)),
        window_strides=(stride, stride), padding=((1, 1), (1, 1)),
        dimension_numbers=("NHWC", "HWIO", "NHWC"),
        precision=lax.Precision.HIGHEST) + b
    n, hh, ww, c = y.shape
    cpg = c // num_groups
    yg = y.reshape(n, hh * ww, num_groups, cpg)
    mean = jnp.mean(yg, axis=(1, 3), keepdims=True)
    var = jnp.mean((yg - mean) ** 2, axis=(1, 3), keepdims=True)
    yn = ((yg - mean) / jnp.sqrt(var + EPS)).reshape(n, hh, ww, c)
    z = yn * gamma + beta
    return jnp.where(z > 0, z, NEG_SLOPE * z)


def _reference(x_nchw, params):
    x = jnp.transpose(x_nchw, (0, 2, 3, 1))
    h1 = _ref_block(x, params["c1"]["w"], params["c1"]["b"],
                    params["c1"]["gamma"], params["c1"]["beta"], 2)
    h2 = _ref_block(h1, params["c2"]["w"], params["c2"]["b"],
                    params["c2"]["gamma"], params["c2"]["beta"], 1)
    h3 = _ref_block(h2, params["c3"]["w"], params["c3"]["b"],
                    params["c3"]["gamma"], params["c3"]["beta"], 2)
    return jnp.transpose(h3, (0, 3, 1, 2))


if __name__ == "__main__":
    key = jax.random.PRNGKey(0)
    kx, kp = jax.random.split(key)

    # small deterministic input: batch=2, nc=3, 16x16 spatial (NCHW like PyTorch)
    x = jax.random.normal(kx, (2, 3, 16, 16), jnp.float32)
    params = init_params(kp, nc=3, nf=32)

    out = jax.block_until_ready(encoder_E_forward(x, params))
    assert out.shape == (2, 64, 4, 4), out.shape      # 16 -> 8 -> 8 -> 4, channels 2*nf

    ref = _reference(x, params)
    # tolerance covers bf16 MXU operands (f32 accumulation, f32 GroupNorm path)
    np.testing.assert_allclose(np.asarray(out), np.asarray(ref), rtol=5e-2, atol=5e-2)

    print("KERNEL_OK")
</pallas_src>

<mosaic_0001>
module attributes {stable_mosaic.version = 11 : i64} {
  func.func @_encoder_kernel(%arg0: i32, %arg1: memref<1x64x27xbf16, #tpu.memory_space<vmem>>, %arg2: memref<27x32xbf16, #tpu.memory_space<vmem>>, %arg3: memref<3x32xf32, #tpu.memory_space<vmem>>, %arg4: memref<32x32xf32, #tpu.memory_space<vmem>>, %arg5: memref<9x64x64xbf16, #tpu.memory_space<vmem>>, %arg6: memref<9x32x32xbf16, #tpu.memory_space<vmem>>, %arg7: memref<3x32xf32, #tpu.memory_space<vmem>>, %arg8: memref<32x32xf32, #tpu.memory_space<vmem>>, %arg9: memref<9x16x64xbf16, #tpu.memory_space<vmem>>, %arg10: memref<9x32x64xbf16, #tpu.memory_space<vmem>>, %arg11: memref<3x64xf32, #tpu.memory_space<vmem>>, %arg12: memref<64x64xf32, #tpu.memory_space<vmem>>, %arg13: memref<1x16x64xf32, #tpu.memory_space<vmem>>) attributes {dimension_semantics = [#tpu.dimension_semantics<parallel>], iteration_bounds = array<i64: 2>, scalar_prefetch = 0 : i64, scratch_operands = 0 : i64, tpu.core_type = #tpu.core_type<tc>, window_params = [{transform_indices = @transform_0, window_bounds = array<i64: 1, 64, 27>}, {pipeline_mode = #tpu.pipeline_mode<synchronous>, transform_indices = @transform_1, window_bounds = array<i64: 27, 32>}, {pipeline_mode = #tpu.pipeline_mode<synchronous>, transform_indices = @transform_2, window_bounds = array<i64: 3, 32>}, {pipeline_mode = #tpu.pipeline_mode<synchronous>, transform_indices = @transform_3, window_bounds = array<i64: 32, 32>}, {pipeline_mode = #tpu.pipeline_mode<synchronous>, transform_indices = @transform_4, window_bounds = array<i64: 9, 64, 64>}, {pipeline_mode = #tpu.pipeline_mode<synchronous>, transform_indices = @transform_5, window_bounds = array<i64: 9, 32, 32>}, {pipeline_mode = #tpu.pipeline_mode<synchronous>, transform_indices = @transform_6, window_bounds = array<i64: 3, 32>}, {pipeline_mode = #tpu.pipeline_mode<synchronous>, transform_indices = @transform_7, window_bounds = array<i64: 32, 32>}, {pipeline_mode = #tpu.pipeline_mode<synchronous>, transform_indices = @transform_8, window_bounds = array<i64: 9, 16, 64>}, {pipeline_mode = #tpu.pipeline_mode<synchronous>, transform_indices = @transform_9, window_bounds = array<i64: 9, 32, 64>}, {pipeline_mode = #tpu.pipeline_mode<synchronous>, transform_indices = @transform_10, window_bounds = array<i64: 3, 64>}, {pipeline_mode = #tpu.pipeline_mode<synchronous>, transform_indices = @transform_11, window_bounds = array<i64: 64, 64>}, {transform_indices = @transform_12, window_bounds = array<i64: 1, 16, 64>}]} {
    %c0 = arith.constant 0 : index
    %c0_0 = arith.constant 0 : index
    %c0_1 = arith.constant 0 : index
    %0 = vector.load %arg1[%c0, %c0_0, %c0_1] : memref<1x64x27xbf16, #tpu.memory_space<vmem>>, vector<1x64x27xbf16>
    %1 = vector.shape_cast %0 : vector<1x64x27xbf16> to vector<64x27xbf16>
    %c0_2 = arith.constant 0 : index
    %c0_3 = arith.constant 0 : index
    %2 = vector.load %arg2[%c0_2, %c0_3] : memref<27x32xbf16, #tpu.memory_space<vmem>>, vector<27x32xbf16>
    %cst = arith.constant dense<0.000000e+00> : vector<64x32xf32>
    %3 = tpu.matmul %1, %2, %cst {dimension_numbers = #tpu.dot_dimension_numbers<[1], [0], [0], [1], [0, 0, 1, 1], [], []>} : vector<64x27xbf16>, vector<27x32xbf16>, vector<64x32xf32> -> vector<64x32xf32>
    %c0_4 = arith.constant 0 : index
    %c0_5 = arith.constant 0 : index
    %4 = vector.load %arg3[%c0_4, %c0_5] : memref<3x32xf32, #tpu.memory_space<vmem>>, vector<1x32xf32>
    %5 = vector.broadcast %4 : vector<1x32xf32> to vector<64x32xf32>
    %6 = arith.addf %3, %5 : vector<64x32xf32>
    %c0_6 = arith.constant 0 : index
    %c0_7 = arith.constant 0 : index
    %7 = vector.load %arg4[%c0_6, %c0_7] : memref<32x32xf32, #tpu.memory_space<vmem>>, vector<32x32xf32>
    %c1 = arith.constant 1 : index
    %c0_8 = arith.constant 0 : index
    %8 = vector.load %arg3[%c1, %c0_8] : memref<3x32xf32, #tpu.memory_space<vmem>>, vector<1x32xf32>
    %c2 = arith.constant 2 : index
    %c0_9 = arith.constant 0 : index
    %9 = vector.load %arg3[%c2, %c0_9] : memref<3x32xf32, #tpu.memory_space<vmem>>, vector<1x32xf32>
    %cst_10 = arith.constant dense<0.000000e+00> : vector<32xf32>
    %10 = vector.multi_reduction <add>, %6, %cst_10 [0] : vector<64x32xf32> to vector<32xf32>
    %11 = vector.shape_cast %10 : vector<32xf32> to vector<1x32xf32>
    %12 = arith.mulf %6, %6 : vector<64x32xf32>
    %cst_11 = arith.constant dense<0.000000e+00> : vector<32xf32>
    %13 = vector.multi_reduction <add>, %12, %cst_11 [0] : vector<64x32xf32> to vector<32xf32>
    %14 = vector.shape_cast %13 : vector<32xf32> to vector<1x32xf32>
    %15 = tpu.concatenate %11, %14 in 0 : vector<1x32xf32>, vector<1x32xf32> -> vector<2x32xf32>
    %cst_12 = arith.constant dense<0.000000e+00> : vector<2x32xf32>
    %16 = tpu.matmul %15, %7, %cst_12 {dimension_numbers = #tpu.dot_dimension_numbers<[1], [0], [0], [1], [0, 0, 1, 1], [], []>} : vector<2x32xf32>, vector<32x32xf32>, vector<2x32xf32> -> vector<2x32xf32>
    %17 = vector.extract_strided_slice %16 {offsets = [0, 0], sizes = [1, 32], strides = [1, 1]} : vector<2x32xf32> to vector<1x32xf32>
    %18 = vector.extract_strided_slice %16 {offsets = [1, 0], sizes = [1, 32], strides = [1, 1]} : vector<2x32xf32> to vector<1x32xf32>
    %19 = arith.mulf %17, %17 : vector<1x32xf32>
    %20 = arith.subf %18, %19 : vector<1x32xf32>
    %cst_13 = arith.constant 0.000000e+00 : f32
    %21 = vector.broadcast %cst_13 : f32 to vector<1x32xf32>
    %22 = arith.maximumf %20, %21 : vector<1x32xf32>
    %cst_14 = arith.constant 9.99999974E-6 : f32
    %23 = vector.broadcast %cst_14 : f32 to vector<1x32xf32>
    %24 = arith.addf %22, %23 : vector<1x32xf32>
    %25 = math.rsqrt %24 : vector<1x32xf32>
    %26 = vector.broadcast %17 : vector<1x32xf32> to vector<64x32xf32>
    %27 = arith.subf %6, %26 : vector<64x32xf32>
    %28 = vector.broadcast %25 : vector<1x32xf32> to vector<64x32xf32>
    %29 = arith.mulf %27, %28 : vector<64x32xf32>
    %30 = vector.broadcast %8 : vector<1x32xf32> to vector<64x32xf32>
    %31 = arith.mulf %29, %30 : vector<64x32xf32>
    %32 = vector.broadcast %9 : vector<1x32xf32> to vector<64x32xf32>
    %33 = arith.addf %31, %32 : vector<64x32xf32>
    %cst_15 = arith.constant 0.000000e+00 : f32
    %34 = vector.broadcast %cst_15 : f32 to vector<64x32xf32>
    %35 = arith.cmpf ogt, %33, %34 : vector<64x32xf32>
    %cst_16 = arith.constant 2.000000e-01 : f32
    %36 = vector.broadcast %cst_16 : f32 to vector<64x32xf32>
    %37 = arith.mulf %36, %33 : vector<64x32xf32>
    %38 = arith.select %35, %33, %37 : vector<64x32xi1>, vector<64x32xf32>
    %39 = arith.truncf %38 : vector<64x32xf32> to vector<64x32xbf16>
    %cst_17 = arith.constant 0.000000e+00 : f32
    %40 = vector.broadcast %cst_17 : f32 to vector<64x32xf32>
    %c0_18 = arith.constant 0 : index
    %c0_19 = arith.constant 0 : index
    %c0_20 = arith.constant 0 : index
    %41 = vector.load %arg5[%c0_18, %c0_19, %c0_20] : memref<9x64x64xbf16, #tpu.memory_space<vmem>>, vector<1x64x64xbf16>
    %42 = vector.shape_cast %41 : vector<1x64x64xbf16> to vector<64x64xbf16>
    %cst_21 = arith.constant dense<0.000000e+00> : vector<64x32xf32>
    %43 = tpu.matmul %42, %39, %cst_21 {dimension_numbers = #tpu.dot_dimension_numbers<[1], [0], [0], [1], [0, 0, 1, 1], [], []>} : vector<64x64xbf16>, vector<64x32xbf16>, vector<64x32xf32> -> vector<64x32xf32>
    %44 = arith.truncf %43 : vector<64x32xf32> to vector<64x32xbf16>
    %c0_22 = arith.constant 0 : index
    %c0_23 = arith.constant 0 : index
    %c0_24 = arith.constant 0 : index
    %45 = vector.load %arg6[%c0_22, %c0_23, %c0_24] : memref<9x32x32xbf16, #tpu.memory_space<vmem>>, vector<1x32x32xbf16>
    %46 = vector.shape_cast %45 : vector<1x32x32xbf16> to vector<32x32xbf16>
    %cst_25 = arith.constant dense<0.000000e+00> : vector<64x32xf32>
    %47 = tpu.matmul %44, %46, %cst_25 {dimension_numbers = #tpu.dot_dimension_numbers<[1], [0], [0], [1], [0, 0, 1, 1], [], []>} : vector<64x32xbf16>, vector<32x32xbf16>, vector<64x32xf32> -> vector<64x32xf32>
    %48 = arith.addf %40, %47 : vector<64x32xf32>
    %c1_26 = arith.constant 1 : index
    %c0_27 = arith.constant 0 : index
    %c0_28 = arith.constant 0 : index
    %49 = vector.load %arg5[%c1_26, %c0_27, %c0_28] : memref<9x64x64xbf16, #tpu.memory_space<vmem>>, vector<1x64x64xbf16>
    %50 = vector.shape_cast %49 : vector<1x64x64xbf16> to vector<64x64xbf16>
    %cst_29 = arith.constant dense<0.000000e+00> : vector<64x32xf32>
    %51 = tpu.matmul %50, %39, %cst_29 {dimension_numbers = #tpu.dot_dimension_numbers<[1], [0], [0], [1], [0, 0, 1, 1], [], []>} : vector<64x64xbf16>, vector<64x32xbf16>, vector<64x32xf32> -> vector<64x32xf32>
    %52 = arith.truncf %51 : vector<64x32xf32> to vector<64x32xbf16>
    %c1_30 = arith.constant 1 : index
    %c0_31 = arith.constant 0 : index
    %c0_32 = arith.constant 0 : index
    %53 = vector.load %arg6[%c1_30, %c0_31, %c0_32] : memref<9x32x32xbf16, #tpu.memory_space<vmem>>, vector<1x32x32xbf16>
    %54 = vector.shape_cast %53 : vector<1x32x32xbf16> to vector<32x32xbf16>
    %cst_33 = arith.constant dense<0.000000e+00> : vector<64x32xf32>
    %55 = tpu.matmul %52, %54, %cst_33 {dimension_numbers = #tpu.dot_dimension_numbers<[1], [0], [0], [1], [0, 0, 1, 1], [], []>} : vector<64x32xbf16>, vector<32x32xbf16>, vector<64x32xf32> -> vector<64x32xf32>
    %56 = arith.addf %48, %55 : vector<64x32xf32>
    %c2_34 = arith.constant 2 : index
    %c0_35 = arith.constant 0 : index
    %c0_36 = arith.constant 0 : index
    %57 = vector.load %arg5[%c2_34, %c0_35, %c0_36] : memref<9x64x64xbf16, #tpu.memory_space<vmem>>, vector<1x64x64xbf16>
    %58 = vector.shape_cast %57 : vector<1x64x64xbf16> to vector<64x64xbf16>
    %cst_37 = arith.constant dense<0.000000e+00> : vector<64x32xf32>
    %59 = tpu.matmul %58, %39, %cst_37 {dimension_numbers = #tpu.dot_dimension_numbers<[1], [0], [0], [1], [0, 0, 1, 1], [], []>} : vector<64x64xbf16>, vector<64x32xbf16>, vector<64x32xf32> -> vector<64x32xf32>
    %60 = arith.truncf %59 : vector<64x32xf32> to vector<64x32xbf16>
    %c2_38 = arith.constant 2 : index
    %c0_39 = arith.constant 0 : index
    %c0_40 = arith.constant 0 : index
    %61 = vector.load %arg6[%c2_38, %c0_39, %c0_40] : memref<9x32x32xbf16, #tpu.memory_space<vmem>>, vector<1x32x32xbf16>
    %62 = vector.shape_cast %61 : vector<1x32x32xbf16> to vector<32x32xbf16>
    %cst_41 = arith.constant dense<0.000000e+00> : vector<64x32xf32>
    %63 = tpu.matmul %60, %62, %cst_41 {dimension_numbers = #tpu.dot_dimension_numbers<[1], [0], [0], [1], [0, 0, 1, 1], [], []>} : vector<64x32xbf16>, vector<32x32xbf16>, vector<64x32xf32> -> vector<64x32xf32>
    %64 = arith.addf %56, %63 : vector<64x32xf32>
    %c3 = arith.constant 3 : index
    %c0_42 = arith.constant 0 : index
    %c0_43 = arith.constant 0 : index
    %65 = vector.load %arg5[%c3, %c0_42, %c0_43] : memref<9x64x64xbf16, #tpu.memory_space<vmem>>, vector<1x64x64xbf16>
    %66 = vector.shape_cast %65 : vector<1x64x64xbf16> to vector<64x64xbf16>
    %cst_44 = arith.constant dense<0.000000e+00> : vector<64x32xf32>
    %67 = tpu.matmul %66, %39, %cst_44 {dimension_numbers = #tpu.dot_dimension_numbers<[1], [0], [0], [1], [0, 0, 1, 1], [], []>} : vector<64x64xbf16>, vector<64x32xbf16>, vector<64x32xf32> -> vector<64x32xf32>
    %68 = arith.truncf %67 : vector<64x32xf32> to vector<64x32xbf16>
    %c3_45 = arith.constant 3 : index
    %c0_46 = arith.constant 0 : index
    %c0_47 = arith.constant 0 : index
    %69 = vector.load %arg6[%c3_45, %c0_46, %c0_47] : memref<9x32x32xbf16, #tpu.memory_space<vmem>>, vector<1x32x32xbf16>
    %70 = vector.shape_cast %69 : vector<1x32x32xbf16> to vector<32x32xbf16>
    %cst_48 = arith.constant dense<0.000000e+00> : vector<64x32xf32>
    %71 = tpu.matmul %68, %70, %cst_48 {dimension_numbers = #tpu.dot_dimension_numbers<[1], [0], [0], [1], [0, 0, 1, 1], [], []>} : vector<64x32xbf16>, vector<32x32xbf16>, vector<64x32xf32> -> vector<64x32xf32>
    %72 = arith.addf %64, %71 : vector<64x32xf32>
    %c4 = arith.constant 4 : index
    %c0_49 = arith.constant 0 : index
    %c0_50 = arith.constant 0 : index
    %73 = vector.load %arg5[%c4, %c0_49, %c0_50] : memref<9x64x64xbf16, #tpu.memory_space<vmem>>, vector<1x64x64xbf16>
    %74 = vector.shape_cast %73 : vector<1x64x64xbf16> to vector<64x64xbf16>
    %cst_51 = arith.constant dense<0.000000e+00> : vector<64x32xf32>
    %75 = tpu.matmul %74, %39, %cst_51 {dimension_numbers = #tpu.dot_dimension_numbers<[1], [0], [0], [1], [0, 0, 1, 1], [], []>} : vector<64x64xbf16>, vector<64x32xbf16>, vector<64x32xf32> -> vector<64x32xf32>
    %76 = arith.truncf %75 : vector<64x32xf32> to vector<64x32xbf16>
    %c4_52 = arith.constant 4 : index
    %c0_53 = arith.constant 0 : index
    %c0_54 = arith.constant 0 : index
    %77 = vector.load %arg6[%c4_52, %c0_53, %c0_54] : memref<9x32x32xbf16, #tpu.memory_space<vmem>>, vector<1x32x32xbf16>
    %78 = vector.shape_cast %77 : vector<1x32x32xbf16> to vector<32x32xbf16>
    %cst_55 = arith.constant dense<0.000000e+00> : vector<64x32xf32>
    %79 = tpu.matmul %76, %78, %cst_55 {dimension_numbers = #tpu.dot_dimension_numbers<[1], [0], [0], [1], [0, 0, 1, 1], [], []>} : vector<64x32xbf16>, vector<32x32xbf16>, vector<64x32xf32> -> vector<64x32xf32>
    %80 = arith.addf %72, %79 : vector<64x32xf32>
    %c5 = arith.constant 5 : index
    %c0_56 = arith.constant 0 : index
    %c0_57 = arith.constant 0 : index
    %81 = vector.load %arg5[%c5, %c0_56, %c0_57] : memref<9x64x64xbf16, #tpu.memory_space<vmem>>, vector<1x64x64xbf16>
    %82 = vector.shape_cast %81 : vector<1x64x64xbf16> to vector<64x64xbf16>
    %cst_58 = arith.constant dense<0.000000e+00> : vector<64x32xf32>
    %83 = tpu.matmul %82, %39, %cst_58 {dimension_numbers = #tpu.dot_dimension_numbers<[1], [0], [0], [1], [0, 0, 1, 1], [], []>} : vector<64x64xbf16>, vector<64x32xbf16>, vector<64x32xf32> -> vector<64x32xf32>
    %84 = arith.truncf %83 : vector<64x32xf32> to vector<64x32xbf16>
    %c5_59 = arith.constant 5 : index
    %c0_60 = arith.constant 0 : index
    %c0_61 = arith.constant 0 : index
    %85 = vector.load %arg6[%c5_59, %c0_60, %c0_61] : memref<9x32x32xbf16, #tpu.memory_space<vmem>>, vector<1x32x32xbf16>
    %86 = vector.shape_cast %85 : vector<1x32x32xbf16> to vector<32x32xbf16>
    %cst_62 = arith.constant dense<0.000000e+00> : vector<64x32xf32>
    %87 = tpu.matmul %84, %86, %cst_62 {dimension_numbers = #tpu.dot_dimension_numbers<[1], [0], [0], [1], [0, 0, 1, 1], [], []>} : vector<64x32xbf16>, vector<32x32xbf16>, vector<64x32xf32> -> vector<64x32xf32>
    %88 = arith.addf %80, %87 : vector<64x32xf32>
    %c6 = arith.constant 6 : index
    %c0_63 = arith.constant 0 : index
    %c0_64 = arith.constant 0 : index
    %89 = vector.load %arg5[%c6, %c0_63, %c0_64] : memref<9x64x64xbf16, #tpu.memory_space<vmem>>, vector<1x64x64xbf16>
    %90 = vector.shape_cast %89 : vector<1x64x64xbf16> to vector<64x64xbf16>
    %cst_65 = arith.constant dense<0.000000e+00> : vector<64x32xf32>
    %91 = tpu.matmul %90, %39, %cst_65 {dimension_numbers = #tpu.dot_dimension_numbers<[1], [0], [0], [1], [0, 0, 1, 1], [], []>} : vector<64x64xbf16>, vector<64x32xbf16>, vector<64x32xf32> -> vector<64x32xf32>
    %92 = arith.truncf %91 : vector<64x32xf32> to vector<64x32xbf16>
    %c6_66 = arith.constant 6 : index
    %c0_67 = arith.constant 0 : index
    %c0_68 = arith.constant 0 : index
    %93 = vector.load %arg6[%c6_66, %c0_67, %c0_68] : memref<9x32x32xbf16, #tpu.memory_space<vmem>>, vector<1x32x32xbf16>
    %94 = vector.shape_cast %93 : vector<1x32x32xbf16> to vector<32x32xbf16>
    %cst_69 = arith.constant dense<0.000000e+00> : vector<64x32xf32>
    %95 = tpu.matmul %92, %94, %cst_69 {dimension_numbers = #tpu.dot_dimension_numbers<[1], [0], [0], [1], [0, 0, 1, 1], [], []>} : vector<64x32xbf16>, vector<32x32xbf16>, vector<64x32xf32> -> vector<64x32xf32>
    %96 = arith.addf %88, %95 : vector<64x32xf32>
    %c7 = arith.constant 7 : index
    %c0_70 = arith.constant 0 : index
    %c0_71 = arith.constant 0 : index
    %97 = vector.load %arg5[%c7, %c0_70, %c0_71] : memref<9x64x64xbf16, #tpu.memory_space<vmem>>, vector<1x64x64xbf16>
    %98 = vector.shape_cast %97 : vector<1x64x64xbf16> to vector<64x64xbf16>
    %cst_72 = arith.constant dense<0.000000e+00> : vector<64x32xf32>
    %99 = tpu.matmul %98, %39, %cst_72 {dimension_numbers = #tpu.dot_dimension_numbers<[1], [0], [0], [1], [0, 0, 1, 1], [], []>} : vector<64x64xbf16>, vector<64x32xbf16>, vector<64x32xf32> -> vector<64x32xf32>
    %100 = arith.truncf %99 : vector<64x32xf32> to vector<64x32xbf16>
    %c7_73 = arith.constant 7 : index
    %c0_74 = arith.constant 0 : index
    %c0_75 = arith.constant 0 : index
    %101 = vector.load %arg6[%c7_73, %c0_74, %c0_75] : memref<9x32x32xbf16, #tpu.memory_space<vmem>>, vector<1x32x32xbf16>
    %102 = vector.shape_cast %101 : vector<1x32x32xbf16> to vector<32x32xbf16>
    %cst_76 = arith.constant dense<0.000000e+00> : vector<64x32xf32>
    %103 = tpu.matmul %100, %102, %cst_76 {dimension_numbers = #tpu.dot_dimension_numbers<[1], [0], [0], [1], [0, 0, 1, 1], [], []>} : vector<64x32xbf16>, vector<32x32xbf16>, vector<64x32xf32> -> vector<64x32xf32>
    %104 = arith.addf %96, %103 : vector<64x32xf32>
    %c8 = arith.constant 8 : index
    %c0_77 = arith.constant 0 : index
    %c0_78 = arith.constant 0 : index
    %105 = vector.load %arg5[%c8, %c0_77, %c0_78] : memref<9x64x64xbf16, #tpu.memory_space<vmem>>, vector<1x64x64xbf16>
    %106 = vector.shape_cast %105 : vector<1x64x64xbf16> to vector<64x64xbf16>
    %cst_79 = arith.constant dense<0.000000e+00> : vector<64x32xf32>
    %107 = tpu.matmul %106, %39, %cst_79 {dimension_numbers = #tpu.dot_dimension_numbers<[1], [0], [0], [1], [0, 0, 1, 1], [], []>} : vector<64x64xbf16>, vector<64x32xbf16>, vector<64x32xf32> -> vector<64x32xf32>
    %108 = arith.truncf %107 : vector<64x32xf32> to vector<64x32xbf16>
    %c8_80 = arith.constant 8 : index
    %c0_81 = arith.constant 0 : index
    %c0_82 = arith.constant 0 : index
    %109 = vector.load %arg6[%c8_80, %c0_81, %c0_82] : memref<9x32x32xbf16, #tpu.memory_space<vmem>>, vector<1x32x32xbf16>
    %110 = vector.shape_cast %109 : vector<1x32x32xbf16> to vector<32x32xbf16>
    %cst_83 = arith.constant dense<0.000000e+00> : vector<64x32xf32>
    %111 = tpu.matmul %108, %110, %cst_83 {dimension_numbers = #tpu.dot_dimension_numbers<[1], [0], [0], [1], [0, 0, 1, 1], [], []>} : vector<64x32xbf16>, vector<32x32xbf16>, vector<64x32xf32> -> vector<64x32xf32>
    %112 = arith.addf %104, %111 : vector<64x32xf32>
    %c0_84 = arith.constant 0 : index
    %c0_85 = arith.constant 0 : index
    %113 = vector.load %arg7[%c0_84, %c0_85] : memref<3x32xf32, #tpu.memory_space<vmem>>, vector<1x32xf32>
    %114 = vector.broadcast %113 : vector<1x32xf32> to vector<64x32xf32>
    %115 = arith.addf %112, %114 : vector<64x32xf32>
    %c0_86 = arith.constant 0 : index
    %c0_87 = arith.constant 0 : index
    %116 = vector.load %arg8[%c0_86, %c0_87] : memref<32x32xf32, #tpu.memory_space<vmem>>, vector<32x32xf32>
    %c1_88 = arith.constant 1 : index
    %c0_89 = arith.constant 0 : index
    %117 = vector.load %arg7[%c1_88, %c0_89] : memref<3x32xf32, #tpu.memory_space<vmem>>, vector<1x32xf32>
    %c2_90 = arith.constant 2 : index
    %c0_91 = arith.constant 0 : index
    %118 = vector.load %arg7[%c2_90, %c0_91] : memref<3x32xf32, #tpu.memory_space<vmem>>, vector<1x32xf32>
    %cst_92 = arith.constant dense<0.000000e+00> : vector<32xf32>
    %119 = vector.multi_reduction <add>, %115, %cst_92 [0] : vector<64x32xf32> to vector<32xf32>
    %120 = vector.shape_cast %119 : vector<32xf32> to vector<1x32xf32>
    %121 = arith.mulf %115, %115 : vector<64x32xf32>
    %cst_93 = arith.constant dense<0.000000e+00> : vector<32xf32>
    %122 = vector.multi_reduction <add>, %121, %cst_93 [0] : vector<64x32xf32> to vector<32xf32>
    %123 = vector.shape_cast %122 : vector<32xf32> to vector<1x32xf32>
    %124 = tpu.concatenate %120, %123 in 0 : vector<1x32xf32>, vector<1x32xf32> -> vector<2x32xf32>
    %cst_94 = arith.constant dense<0.000000e+00> : vector<2x32xf32>
    %125 = tpu.matmul %124, %116, %cst_94 {dimension_numbers = #tpu.dot_dimension_numbers<[1], [0], [0], [1], [0, 0, 1, 1], [], []>} : vector<2x32xf32>, vector<32x32xf32>, vector<2x32xf32> -> vector<2x32xf32>
    %126 = vector.extract_strided_slice %125 {offsets = [0, 0], sizes = [1, 32], strides = [1, 1]} : vector<2x32xf32> to vector<1x32xf32>
    %127 = vector.extract_strided_slice %125 {offsets = [1, 0], sizes = [1, 32], strides = [1, 1]} : vector<2x32xf32> to vector<1x32xf32>
    %128 = arith.mulf %126, %126 : vector<1x32xf32>
    %129 = arith.subf %127, %128 : vector<1x32xf32>
    %cst_95 = arith.constant 0.000000e+00 : f32
    %130 = vector.broadcast %cst_95 : f32 to vector<1x32xf32>
    %131 = arith.maximumf %129, %130 : vector<1x32xf32>
    %cst_96 = arith.constant 9.99999974E-6 : f32
    %132 = vector.broadcast %cst_96 : f32 to vector<1x32xf32>
    %133 = arith.addf %131, %132 : vector<1x32xf32>
    %134 = math.rsqrt %133 : vector<1x32xf32>
    %135 = vector.broadcast %126 : vector<1x32xf32> to vector<64x32xf32>
    %136 = arith.subf %115, %135 : vector<64x32xf32>
    %137 = vector.broadcast %134 : vector<1x32xf32> to vector<64x32xf32>
    %138 = arith.mulf %136, %137 : vector<64x32xf32>
    %139 = vector.broadcast %117 : vector<1x32xf32> to vector<64x32xf32>
    %140 = arith.mulf %138, %139 : vector<64x32xf32>
    %141 = vector.broadcast %118 : vector<1x32xf32> to vector<64x32xf32>
    %142 = arith.addf %140, %141 : vector<64x32xf32>
    %cst_97 = arith.constant 0.000000e+00 : f32
    %143 = vector.broadcast %cst_97 : f32 to vector<64x32xf32>
    %144 = arith.cmpf ogt, %142, %143 : vector<64x32xf32>
    %cst_98 = arith.constant 2.000000e-01 : f32
    %145 = vector.broadcast %cst_98 : f32 to vector<64x32xf32>
    %146 = arith.mulf %145, %142 : vector<64x32xf32>
    %147 = arith.select %144, %142, %146 : vector<64x32xi1>, vector<64x32xf32>
    %148 = arith.truncf %147 : vector<64x32xf32> to vector<64x32xbf16>
    %cst_99 = arith.constant 0.000000e+00 : f32
    %149 = vector.broadcast %cst_99 : f32 to vector<16x64xf32>
    %c0_100 = arith.constant 0 : index
    %c0_101 = arith.constant 0 : index
    %c0_102 = arith.constant 0 : index
    %150 = vector.load %arg9[%c0_100, %c0_101, %c0_102] : memref<9x16x64xbf16, #tpu.memory_space<vmem>>, vector<1x16x64xbf16>
    %151 = vector.shape_cast %150 : vector<1x16x64xbf16> to vector<16x64xbf16>
    %cst_103 = arith.constant dense<0.000000e+00> : vector<16x32xf32>
    %152 = tpu.matmul %151, %148, %cst_103 {dimension_numbers = #tpu.dot_dimension_numbers<[1], [0], [0], [1], [0, 0, 1, 1], [], []>} : vector<16x64xbf16>, vector<64x32xbf16>, vector<16x32xf32> -> vector<16x32xf32>
    %153 = arith.truncf %152 : vector<16x32xf32> to vector<16x32xbf16>
    %c0_104 = arith.constant 0 : index
    %c0_105 = arith.constant 0 : index
    %c0_106 = arith.constant 0 : index
    %154 = vector.load %arg10[%c0_104, %c0_105, %c0_106] : memref<9x32x64xbf16, #tpu.memory_space<vmem>>, vector<1x32x64xbf16>
    %155 = vector.shape_cast %154 : vector<1x32x64xbf16> to vector<32x64xbf16>
    %cst_107 = arith.constant dense<0.000000e+00> : vector<16x64xf32>
    %156 = tpu.matmul %153, %155, %cst_107 {dimension_numbers = #tpu.dot_dimension_numbers<[1], [0], [0], [1], [0, 0, 1, 1], [], []>} : vector<16x32xbf16>, vector<32x64xbf16>, vector<16x64xf32> -> vector<16x64xf32>
    %157 = arith.addf %149, %156 : vector<16x64xf32>
    %c1_108 = arith.constant 1 : index
    %c0_109 = arith.constant 0 : index
    %c0_110 = arith.constant 0 : index
    %158 = vector.load %arg9[%c1_108, %c0_109, %c0_110] : memref<9x16x64xbf16, #tpu.memory_space<vmem>>, vector<1x16x64xbf16>
    %159 = vector.shape_cast %158 : vector<1x16x64xbf16> to vector<16x64xbf16>
    %cst_111 = arith.constant dense<0.000000e+00> : vector<16x32xf32>
    %160 = tpu.matmul %159, %148, %cst_111 {dimension_numbers = #tpu.dot_dimension_numbers<[1], [0], [0], [1], [0, 0, 1, 1], [], []>} : vector<16x64xbf16>, vector<64x32xbf16>, vector<16x32xf32> -> vector<16x32xf32>
    %161 = arith.truncf %160 : vector<16x32xf32> to vector<16x32xbf16>
    %c1_112 = arith.constant 1 : index
    %c0_113 = arith.constant 0 : index
    %c0_114 = arith.constant 0 : index
    %162 = vector.load %arg10[%c1_112, %c0_113, %c0_114] : memref<9x32x64xbf16, #tpu.memory_space<vmem>>, vector<1x32x64xbf16>
    %163 = vector.shape_cast %162 : vector<1x32x64xbf16> to vector<32x64xbf16>
    %cst_115 = arith.constant dense<0.000000e+00> : vector<16x64xf32>
    %164 = tpu.matmul %161, %163, %cst_115 {dimension_numbers = #tpu.dot_dimension_numbers<[1], [0], [0], [1], [0, 0, 1, 1], [], []>} : vector<16x32xbf16>, vector<32x64xbf16>, vector<16x64xf32> -> vector<16x64xf32>
    %165 = arith.addf %157, %164 : vector<16x64xf32>
    %c2_116 = arith.constant 2 : index
    %c0_117 = arith.constant 0 : index
    %c0_118 = arith.constant 0 : index
    %166 = vector.load %arg9[%c2_116, %c0_117, %c0_118] : memref<9x16x64xbf16, #tpu.memory_space<vmem>>, vector<1x16x64xbf16>
    %167 = vector.shape_cast %166 : vector<1x16x64xbf16> to vector<16x64xbf16>
    %cst_119 = arith.constant dense<0.000000e+00> : vector<16x32xf32>
    %168 = tpu.matmul %167, %148, %cst_119 {dimension_numbers = #tpu.dot_dimension_numbers<[1], [0], [0], [1], [0, 0, 1, 1], [], []>} : vector<16x64xbf16>, vector<64x32xbf16>, vector<16x32xf32> -> vector<16x32xf32>
    %169 = arith.truncf %168 : vector<16x32xf32> to vector<16x32xbf16>
    %c2_120 = arith.constant 2 : index
    %c0_121 = arith.constant 0 : index
    %c0_122 = arith.constant 0 : index
    %170 = vector.load %arg10[%c2_120, %c0_121, %c0_122] : memref<9x32x64xbf16, #tpu.memory_space<vmem>>, vector<1x32x64xbf16>
    %171 = vector.shape_cast %170 : vector<1x32x64xbf16> to vector<32x64xbf16>
    %cst_123 = arith.constant dense<0.000000e+00> : vector<16x64xf32>
    %172 = tpu.matmul %169, %171, %cst_123 {dimension_numbers = #tpu.dot_dimension_numbers<[1], [0], [0], [1], [0, 0, 1, 1], [], []>} : vector<16x32xbf16>, vector<32x64xbf16>, vector<16x64xf32> -> vector<16x64xf32>
    %173 = arith.addf %165, %172 : vector<16x64xf32>
    %c3_124 = arith.constant 3 : index
    %c0_125 = arith.constant 0 : index
    %c0_126 = arith.constant 0 : index
    %174 = vector.load %arg9[%c3_124, %c0_125, %c0_126] : memref<9x16x64xbf16, #tpu.memory_space<vmem>>, vector<1x16x64xbf16>
    %175 = vector.shape_cast %174 : vector<1x16x64xbf16> to vector<16x64xbf16>
    %cst_127 = arith.constant dense<0.000000e+00> : vector<16x32xf32>
    %176 = tpu.matmul %175, %148, %cst_127 {dimension_numbers = #tpu.dot_dimension_numbers<[1], [0], [0], [1], [0, 0, 1, 1], [], []>} : vector<16x64xbf16>, vector<64x32xbf16>, vector<16x32xf32> -> vector<16x32xf32>
    %177 = arith.truncf %176 : vector<16x32xf32> to vector<16x32xbf16>
    %c3_128 = arith.constant 3 : index
    %c0_129 = arith.constant 0 : index
    %c0_130 = arith.constant 0 : index
    %178 = vector.load %arg10[%c3_128, %c0_129, %c0_130] : memref<9x32x64xbf16, #tpu.memory_space<vmem>>, vector<1x32x64xbf16>
    %179 = vector.shape_cast %178 : vector<1x32x64xbf16> to vector<32x64xbf16>
    %cst_131 = arith.constant dense<0.000000e+00> : vector<16x64xf32>
    %180 = tpu.matmul %177, %179, %cst_131 {dimension_numbers = #tpu.dot_dimension_numbers<[1], [0], [0], [1], [0, 0, 1, 1], [], []>} : vector<16x32xbf16>, vector<32x64xbf16>, vector<16x64xf32> -> vector<16x64xf32>
    %181 = arith.addf %173, %180 : vector<16x64xf32>
    %c4_132 = arith.constant 4 : index
    %c0_133 = arith.constant 0 : index
    %c0_134 = arith.constant 0 : index
    %182 = vector.load %arg9[%c4_132, %c0_133, %c0_134] : memref<9x16x64xbf16, #tpu.memory_space<vmem>>, vector<1x16x64xbf16>
    %183 = vector.shape_cast %182 : vector<1x16x64xbf16> to vector<16x64xbf16>
    %cst_135 = arith.constant dense<0.000000e+00> : vector<16x32xf32>
    %184 = tpu.matmul %183, %148, %cst_135 {dimension_numbers = #tpu.dot_dimension_numbers<[1], [0], [0], [1], [0, 0, 1, 1], [], []>} : vector<16x64xbf16>, vector<64x32xbf16>, vector<16x32xf32> -> vector<16x32xf32>
    %185 = arith.truncf %184 : vector<16x32xf32> to vector<16x32xbf16>
    %c4_136 = arith.constant 4 : index
    %c0_137 = arith.constant 0 : index
    %c0_138 = arith.constant 0 : index
    %186 = vector.load %arg10[%c4_136, %c0_137, %c0_138] : memref<9x32x64xbf16, #tpu.memory_space<vmem>>, vector<1x32x64xbf16>
    %187 = vector.shape_cast %186 : vector<1x32x64xbf16> to vector<32x64xbf16>
    %cst_139 = arith.constant dense<0.000000e+00> : vector<16x64xf32>
    %188 = tpu.matmul %185, %187, %cst_139 {dimension_numbers = #tpu.dot_dimension_numbers<[1], [0], [0], [1], [0, 0, 1, 1], [], []>} : vector<16x32xbf16>, vector<32x64xbf16>, vector<16x64xf32> -> vector<16x64xf32>
    %189 = arith.addf %181, %188 : vector<16x64xf32>
    %c5_140 = arith.constant 5 : index
    %c0_141 = arith.constant 0 : index
    %c0_142 = arith.constant 0 : index
    %190 = vector.load %arg9[%c5_140, %c0_141, %c0_142] : memref<9x16x64xbf16, #tpu.memory_space<vmem>>, vector<1x16x64xbf16>
    %191 = vector.shape_cast %190 : vector<1x16x64xbf16> to vector<16x64xbf16>
    %cst_143 = arith.constant dense<0.000000e+00> : vector<16x32xf32>
    %192 = tpu.matmul %191, %148, %cst_143 {dimension_numbers = #tpu.dot_dimension_numbers<[1], [0], [0], [1], [0, 0, 1, 1], [], []>} : vector<16x64xbf16>, vector<64x32xbf16>, vector<16x32xf32> -> vector<16x32xf32>
    %193 = arith.truncf %192 : vector<16x32xf32> to vector<16x32xbf16>
    %c5_144 = arith.constant 5 : index
    %c0_145 = arith.constant 0 : index
    %c0_146 = arith.constant 0 : index
    %194 = vector.load %arg10[%c5_144, %c0_145, %c0_146] : memref<9x32x64xbf16, #tpu.memory_space<vmem>>, vector<1x32x64xbf16>
    %195 = vector.shape_cast %194 : vector<1x32x64xbf16> to vector<32x64xbf16>
    %cst_147 = arith.constant dense<0.000000e+00> : vector<16x64xf32>
    %196 = tpu.matmul %193, %195, %cst_147 {dimension_numbers = #tpu.dot_dimension_numbers<[1], [0], [0], [1], [0, 0, 1, 1], [], []>} : vector<16x32xbf16>, vector<32x64xbf16>, vector<16x64xf32> -> vector<16x64xf32>
    %197 = arith.addf %189, %196 : vector<16x64xf32>
    %c6_148 = arith.constant 6 : index
    %c0_149 = arith.constant 0 : index
    %c0_150 = arith.constant 0 : index
    %198 = vector.load %arg9[%c6_148, %c0_149, %c0_150] : memref<9x16x64xbf16, #tpu.memory_space<vmem>>, vector<1x16x64xbf16>
    %199 = vector.shape_cast %198 : vector<1x16x64xbf16> to vector<16x64xbf16>
    %cst_151 = arith.constant dense<0.000000e+00> : vector<16x32xf32>
    %200 = tpu.matmul %199, %148, %cst_151 {dimension_numbers = #tpu.dot_dimension_numbers<[1], [0], [0], [1], [0, 0, 1, 1], [], []>} : vector<16x64xbf16>, vector<64x32xbf16>, vector<16x32xf32> -> vector<16x32xf32>
    %201 = arith.truncf %200 : vector<16x32xf32> to vector<16x32xbf16>
    %c6_152 = arith.constant 6 : index
    %c0_153 = arith.constant 0 : index
    %c0_154 = arith.constant 0 : index
    %202 = vector.load %arg10[%c6_152, %c0_153, %c0_154] : memref<9x32x64xbf16, #tpu.memory_space<vmem>>, vector<1x32x64xbf16>
    %203 = vector.shape_cast %202 : vector<1x32x64xbf16> to vector<32x64xbf16>
    %cst_155 = arith.constant dense<0.000000e+00> : vector<16x64xf32>
    %204 = tpu.matmul %201, %203, %cst_155 {dimension_numbers = #tpu.dot_dimension_numbers<[1], [0], [0], [1], [0, 0, 1, 1], [], []>} : vector<16x32xbf16>, vector<32x64xbf16>, vector<16x64xf32> -> vector<16x64xf32>
    %205 = arith.addf %197, %204 : vector<16x64xf32>
    %c7_156 = arith.constant 7 : index
    %c0_157 = arith.constant 0 : index
    %c0_158 = arith.constant 0 : index
    %206 = vector.load %arg9[%c7_156, %c0_157, %c0_158] : memref<9x16x64xbf16, #tpu.memory_space<vmem>>, vector<1x16x64xbf16>
    %207 = vector.shape_cast %206 : vector<1x16x64xbf16> to vector<16x64xbf16>
    %cst_159 = arith.constant dense<0.000000e+00> : vector<16x32xf32>
    %208 = tpu.matmul %207, %148, %cst_159 {dimension_numbers = #tpu.dot_dimension_numbers<[1], [0], [0], [1], [0, 0, 1, 1], [], []>} : vector<16x64xbf16>, vector<64x32xbf16>, vector<16x32xf32> -> vector<16x32xf32>
    %209 = arith.truncf %208 : vector<16x32xf32> to vector<16x32xbf16>
    %c7_160 = arith.constant 7 : index
    %c0_161 = arith.constant 0 : index
    %c0_162 = arith.constant 0 : index
    %210 = vector.load %arg10[%c7_160, %c0_161, %c0_162] : memref<9x32x64xbf16, #tpu.memory_space<vmem>>, vector<1x32x64xbf16>
    %211 = vector.shape_cast %210 : vector<1x32x64xbf16> to vector<32x64xbf16>
    %cst_163 = arith.constant dense<0.000000e+00> : vector<16x64xf32>
    %212 = tpu.matmul %209, %211, %cst_163 {dimension_numbers = #tpu.dot_dimension_numbers<[1], [0], [0], [1], [0, 0, 1, 1], [], []>} : vector<16x32xbf16>, vector<32x64xbf16>, vector<16x64xf32> -> vector<16x64xf32>
    %213 = arith.addf %205, %212 : vector<16x64xf32>
    %c8_164 = arith.constant 8 : index
    %c0_165 = arith.constant 0 : index
    %c0_166 = arith.constant 0 : index
    %214 = vector.load %arg9[%c8_164, %c0_165, %c0_166] : memref<9x16x64xbf16, #tpu.memory_space<vmem>>, vector<1x16x64xbf16>
    %215 = vector.shape_cast %214 : vector<1x16x64xbf16> to vector<16x64xbf16>
    %cst_167 = arith.constant dense<0.000000e+00> : vector<16x32xf32>
    %216 = tpu.matmul %215, %148, %cst_167 {dimension_numbers = #tpu.dot_dimension_numbers<[1], [0], [0], [1], [0, 0, 1, 1], [], []>} : vector<16x64xbf16>, vector<64x32xbf16>, vector<16x32xf32> -> vector<16x32xf32>
    %217 = arith.truncf %216 : vector<16x32xf32> to vector<16x32xbf16>
    %c8_168 = arith.constant 8 : index
    %c0_169 = arith.constant 0 : index
    %c0_170 = arith.constant 0 : index
    %218 = vector.load %arg10[%c8_168, %c0_169, %c0_170] : memref<9x32x64xbf16, #tpu.memory_space<vmem>>, vector<1x32x64xbf16>
    %219 = vector.shape_cast %218 : vector<1x32x64xbf16> to vector<32x64xbf16>
    %cst_171 = arith.constant dense<0.000000e+00> : vector<16x64xf32>
    %220 = tpu.matmul %217, %219, %cst_171 {dimension_numbers = #tpu.dot_dimension_numbers<[1], [0], [0], [1], [0, 0, 1, 1], [], []>} : vector<16x32xbf16>, vector<32x64xbf16>, vector<16x64xf32> -> vector<16x64xf32>
    %221 = arith.addf %213, %220 : vector<16x64xf32>
    %c0_172 = arith.constant 0 : index
    %c0_173 = arith.constant 0 : index
    %222 = vector.load %arg11[%c0_172, %c0_173] : memref<3x64xf32, #tpu.memory_space<vmem>>, vector<1x64xf32>
    %223 = vector.broadcast %222 : vector<1x64xf32> to vector<16x64xf32>
    %224 = arith.addf %221, %223 : vector<16x64xf32>
    %c0_174 = arith.constant 0 : index
    %c0_175 = arith.constant 0 : index
    %225 = vector.load %arg12[%c0_174, %c0_175] : memref<64x64xf32, #tpu.memory_space<vmem>>, vector<64x64xf32>
    %c1_176 = arith.constant 1 : index
    %c0_177 = arith.constant 0 : index
    %226 = vector.load %arg11[%c1_176, %c0_177] : memref<3x64xf32, #tpu.memory_space<vmem>>, vector<1x64xf32>
    %c2_178 = arith.constant 2 : index
    %c0_179 = arith.constant 0 : index
    %227 = vector.load %arg11[%c2_178, %c0_179] : memref<3x64xf32, #tpu.memory_space<vmem>>, vector<1x64xf32>
    %cst_180 = arith.constant dense<0.000000e+00> : vector<64xf32>
    %228 = vector.multi_reduction <add>, %224, %cst_180 [0] : vector<16x64xf32> to vector<64xf32>
    %229 = vector.shape_cast %228 : vector<64xf32> to vector<1x64xf32>
    %230 = arith.mulf %224, %224 : vector<16x64xf32>
    %cst_181 = arith.constant dense<0.000000e+00> : vector<64xf32>
    %231 = vector.multi_reduction <add>, %230, %cst_181 [0] : vector<16x64xf32> to vector<64xf32>
    %232 = vector.shape_cast %231 : vector<64xf32> to vector<1x64xf32>
    %233 = tpu.concatenate %229, %232 in 0 : vector<1x64xf32>, vector<1x64xf32> -> vector<2x64xf32>
    %cst_182 = arith.constant dense<0.000000e+00> : vector<2x64xf32>
    %234 = tpu.matmul %233, %225, %cst_182 {dimension_numbers = #tpu.dot_dimension_numbers<[1], [0], [0], [1], [0, 0, 1, 1], [], []>} : vector<2x64xf32>, vector<64x64xf32>, vector<2x64xf32> -> vector<2x64xf32>
    %235 = vector.extract_strided_slice %234 {offsets = [0, 0], sizes = [1, 64], strides = [1, 1]} : vector<2x64xf32> to vector<1x64xf32>
    %236 = vector.extract_strided_slice %234 {offsets = [1, 0], sizes = [1, 64], strides = [1, 1]} : vector<2x64xf32> to vector<1x64xf32>
    %237 = arith.mulf %235, %235 : vector<1x64xf32>
    %238 = arith.subf %236, %237 : vector<1x64xf32>
    %cst_183 = arith.constant 0.000000e+00 : f32
    %239 = vector.broadcast %cst_183 : f32 to vector<1x64xf32>
    %240 = arith.maximumf %238, %239 : vector<1x64xf32>
    %cst_184 = arith.constant 9.99999974E-6 : f32
    %241 = vector.broadcast %cst_184 : f32 to vector<1x64xf32>
    %242 = arith.addf %240, %241 : vector<1x64xf32>
    %243 = math.rsqrt %242 : vector<1x64xf32>
    %244 = vector.broadcast %235 : vector<1x64xf32> to vector<16x64xf32>
    %245 = arith.subf %224, %244 : vector<16x64xf32>
    %246 = vector.broadcast %243 : vector<1x64xf32> to vector<16x64xf32>
    %247 = arith.mulf %245, %246 : vector<16x64xf32>
    %248 = vector.broadcast %226 : vector<1x64xf32> to vector<16x64xf32>
    %249 = arith.mulf %247, %248 : vector<16x64xf32>
    %250 = vector.broadcast %227 : vector<1x64xf32> to vector<16x64xf32>
    %251 = arith.addf %249, %250 : vector<16x64xf32>
    %cst_185 = arith.constant 0.000000e+00 : f32
    %252 = vector.broadcast %cst_185 : f32 to vector<16x64xf32>
    %253 = arith.cmpf ogt, %251, %252 : vector<16x64xf32>
    %cst_186 = arith.constant 2.000000e-01 : f32
    %254 = vector.broadcast %cst_186 : f32 to vector<16x64xf32>
    %255 = arith.mulf %254, %251 : vector<16x64xf32>
    %256 = arith.select %253, %251, %255 : vector<16x64xi1>, vector<16x64xf32>
    %c0_187 = arith.constant 0 : index
    %c0_188 = arith.constant 0 : index
    %c0_189 = arith.constant 0 : index
    %257 = vector.load %arg13[%c0_187, %c0_188, %c0_189] : memref<1x16x64xf32, #tpu.memory_space<vmem>>, vector<1x16x64xf32>
    %258 = vector.shape_cast %257 : vector<1x16x64xf32> to vector<16x64xf32>
    %259 = vector.shape_cast %256 : vector<16x64xf32> to vector<1x16x64xf32>
    tpu.vector_store %arg13[%c0_187, %c0_188, %c0_189], %259 {strides = array<i32>} : memref<1x16x64xf32, #tpu.memory_space<vmem>>, vector<1x16x64xf32>,
    return
  }
  func.func @transform_0(%arg0: i32) -> (i32, i32, i32) {
    %c0_i32 = arith.constant 0 : i32
    %c0_i32_0 = arith.constant 0 : i32
    %c0_i32_1 = arith.constant 0 : i32
    return %arg0, %c0_i32, %c0_i32_0 : i32, i32, i32
  }
  func.func @transform_1(%arg0: i32) -> (i32, i32) {
    %c0_i32 = arith.constant 0 : i32
    %c0_i32_0 = arith.constant 0 : i32
    %c0_i32_1 = arith.constant 0 : i32
    return %c0_i32, %c0_i32_0 : i32, i32
  }
  func.func @transform_2(%arg0: i32) -> (i32, i32) {
    %c0_i32 = arith.constant 0 : i32
    %c0_i32_0 = arith.constant 0 : i32
    %c0_i32_1 = arith.constant 0 : i32
    return %c0_i32, %c0_i32_0 : i32, i32
  }
  func.func @transform_3(%arg0: i32) -> (i32, i32) {
    %c0_i32 = arith.constant 0 : i32
    %c0_i32_0 = arith.constant 0 : i32
    %c0_i32_1 = arith.constant 0 : i32
    return %c0_i32, %c0_i32_0 : i32, i32
  }
  func.func @transform_4(%arg0: i32) -> (i32, i32, i32) {
    %c0_i32 = arith.constant 0 : i32
    %c0_i32_0 = arith.constant 0 : i32
    %c0_i32_1 = arith.constant 0 : i32
    %c0_i32_2 = arith.constant 0 : i32
    return %c0_i32, %c0_i32_0, %c0_i32_1 : i32, i32, i32
  }
  func.func @transform_5(%arg0: i32) -> (i32, i32, i32) {
    %c0_i32 = arith.constant 0 : i32
    %c0_i32_0 = arith.constant 0 : i32
    %c0_i32_1 = arith.constant 0 : i32
    %c0_i32_2 = arith.constant 0 : i32
    return %c0_i32, %c0_i32_0, %c0_i32_1 : i32, i32, i32
  }
  func.func @transform_6(%arg0: i32) -> (i32, i32) {
    %c0_i32 = arith.constant 0 : i32
    %c0_i32_0 = arith.constant 0 : i32
    %c0_i32_1 = arith.constant 0 : i32
    return %c0_i32, %c0_i32_0 : i32, i32
  }
  func.func @transform_7(%arg0: i32) -> (i32, i32) {
    %c0_i32 = arith.constant 0 : i32
    %c0_i32_0 = arith.constant 0 : i32
    %c0_i32_1 = arith.constant 0 : i32
    return %c0_i32, %c0_i32_0 : i32, i32
  }
  func.func @transform_8(%arg0: i32) -> (i32, i32, i32) {
    %c0_i32 = arith.constant 0 : i32
    %c0_i32_0 = arith.constant 0 : i32
    %c0_i32_1 = arith.constant 0 : i32
    %c0_i32_2 = arith.constant 0 : i32
    return %c0_i32, %c0_i32_0, %c0_i32_1 : i32, i32, i32
  }
  func.func @transform_9(%arg0: i32) -> (i32, i32, i32) {
    %c0_i32 = arith.constant 0 : i32
    %c0_i32_0 = arith.constant 0 : i32
    %c0_i32_1 = arith.constant 0 : i32
    %c0_i32_2 = arith.constant 0 : i32
    return %c0_i32, %c0_i32_0, %c0_i32_1 : i32, i32, i32
  }
  func.func @transform_10(%arg0: i32) -> (i32, i32) {
    %c0_i32 = arith.constant 0 : i32
    %c0_i32_0 = arith.constant 0 : i32
    %c0_i32_1 = arith.constant 0 : i32
    return %c0_i32, %c0_i32_0 : i32, i32
  }
  func.func @transform_11(%arg0: i32) -> (i32, i32) {
    %c0_i32 = arith.constant 0 : i32
    %c0_i32_0 = arith.constant 0 : i32
    %c0_i32_1 = arith.constant 0 : i32
    return %c0_i32, %c0_i32_0 : i32, i32
  }
  func.func @transform_12(%arg0: i32) -> (i32, i32, i32) {
    %c0_i32 = arith.constant 0 : i32
    %c0_i32_0 = arith.constant 0 : i32
    %c0_i32_1 = arith.constant 0 : i32
    return %arg0, %c0_i32, %c0_i32_0 : i32, i32, i32
  }
}

</mosaic_0001>

<llo_original>
// kernel: encoder_E_forward.1
$region0: #{encoder_E_forward.1}
  #allocation0 [shape = 'u32[]', space=smem, size = 0x4, offset = 0x4, fixed_abs, tag = 'smem constant byte address 0x4 - core index']
  #allocation1 [shape = 'u32[144,128]{1,0:T(1,128)}', space=vmem, size = 0x12000, scoped, tag = 'internal scratch']
  %s0 = inlined_call_operand.vmem [shape: bf16[2,64,27], index: 0, kind: input, shape index: {}]
  %s1 = inlined_call_operand.vmem [shape: bf16[27,32], index: 1, kind: input, shape index: {}]
  %s2 = inlined_call_operand.vmem [shape: f32[3,32], index: 2, kind: input, shape index: {}]
  %s3 = inlined_call_operand.vmem [shape: f32[32,32], index: 3, kind: input, shape index: {}, may-alias: {3,7}]
  %s4 = inlined_call_operand.vmem [shape: bf16[9,64,64], index: 4, kind: input, shape index: {}]
  %s5 = inlined_call_operand.vmem [shape: bf16[9,32,32], index: 5, kind: input, shape index: {}]
  %s6 = inlined_call_operand.vmem [shape: f32[3,32], index: 6, kind: input, shape index: {}]
  %s7 = inlined_call_operand.vmem [shape: f32[32,32], index: 7, kind: input, shape index: {}, may-alias: {3,7}]
  %s8 = inlined_call_operand.vmem [shape: bf16[9,16,64], index: 8, kind: input, shape index: {}]
  %s9 = inlined_call_operand.vmem [shape: bf16[9,32,64], index: 9, kind: input, shape index: {}]
  %s10 = inlined_call_operand.vmem [shape: f32[3,64], index: 10, kind: input, shape index: {}]
  %s11 = inlined_call_operand.vmem [shape: f32[64,64], index: 11, kind: input, shape index: {}]
  %s12 = inlined_call_operand.hbm [shape: f32[2,16,64], index: 12, kind: output, shape index: {}]
  %s13 = sld [smem:[#allocation0]]
  $region81: #{encoder_E_forward.1} parent=0
    _
  %s15 = ssub.s32 1, %s13
  %s16 = scalar_select 0, %s15, %s13
  $region1: #{encoder_E_forward.1} parent=0
    #allocation2 [shape = 'u8[16384]{0}', space=vmem, size = 0x4000, scoped, tag = 'output window, operand 0']
    #allocation3 [shape = 's32[2]{0}', space=sflag, size = 0x8, scoped, tag = 'scoped memory for encoder_E_forward.1']
    %17 = vsyncpa [#allocation3], 0
    %s18 = scalar_lea.sflag [#allocation3], 1
    %19 = vsyncpa %s18, 0
    loop: start=0, step=1, limit=4
    $region2: #{encoder_E_forward.1} parent=1 // loop_pre_header
      _
    $region3: #{encoder_E_forward.1} parent=1 // loop_header
      %s21 = sphi 0, %s25
      %p22 = scmp.ge.s32.totalorder %s21, 4
      %s31 = sphi 0, %s33
      %s34 = sphi 0, %s31
      %s35 = sphi 0, %s34
      %s51 = sphi 0, %s35
      %s55 = sphi 0, %s55
      %s57 = sphi 0, %s55
      %s58 = sphi 0, %s57
      %s72 = sphi 0, %s58
      %s76 = sphi 0, %s76
      %s78 = sphi 0, %s76
      %s79 = sphi 0, %s78
      %s93 = sphi 0, %s79
      %s97 = sphi 0, %s97
      %s99 = sphi 0, %s97
      %s100 = sphi 0, %s99
      %s114 = sphi 0, %s100
      %s118 = sphi 0, %s118
      %s120 = sphi 0, %s118
      %s121 = sphi 0, %s120
      %s135 = sphi 0, %s121
      %s139 = sphi 0, %s139
      %s141 = sphi 0, %s139
      %s142 = sphi 0, %s141
      %s156 = sphi 0, %s142
      %s160 = sphi 0, %s160
      %s162 = sphi 0, %s160
      %s163 = sphi 0, %s162
      %s177 = sphi 0, %s163
      %s181 = sphi 0, %s181
      %s183 = sphi 0, %s181
      %s184 = sphi 0, %s183
      %s198 = sphi 0, %s184
      %s202 = sphi 0, %s202
      %s204 = sphi 0, %s202
      %s205 = sphi 0, %s204
      %s219 = sphi 0, %s205
      %s223 = sphi 0, %s223
      %s225 = sphi 0, %s223
      %s226 = sphi 0, %s225
      %s240 = sphi 0, %s226
      %s244 = sphi 0, %s244
      %s246 = sphi 0, %s244
      %s247 = sphi 0, %s246
      %s261 = sphi 0, %s247
      %s265 = sphi 0, %s265
      %s267 = sphi 0, %s265
      %s268 = sphi 0, %s267
      %s282 = sphi 0, %s268
      %s288 = sphi 0, %s290
      %s291 = sphi 0, %s288
      %s292 = sphi 0, %s291
      %s308 = sphi 0, %s292
    $region4: #{encoder_E_forward.1} parent=1 // loop_header_branch
      %24 = sbr.rel (%p22) target = $region8
    $region5: #{encoder_E_forward.1} parent=1 // loop_body
      %s26 = ssub.s32 %s21, 1
      %s27 = ssub.s32 %s21, 2
      %s28 = sadd.s32 %s21, 1
      %s29 = ssub.s32 %s21, %s28
      %p30 = scmp.eq.s32.totalorder %s29, 0
      %s32 = sadd.s32 %s31, 1
      %s33 = scalar_select %p30, %s31, %s32
      %p36 = pneg %p30
      %p37 = scmp.eq.s32.totalorder %s21, 1
      %p38 = por %p36, %p37
      %p39 = scmp.ne.s32.totalorder %s31, %s34
      %p40 = scmp.eq.s32.totalorder %s21, 0
      %p41 = por %p39, %p40
      %p42 = scmp.ne.s32.totalorder %s31, %s34
      %p43 = scmp.eq.s32.totalorder %s26, 1
      %p44 = por %p42, %p43
      %p45 = scmp.ne.s32.totalorder %s34, %s35
      %p46 = scmp.eq.s32.totalorder %s26, 0
      %p47 = por %p45, %p46
      %p48 = scmp.ne.s32.totalorder %s34, %s35
      %p49 = scmp.eq.s32.totalorder %s27, 1
      %p50 = por %p48, %p49
      %p52 = scmp.ne.s32.totalorder %s35, %s51
      %p53 = scmp.eq.s32.totalorder %s27, 0
      %p54 = por %p52, %p53
      %s56 = sadd.s32 %s55, 1
      %p59 = scmp.eq.s32.totalorder %s21, 1
      %p60 = scmp.ne.s32.totalorder %s55, %s57
      %p61 = scmp.eq.s32.totalorder %s21, 0
      %p62 = por %p60, %p61
      %p63 = scmp.ne.s32.totalorder %s55, %s57
      %p64 = scmp.eq.s32.totalorder %s26, 1
      %p65 = por %p63, %p64
      %p66 = scmp.ne.s32.totalorder %s57, %s58
      %p67 = scmp.eq.s32.totalorder %s26, 0
      %p68 = por %p66, %p67
      %p69 = scmp.ne.s32.totalorder %s57, %s58
      %p70 = scmp.eq.s32.totalorder %s27, 1
      %p71 = por %p69, %p70
      %p73 = scmp.ne.s32.totalorder %s58, %s72
      %p74 = scmp.eq.s32.totalorder %s27, 0
      %p75 = por %p73, %p74
      %s77 = sadd.s32 %s76, 1
      %p80 = scmp.eq.s32.totalorder %s21, 1
      %p81 = scmp.ne.s32.totalorder %s76, %s78
      %p82 = scmp.eq.s32.totalorder %s21, 0
      %p83 = por %p81, %p82
      %p84 = scmp.ne.s32.totalorder %s76, %s78
      %p85 = scmp.eq.s32.totalorder %s26, 1
      %p86 = por %p84, %p85
      %p87 = scmp.ne.s32.totalorder %s78, %s79
      %p88 = scmp.eq.s32.totalorder %s26, 0
      %p89 = por %p87, %p88
      %p90 = scmp.ne.s32.totalorder %s78, %s79
      %p91 = scmp.eq.s32.totalorder %s27, 1
      %p92 = por %p90, %p91
      %p94 = scmp.ne.s32.totalorder %s79, %s93
      %p95 = scmp.eq.s32.totalorder %s27, 0
      %p96 = por %p94, %p95
      %s98 = sadd.s32 %s97, 1
      %p101 = scmp.eq.s32.totalorder %s21, 1
      %p102 = scmp.ne.s32.totalorder %s97, %s99
      %p103 = scmp.eq.s32.totalorder %s21, 0
      %p104 = por %p102, %p103
      %p105 = scmp.ne.s32.totalorder %s97, %s99
      %p106 = scmp.eq.s32.totalorder %s26, 1
      %p107 = por %p105, %p106
      %p108 = scmp.ne.s32.totalorder %s99, %s100
      %p109 = scmp.eq.s32.totalorder %s26, 0
      %p110 = por %p108, %p109
      %p111 = scmp.ne.s32.totalorder %s99, %s100
      %p112 = scmp.eq.s32.totalorder %s27, 1
      %p113 = por %p111, %p112
      %p115 = scmp.ne.s32.totalorder %s100, %s114
      %p116 = scmp.eq.s32.totalorder %s27, 0
      %p117 = por %p115, %p116
      %s119 = sadd.s32 %s118, 1
      %p122 = scmp.eq.s32.totalorder %s21, 1
      %p123 = scmp.ne.s32.totalorder %s118, %s120
      %p124 = scmp.eq.s32.totalorder %s21, 0
      %p125 = por %p123, %p124
      %p126 = scmp.ne.s32.totalorder %s118, %s120
      %p127 = scmp.eq.s32.totalorder %s26, 1
      %p128 = por %p126, %p127
      %p129 = scmp.ne.s32.totalorder %s120, %s121
      %p130 = scmp.eq.s32.totalorder %s26, 0
      %p131 = por %p129, %p130
      %p132 = scmp.ne.s32.totalorder %s120, %s121
      %p133 = scmp.eq.s32.totalorder %s27, 1
      %p134 = por %p132, %p133
      %p136 = scmp.ne.s32.totalorder %s121, %s135
      %p137 = scmp.eq.s32.totalorder %s27, 0
      %p138 = por %p136, %p137
      %s140 = sadd.s32 %s139, 1
      %p143 = scmp.eq.s32.totalorder %s21, 1
      %p144 = scmp.ne.s32.totalorder %s139, %s141
      %p145 = scmp.eq.s32.totalorder %s21, 0
      %p146 = por %p144, %p145
      %p147 = scmp.ne.s32.totalorder %s139, %s141
      %p148 = scmp.eq.s32.totalorder %s26, 1
      %p149 = por %p147, %p148
      %p150 = scmp.ne.s32.totalorder %s141, %s142
      %p151 = scmp.eq.s32.totalorder %s26, 0
      %p152 = por %p150, %p151
      %p153 = scmp.ne.s32.totalorder %s141, %s142
      %p154 = scmp.eq.s32.totalorder %s27, 1
      %p155 = por %p153, %p154
      %p157 = scmp.ne.s32.totalorder %s142, %s156
      %p158 = scmp.eq.s32.totalorder %s27, 0
      %p159 = por %p157, %p158
      %s161 = sadd.s32 %s160, 1
      %p164 = scmp.eq.s32.totalorder %s21, 1
      %p165 = scmp.ne.s32.totalorder %s160, %s162
      %p166 = scmp.eq.s32.totalorder %s21, 0
      %p167 = por %p165, %p166
      %p168 = scmp.ne.s32.totalorder %s160, %s162
      %p169 = scmp.eq.s32.totalorder %s26, 1
      %p170 = por %p168, %p169
      %p171 = scmp.ne.s32.totalorder %s162, %s163
      %p172 = scmp.eq.s32.totalorder %s26, 0
      %p173 = por %p171, %p172
      %p174 = scmp.ne.s32.totalorder %s162, %s163
      %p175 = scmp.eq.s32.totalorder %s27, 1
      %p176 = por %p174, %p175
      %p178 = scmp.ne.s32.totalorder %s163, %s177
      %p179 = scmp.eq.s32.totalorder %s27, 0
      %p180 = por %p178, %p179
      %s182 = sadd.s32 %s181, 1
      %p185 = scmp.eq.s32.totalorder %s21, 1
      %p186 = scmp.ne.s32.totalorder %s181, %s183
      %p187 = scmp.eq.s32.totalorder %s21, 0
      %p188 = por %p186, %p187
      %p189 = scmp.ne.s32.totalorder %s181, %s183
      %p190 = scmp.eq.s32.totalorder %s26, 1
      %p191 = por %p189, %p190
      %p192 = scmp.ne.s32.totalorder %s183, %s184
      %p193 = scmp.eq.s32.totalorder %s26, 0
      %p194 = por %p192, %p193
      %p195 = scmp.ne.s32.totalorder %s183, %s184
      %p196 = scmp.eq.s32.totalorder %s27, 1
      %p197 = por %p195, %p196
      %p199 = scmp.ne.s32.totalorder %s184, %s198
      %p200 = scmp.eq.s32.totalorder %s27, 0
      %p201 = por %p199, %p200
      %s203 = sadd.s32 %s202, 1
      %p206 = scmp.eq.s32.totalorder %s21, 1
      %p207 = scmp.ne.s32.totalorder %s202, %s204
      %p208 = scmp.eq.s32.totalorder %s21, 0
      %p209 = por %p207, %p208
      %p210 = scmp.ne.s32.totalorder %s202, %s204
      %p211 = scmp.eq.s32.totalorder %s26, 1
      %p212 = por %p210, %p211
      %p213 = scmp.ne.s32.totalorder %s204, %s205
      %p214 = scmp.eq.s32.totalorder %s26, 0
      %p215 = por %p213, %p214
      %p216 = scmp.ne.s32.totalorder %s204, %s205
      %p217 = scmp.eq.s32.totalorder %s27, 1
      %p218 = por %p216, %p217
      %p220 = scmp.ne.s32.totalorder %s205, %s219
      %p221 = scmp.eq.s32.totalorder %s27, 0
      %p222 = por %p220, %p221
      %s224 = sadd.s32 %s223, 1
      %p227 = scmp.eq.s32.totalorder %s21, 1
      %p228 = scmp.ne.s32.totalorder %s223, %s225
      %p229 = scmp.eq.s32.totalorder %s21, 0
      %p230 = por %p228, %p229
      %p231 = scmp.ne.s32.totalorder %s223, %s225
      %p232 = scmp.eq.s32.totalorder %s26, 1
      %p233 = por %p231, %p232
      %p234 = scmp.ne.s32.totalorder %s225, %s226
      %p235 = scmp.eq.s32.totalorder %s26, 0
      %p236 = por %p234, %p235
      %p237 = scmp.ne.s32.totalorder %s225, %s226
      %p238 = scmp.eq.s32.totalorder %s27, 1
      %p239 = por %p237, %p238
      %p241 = scmp.ne.s32.totalorder %s226, %s240
      %p242 = scmp.eq.s32.totalorder %s27, 0
      %p243 = por %p241, %p242
      %s245 = sadd.s32 %s244, 1
      %p248 = scmp.eq.s32.totalorder %s21, 1
      %p249 = scmp.ne.s32.totalorder %s244, %s246
      %p250 = scmp.eq.s32.totalorder %s21, 0
      %p251 = por %p249, %p250
      %p252 = scmp.ne.s32.totalorder %s244, %s246
      %p253 = scmp.eq.s32.totalorder %s26, 1
      %p254 = por %p252, %p253
      %p255 = scmp.ne.s32.totalorder %s246, %s247
      %p256 = scmp.eq.s32.totalorder %s26, 0
      %p257 = por %p255, %p256
      %p258 = scmp.ne.s32.totalorder %s246, %s247
      %p259 = scmp.eq.s32.totalorder %s27, 1
      %p260 = por %p258, %p259
      %p262 = scmp.ne.s32.totalorder %s247, %s261
      %p263 = scmp.eq.s32.totalorder %s27, 0
      %p264 = por %p262, %p263
      %s266 = sadd.s32 %s265, 1
      %p269 = scmp.eq.s32.totalorder %s21, 1
      %p270 = scmp.ne.s32.totalorder %s265, %s267
      %p271 = scmp.eq.s32.totalorder %s21, 0
      %p272 = por %p270, %p271
      %p273 = scmp.ne.s32.totalorder %s265, %s267
      %p274 = scmp.eq.s32.totalorder %s26, 1
      %p275 = por %p273, %p274
      %p276 = scmp.ne.s32.totalorder %s267, %s268
      %p277 = scmp.eq.s32.totalorder %s26, 0
      %p278 = por %p276, %p277
      %p279 = scmp.ne.s32.totalorder %s267, %s268
      %p280 = scmp.eq.s32.totalorder %s27, 1
      %p281 = por %p279, %p280
      %p283 = scmp.ne.s32.totalorder %s268, %s282
      %p284 = scmp.eq.s32.totalorder %s27, 0
      %p285 = por %p283, %p284
      %s286 = ssub.s32 %s21, %s28
      %p287 = scmp.eq.s32.totalorder %s286, 0
      %s289 = sadd.s32 %s288, 1
      %s290 = scalar_select %p287, %s288, %s289
      %p293 = pneg %p287
      %p294 = scmp.eq.s32.totalorder %s21, 1
      %p295 = por %p293, %p294
      %p296 = scmp.ne.s32.totalorder %s288, %s291
      %p297 = scmp.eq.s32.totalorder %s21, 0
      %p298 = por %p296, %p297
      %p299 = scmp.ne.s32.totalorder %s288, %s291
      %p300 = scmp.eq.s32.totalorder %s26, 1
      %p301 = por %p299, %p300
      %p302 = scmp.ne.s32.totalorder %s291, %s292
      %p303 = scmp.eq.s32.totalorder %s26, 0
      %p304 = por %p302, %p303
      %p305 = scmp.ne.s32.totalorder %s291, %s292
      %p306 = scmp.eq.s32.totalorder %s27, 1
      %p307 = por %p305, %p306
      %p309 = scmp.ne.s32.totalorder %s292, %s308
      %p310 = scmp.eq.s32.totalorder %s27, 0
      %p311 = por %p309, %p310
      %p312 = scmp.le.s32.totalorder 1, %s21
      %p313 = scmp.lt.s32.totalorder %s21, 3
      %p314 = pnand %p312, %p313
      %p315 = pneg %p314
      // Predicated region
      $region9: #{encoder_E_forward.1} parent=5 // pred_check
        _
      $region10: #{encoder_E_forward.1} parent=5 // pred_check_branch
        %317 = sbr.rel (%p314) target = $region12
      $region11: #{encoder_E_forward.1} parent=5 // pred_region
        %s318 = ssub.s32 %s21, 1
        // Predicated region
        $region13: #{encoder_E_forward.1} parent=11 // pred_check
          %p319 = pneg %p68
        $region14: #{encoder_E_forward.1} parent=11 // pred_check_branch
          %321 = sbr.rel (%p319) target = $region16
        $region15: #{encoder_E_forward.1} parent=11 // pred_region
          _
        $region16: #{encoder_E_forward.1} parent=11 // pred_fallthru
          _
        // Predicated region
        $region17: #{encoder_E_forward.1} parent=11 // pred_check
          %p322 = pneg %p89
        $region18: #{encoder_E_forward.1} parent=11 // pred_check_branch
          %324 = sbr.rel (%p322) target = $region20
        $region19: #{encoder_E_forward.1} parent=11 // pred_region
          _
        $region20: #{encoder_E_forward.1} parent=11 // pred_fallthru
          _
        // Predicated region
        $region21: #{encoder_E_forward.1} parent=11 // pred_check
          %p325 = pneg %p110
        $region22: #{encoder_E_forward.1} parent=11 // pred_check_branch
          %327 = sbr.rel (%p325) target = $region24
        $region23: #{encoder_E_forward.1} parent=11 // pred_region
          _
        $region24: #{encoder_E_forward.1} parent=11 // pred_fallthru
          _
        // Predicated region
        $region25: #{encoder_E_forward.1} parent=11 // pred_check
          %p328 = pneg %p131
        $region26: #{encoder_E_forward.1} parent=11 // pred_check_branch
          %330 = sbr.rel (%p328) target = $region28
        $region27: #{encoder_E_forward.1} parent=11 // pred_region
          _
        $region28: #{encoder_E_forward.1} parent=11 // pred_fallthru
          _
        // Predicated region
        $region29: #{encoder_E_forward.1} parent=11 // pred_check
          %p331 = pneg %p152
        $region30: #{encoder_E_forward.1} parent=11 // pred_check_branch
          %333 = sbr.rel (%p331) target = $region32
        $region31: #{encoder_E_forward.1} parent=11 // pred_region
          _
        $region32: #{encoder_E_forward.1} parent=11 // pred_fallthru
          _
        // Predicated region
        $region33: #{encoder_E_forward.1} parent=11 // pred_check
          %p334 = pneg %p173
        $region34: #{encoder_E_forward.1} parent=11 // pred_check_branch
          %336 = sbr.rel (%p334) target = $region36
        $region35: #{encoder_E_forward.1} parent=11 // pred_region
          _
        $region36: #{encoder_E_forward.1} parent=11 // pred_fallthru
          _
        // Predicated region
        $region37: #{encoder_E_forward.1} parent=11 // pred_check
          %p337 = pneg %p194
        $region38: #{encoder_E_forward.1} parent=11 // pred_check_branch
          %339 = sbr.rel (%p337) target = $region40
        $region39: #{encoder_E_forward.1} parent=11 // pred_region
          _
        $region40: #{encoder_E_forward.1} parent=11 // pred_fallthru
          _
        // Predicated region
        $region41: #{encoder_E_forward.1} parent=11 // pred_check
          %p340 = pneg %p215
        $region42: #{encoder_E_forward.1} parent=11 // pred_check_branch
          %342 = sbr.rel (%p340) target = $region44
        $region43: #{encoder_E_forward.1} parent=11 // pred_region
          _
        $region44: #{encoder_E_forward.1} parent=11 // pred_fallthru
          _
        // Predicated region
        $region45: #{encoder_E_forward.1} parent=11 // pred_check
          %p343 = pneg %p236
        $region46: #{encoder_E_forward.1} parent=11 // pred_check_branch
          %345 = sbr.rel (%p343) target = $region48
        $region47: #{encoder_E_forward.1} parent=11 // pred_region
          _
        $region48: #{encoder_E_forward.1} parent=11 // pred_fallthru
          _
        // Predicated region
        $region49: #{encoder_E_forward.1} parent=11 // pred_check
          %p346 = pneg %p257
        $region50: #{encoder_E_forward.1} parent=11 // pred_check_branch
          %348 = sbr.rel (%p346) target = $region52
        $region51: #{encoder_E_forward.1} parent=11 // pred_region
          _
        $region52: #{encoder_E_forward.1} parent=11 // pred_fallthru
          _
        // Predicated region
        $region53: #{encoder_E_forward.1} parent=11 // pred_check
          %p349 = pneg %p278
        $region54: #{encoder_E_forward.1} parent=11 // pred_check_branch
          %351 = sbr.rel (%p349) target = $region56
        $region55: #{encoder_E_forward.1} parent=11 // pred_region
          _
        $region56: #{encoder_E_forward.1} parent=11 // pred_fallthru
          _
      $region12: #{encoder_E_forward.1} parent=5 // pred_fallthru
        _
      %p352 = scmp.lt.s32.totalorder %s21, 2
      // Predicated region
      $region57: #{encoder_E_forward.1} parent=5 // pred_check
        %p353 = pneg %p352
      $region58: #{encoder_E_forward.1} parent=5 // pred_check_branch
        %355 = sbr.rel (%p353) target = $region60
      $region59: #{encoder_E_forward.1} parent=5 // pred_region
        // Predicated region
        $region61: #{encoder_E_forward.1} parent=59 // pred_check
          %p356 = pneg %p41
        $region62: #{encoder_E_forward.1} parent=59 // pred_check_branch
          %358 = sbr.rel (%p356) target = $region64
        $region63: #{encoder_E_forward.1} parent=59 // pred_region
          %p359 = scmp.lt.s32.totalorder %s21, 1
          %s360 = scalar_select %p359, %s21, 1
          %s361 = smul.addr %s360, 8
          %s362 = smul.addr %s361, 4
          %s363 = scalar_lea.vmem %s0, %s362
        $region64: #{encoder_E_forward.1} parent=59 // pred_fallthru
          _
      $region60: #{encoder_E_forward.1} parent=5 // pred_fallthru
        _
      %p364 = scmp.le.s32.totalorder 1, %s21
      %p365 = scmp.lt.s32.totalorder %s21, 3
      %p366 = pnand %p364, %p365
      %p367 = pneg %p366
      // Predicated region
      $region65: #{encoder_E_forward.1} parent=5 // pred_check
        _
      $region66: #{encoder_E_forward.1} parent=5 // pred_check_branch
        %369 = sbr.rel (%p366) target = $region68
      $region67: #{encoder_E_forward.1} parent=5 // pred_region
        %s370 = ssub.s32 %s21, 1
        %p371 = scmp.lt.s32.totalorder %s26, 1
        %s372 = scalar_select %p371, %s26, 1
        %s373 = smul.addr %s372, 8
        %s374 = smul.addr %s373, 4
        %s375 = scalar_lea.vmem %s0, %s374
        %p376 = pneg %p47
        %p377 = pneg %p44
        %p378 = pneg %p68
        %p379 = pneg %p65
        %p380 = pneg %p89
        %p381 = pneg %p86
        %p382 = pneg %p110
        %p383 = pneg %p107
        %p384 = pneg %p131
        %p385 = pneg %p128
        %p386 = pneg %p152
        %p387 = pneg %p149
        %p388 = pneg %p173
        %p389 = pneg %p170
        %p390 = pneg %p194
        %p391 = pneg %p191
        %p392 = pneg %p215
        %p393 = pneg %p212
        %p394 = pneg %p236
        %p395 = pneg %p233
        %p396 = pneg %p257
        %p397 = pneg %p254
        %p398 = pneg %p278
        %p399 = pneg %p275
        %p400 = pneg %p304
        %p401 = pneg %p301
        %s402 = sand.u32 %s291, 1
        %s403 = scalar_lea.sflag [#allocation3], %s402
        %s404 = sand.u32 %s291, 1
        %s405 = smul.addr %s404, 16
        %s406 = scalar_lea.vmem [#allocation2], %s405
        %p407 = scmp.lt.s32.totalorder %s26, 1
        %s408 = scalar_select %p407, %s26, 1
        %s409 = smul.addr %s408, 8
        %s410 = smul.addr %s409, 4
        %s411 = scalar_lea.vmem %s0, %s410
        %v413 = vld [vmem:[%s411] sm:$0xf]
        %v414 = vld [vmem:[%s411 + $0x4] sm:$0xf]
        %v415 = vld [vmem:[%s411 + $0x8] sm:$0xf]
        %v416 = vld [vmem:[%s411 + $0xc] sm:$0xf]
        %v417 = vld [vmem:[%s411 + $0x10] sm:$0xf]
        %v418 = vld [vmem:[%s411 + $0x14] sm:$0xf]
        %v419 = vld [vmem:[%s411 + $0x18] sm:$0xf]
        %v420 = vld [vmem:[%s411 + $0x1c] sm:$0xf]
        %v421 = vld [vmem:[%s1] sm:$0xf]
        %v422 = vld [vmem:[%s1 + $0x4] sm:$0xf]
        %v423 = vld [vmem:[%s1 + $0x8] sm:$0xf]
        %v424 = vld [vmem:[%s1 + $0xc] sm:$0x3]
        %v425 = vld [vmem:[%s2] sm:$0x1]
        %v426 = vlaneseq
        %v427 = vshrl.u32 %v426, 7
        %v428 = vsub.s32 0, %v427
        %v429 = vrot.slane %v425, %v428
        %v438 = vunpack.c.l.b16 %v413
        %v439 = vunpack.c.l.b16 %v414
        %v440 = vunpack.c.l.b16 %v415
        %v441 = vunpack.c.l.b16 %v416
        %v442 = vunpack.c.l.b16 %v417
        %v443 = vunpack.c.l.b16 %v418
        %v444 = vunpack.c.l.b16 %v419
        %v445 = vunpack.c.l.b16 %v420
        %v446 = vpack.c.b16 %v439, %v438
        %v447 = vpack.c.b16 %v441, %v440
        %v448 = vpack.c.b16 %v443, %v442
        %v449 = vpack.c.b16 %v445, %v444
        %v454 = vunpack.c.l.b16 %v421
        %v455 = vunpack.c.l.b16 %v422
        %v456 = vunpack.c.l.b16 %v423
        %v457 = vunpack.c.l.b16 %v424
        %v458 = vpack.c.b16 %v455, %v454
        %v459 = vpack.c.b16 %v457, %v456
        %vm461 = vcmask 220160
        %v463 = vsel %vm461, %v446, 0
        %v466 = vsel %vm461, %v447, 0
        %v469 = vsel %vm461, %v448, 0
        %v472 = vsel %vm461, %v449, 0
        %vm474 = vcmask 1044480
        %vm475 = vcmask 1045504
        %v476 = vsel %vm474, 4294967295, 65535
        %v477 = vsel %vm475, %v476, 0
        %v479 = vand.u32 %v459, %v477
        %481 = vmatprep.subr.bf16.mxu0 0
        %482 = vmatpush1.bf16.msra.mxu0 %v458
        %483 = vmatprep.subr.bf16.mxu0 0
        %484 = vmatpush1.bf16.msra.mxu0 %v479
        %485 = vmatprep.subr.bf16.mxu0 0
        %486 = vmatpush1.bf16.msra.mxu0 0
        %487 = vmatprep.subr.bf16.mxu0 0
        %488 = vmatpush1.bf16.msra.mxu0 0
        %489 = vmatprep.subr.bf16.mxu0 0
        %490 = vmatpush1.bf16.msra.mxu0 0
        %491 = vmatprep.subr.bf16.mxu0 0
        %492 = vmatpush1.bf16.msra.mxu0 0
        %493 = vmatprep.subr.bf16.mxu0 0
        %494 = vmatpush1.bf16.msra.mxu0 0
        %495 = vmatprep.subr.bf16.mxu0 0
        %496 = vmatpush1.bf16.msra.mxu0 0
        %497 = vmatprep.subr.bf16.mxu0 0
        %498 = vmatpush1.bf16.msra.mxu0 0
        %499 = vmatprep.subr.bf16.mxu0 0
        %500 = vmatpush1.bf16.msra.mxu0 0
        %501 = vmatprep.subr.bf16.mxu0 0
        %502 = vmatpush1.bf16.msra.mxu0 0
        %503 = vmatprep.subr.bf16.mxu0 0
        %504 = vmatpush1.bf16.msra.mxu0 0
        %505 = vmatprep.subr.bf16.mxu0 0
        %506 = vmatpush1.bf16.msra.mxu0 0
        %507 = vmatprep.subr.bf16.mxu0 0
        %508 = vmatpush1.bf16.msra.mxu0 0
        %509 = vmatprep.subr.bf16.mxu0 0
        %510 = vmatpush1.bf16.msra.mxu0 0
        %511 = vmatprep.subr.bf16.mxu0 0
        %512 = vmatpush1.bf16.msra.mxu0 0
        %513 = vmatprep.mubr.bf16.mxu0 0
        %514 = vmatmul.mubr.bf16.gmra.mrb[0].mxu0 %v463
        %v515 = vpop.f32.mrb[0].mxu0
        %v516 = vadd.f32 %v429, %v515
        %v517 = vpop.f32.mrb[0].mxu0
        %v518 = vpop.f32.mrb[0].mxu0
        %v519 = vadd.f32 %v429, %v518
        %v520 = vpop.f32.mrb[0].mxu0
        %521 = vmatprep.mubr.bf16.mxu0 0
        %522 = vmatmul.mubr.bf16.gmra.mrb[0].mxu0 %v466
        %v523 = vpop.f32.mrb[0].mxu0
        %v524 = vadd.f32 %v429, %v523
        %v525 = vpop.f32.mrb[0].mxu0
        %v526 = vpop.f32.mrb[0].mxu0
        %v527 = vadd.f32 %v429, %v526
        %v528 = vpop.f32.mrb[0].mxu0
        %529 = vmatprep.mubr.bf16.mxu0 0
        %530 = vmatmul.mubr.bf16.gmra.mrb[0].mxu0 %v469
        %v531 = vpop.f32.mrb[0].mxu0
        %v532 = vadd.f32 %v429, %v531
        %v533 = vpop.f32.mrb[0].mxu0
        %v534 = vpop.f32.mrb[0].mxu0
        %v535 = vadd.f32 %v429, %v534
        %v536 = vpop.f32.mrb[0].mxu0
        %537 = vmatprep.mubr.bf16.mxu0 0
        %538 = vmatmul.mubr.bf16.gmra.mrb[0].mxu0 %v472
        %v539 = vpop.f32.mrb[0].mxu0
        %v540 = vadd.f32 %v429, %v539
        %v541 = vpop.f32.mrb[0].mxu0
        %v542 = vpop.f32.mrb[0].mxu0
        %v543 = vadd.f32 %v429, %v542
        %v544 = vpop.f32.mrb[0].mxu0
        %545 = vdwg.mxu0
        %v546 = vld [vmem:[%s3] sm:$0xff]
        %v547 = vld [vmem:[%s3 + $0x8] sm:$0xff]
        %v548 = vld [vmem:[%s3 + $0x10] sm:$0xff]
        %v549 = vld [vmem:[%s3 + $0x18] sm:$0xff]
        %v550 = vld [vmem:[%s2 + $0x1] sm:$0x1]
        %v551 = vld [vmem:[%s2 + $0x2] sm:$0x1]
        %vm552 = vcmask 261120
        %v553 = vsel %vm552, %v516, 0.0
        %v554 = vsel %vm552, %v519, 0.0
        %v555 = vadd.f32 %v553, %v554
        %v556 = vsel %vm552, %v524, 0.0
        %v557 = vadd.f32 %v555, %v556
        %v558 = vsel %vm552, %v527, 0.0
        %v559 = vadd.f32 %v557, %v558
        %v560 = vsel %vm552, %v532, 0.0
        %v561 = vadd.f32 %v559, %v560
        %v562 = vsel %vm552, %v535, 0.0
        %v563 = vadd.f32 %v561, %v562
        %v564 = vsel %vm552, %v540, 0.0
        %v565 = vadd.f32 %v563, %v564
        %v566 = vsel %vm552, %v543, 0.0
        %v567 = vadd.f32 %v565, %v566
        %v568 = vrot.slane %v567, 4
        %v569 = vadd.f32 %v567, %v568
        %v570 = vrot.slane %v569, 2
        %v571 = vadd.f32 %v569, %v570
        %v572 = vrot.slane %v571, 1
        %v573 = vadd.f32 %v571, %v572
        %v574 = vmul.f32 %v516, %v516
        %v575 = vmul.f32 %v519, %v519
        %v576 = vmul.f32 %v524, %v524
        %v577 = vmul.f32 %v527, %v527
        %v578 = vmul.f32 %v532, %v532
        %v579 = vmul.f32 %v535, %v535
        %v580 = vmul.f32 %v540, %v540
        %v581 = vmul.f32 %v543, %v543
        %v582 = vsel %vm552, %v574, 0.0
        %v583 = vsel %vm552, %v575, 0.0
        %v584 = vadd.f32 %v582, %v583
        %v585 = vsel %vm552, %v576, 0.0
        %v586 = vadd.f32 %v584, %v585
        %v587 = vsel %vm552, %v577, 0.0
        %v588 = vadd.f32 %v586, %v587
        %v589 = vsel %vm552, %v578, 0.0
        %v590 = vadd.f32 %v588, %v589
        %v591 = vsel %vm552, %v579, 0.0
        %v592 = vadd.f32 %v590, %v591
        %v593 = vsel %vm552, %v580, 0.0
        %v594 = vadd.f32 %v592, %v593
        %v595 = vsel %vm552, %v581, 0.0
        %v596 = vadd.f32 %v594, %v595
        %v597 = vrot.slane %v596, 4
        %v598 = vadd.f32 %v596, %v597
        %v599 = vrot.slane %v598, 2
        %v600 = vadd.f32 %v598, %v599
        %v601 = vrot.slane %v600, 1
        %v602 = vadd.f32 %v600, %v601
        %vm603 = vcmask 1040384
        %v604 = vsel %vm603, %v573, %v602
        %v606 = vsel %vm552, %v604, 0
        %608 = vmatprep.subr.mxu0 0.0
        %609 = vmatpush1.msra.mxu0 %v546
        %610 = vmatprep.subr.mxu0 0.0
        %611 = vmatpush1.msra.mxu0 %v547
        %612 = vmatprep.subr.mxu0 0.0
        %613 = vmatpush1.msra.mxu0 %v548
        %614 = vmatprep.subr.mxu0 0.0
        %615 = vmatpush1.msra.mxu0 %v549
        %616 = vmatprep.subr.mxu0 0.0
        %617 = vmatpush1.msra.mxu0 0.0
        %618 = vmatprep.subr.mxu0 0.0
        %619 = vmatpush1.msra.mxu0 0.0
        %620 = vmatprep.subr.mxu0 0.0
        %621 = vmatpush1.msra.mxu0 0.0
        %622 = vmatprep.subr.mxu0 0.0
        %623 = vmatpush1.msra.mxu0 0.0
        %624 = vmatprep.subr.mxu0 0.0
        %625 = vmatpush1.msra.mxu0 0.0
        %626 = vmatprep.subr.mxu0 0.0
        %627 = vmatpush1.msra.mxu0 0.0
        %628 = vmatprep.subr.mxu0 0.0
        %629 = vmatpush1.msra.mxu0 0.0
        %630 = vmatprep.subr.mxu0 0.0
        %631 = vmatpush1.msra.mxu0 0.0
        %632 = vmatprep.subr.mxu0 0.0
        %633 = vmatpush1.msra.mxu0 0.0
        %634 = vmatprep.subr.mxu0 0.0
        %635 = vmatpush1.msra.mxu0 0.0
        %636 = vmatprep.subr.mxu0 0.0
        %637 = vmatpush1.msra.mxu0 0.0
        %638 = vmatprep.subr.mxu0 0.0
        %639 = vmatpush1.msra.mxu0 0.0
        %640 = vmatprep.subr.mxu0 0.0
        %641 = vmatpush1.msra.mxu0 0.0
        %642 = vmatprep.subr.mxu0 0.0
        %643 = vmatpush1.msra.mxu0 0.0
        %644 = vmatprep.subr.mxu0 0.0
        %645 = vmatpush1.msra.mxu0 0.0
        %646 = vmatprep.subr.mxu0 0.0
        %647 = vmatpush1.msra.mxu0 0.0
        %648 = vmatprep.subr.mxu0 0.0
        %649 = vmatpush1.msra.mxu0 0.0
        %650 = vmatprep.subr.mxu0 0.0
        %651 = vmatpush1.msra.mxu0 0.0
        %652 = vmatprep.subr.mxu0 0.0
        %653 = vmatpush1.msra.mxu0 0.0
        %654 = vmatprep.subr.mxu0 0.0
        %655 = vmatpush1.msra.mxu0 0.0
        %656 = vmatprep.subr.mxu0 0.0
        %657 = vmatpush1.msra.mxu0 0.0
        %658 = vmatprep.subr.mxu0 0.0
        %659 = vmatpush1.msra.mxu0 0.0
        %660 = vmatprep.subr.mxu0 0.0
        %661 = vmatpush1.msra.mxu0 0.0
        %662 = vmatprep.subr.mxu0 0.0
        %663 = vmatpush1.msra.mxu0 0.0
        %664 = vmatprep.subr.mxu0 0.0
        %665 = vmatpush1.msra.mxu0 0.0
        %666 = vmatprep.subr.mxu0 0.0
        %667 = vmatpush1.msra.mxu0 0.0
        %668 = vmatprep.subr.mxu0 0.0
        %669 = vmatpush1.msra.mxu0 0.0
        %670 = vmatprep.subr.mxu0 0.0
        %671 = vmatpush1.msra.mxu0 0.0
        %672 = vmatprep.mubr.f32.mxu0 0.0
        %673 = vmatmul.mubr.f32.gmra.mrb[0].mxu0 %v606
        %v674 = vpop.f32.mrb[0].mxu0
        %v675 = vadd.f32 0.0, %v674
        %v676 = vpop.f32.mrb[0].mxu0
        %677 = vdwg.mxu0
        %v678 = vmul.f32 %v675, %v675
        %v680 = vrot.slane %v678, 7
        %v682 = vsub.f32 %v675, %v680
        %v683 = vmax.f32 %v682, 0.0
        %v684 = vadd.f32 %v683, 1e-05
        %v685 = vrsqrt.pop %v684
        %v686 = vlaneseq
        %v687 = vshrl.u32 %v686, 7
        %v688 = vsub.s32 0, %v687
        %v689 = vrot.slane %v675, %v688
        %v690 = vsub.f32 %v516, %v689
        %v691 = vsub.f32 %v519, %v689
        %v692 = vsub.f32 %v524, %v689
        %v693 = vsub.f32 %v527, %v689
        %v694 = vsub.f32 %v532, %v689
        %v695 = vsub.f32 %v535, %v689
        %v696 = vsub.f32 %v540, %v689
        %v697 = vsub.f32 %v543, %v689
        %v698 = vlaneseq
        %v699 = vshrl.u32 %v698, 7
        %v700 = vsub.s32 1, %v699
        %v701 = vrot.slane %v685, %v700
        %v702 = vmul.f32 %v690, %v701
        %v703 = vmul.f32 %v691, %v701
        %v704 = vmul.f32 %v692, %v701
        %v705 = vmul.f32 %v693, %v701
        %v706 = vmul.f32 %v694, %v701
        %v707 = vmul.f32 %v695, %v701
        %v708 = vmul.f32 %v696, %v701
        %v709 = vmul.f32 %v697, %v701
        %v710 = vlaneseq
        %v711 = vshrl.u32 %v710, 7
        %v712 = vsub.s32 0, %v711
        %v713 = vrot.slane %v550, %v712
        %v714 = vmul.f32 %v702, %v713
        %v715 = vmul.f32 %v703, %v713
        %v716 = vmul.f32 %v704, %v713
        %v717 = vmul.f32 %v705, %v713
        %v718 = vmul.f32 %v706, %v713
        %v719 = vmul.f32 %v707, %v713
        %v720 = vmul.f32 %v708, %v713
        %v721 = vmul.f32 %v709, %v713
        %v722 = vlaneseq
        %v723 = vshrl.u32 %v722, 7
        %v724 = vsub.s32 0, %v723
        %v725 = vrot.slane %v551, %v724
        %v726 = vadd.f32 %v714, %v725
        %v727 = vadd.f32 %v715, %v725
        %v728 = vadd.f32 %v716, %v725
        %v729 = vadd.f32 %v717, %v725
        %v730 = vadd.f32 %v718, %v725
        %v731 = vadd.f32 %v719, %v725
        %v732 = vadd.f32 %v720, %v725
        %v733 = vadd.f32 %v721, %v725
        %vm734 = vcmp.gt.f32.partialorder %v726, 0.0
        %vm735 = vcmp.gt.f32.partialorder %v727, 0.0
        %vm736 = vcmp.gt.f32.partialorder %v728, 0.0
        %vm737 = vcmp.gt.f32.partialorder %v729, 0.0
        %vm738 = vcmp.gt.f32.partialorder %v730, 0.0
        %vm739 = vcmp.gt.f32.partialorder %v731, 0.0
        %vm740 = vcmp.gt.f32.partialorder %v732, 0.0
        %vm741 = vcmp.gt.f32.partialorder %v733, 0.0
        %v742 = vmul.f32 %v726, 0.2
        %v743 = vmul.f32 %v727, 0.2
        %v744 = vmul.f32 %v728, 0.2
        %v745 = vmul.f32 %v729, 0.2
        %v746 = vmul.f32 %v730, 0.2
        %v747 = vmul.f32 %v731, 0.2
        %v748 = vmul.f32 %v732, 0.2
        %v749 = vmul.f32 %v733, 0.2
        %v750 = vsel %vm734, %v726, %v742
        %v751 = vsel %vm735, %v727, %v743
        %v752 = vsel %vm736, %v728, %v744
        %v753 = vsel %vm737, %v729, %v745
        %v754 = vsel %vm738, %v730, %v746
        %v755 = vsel %vm739, %v731, %v747
        %v756 = vsel %vm740, %v732, %v748
        %v757 = vsel %vm741, %v733, %v749
        %v758 = vpack.c.bf16 %v751, %v750
        %v759 = vpack.c.bf16 %v753, %v752
        %v760 = vpack.c.bf16 %v755, %v754
        %v761 = vpack.c.bf16 %v757, %v756
        %v762 = vld [vmem:[%s4] sm:$0xf]
        %v763 = vld [vmem:[%s4 + $0x4] sm:$0xf]
        %v764 = vld [vmem:[%s4 + $0x8] sm:$0xf]
        %v765 = vld [vmem:[%s4 + $0xc] sm:$0xf]
        %v766 = vld [vmem:[%s4 + $0x10] sm:$0xf]
        %v767 = vld [vmem:[%s4 + $0x14] sm:$0xf]
        %v768 = vld [vmem:[%s4 + $0x18] sm:$0xf]
        %v769 = vld [vmem:[%s4 + $0x1c] sm:$0xf]
        %v778 = vunpack.c.l.b16 %v762
        %v779 = vunpack.c.l.b16 %v763
        %v780 = vunpack.c.l.b16 %v764
        %v781 = vunpack.c.l.b16 %v765
        %v782 = vunpack.c.l.b16 %v766
        %v783 = vunpack.c.l.b16 %v767
        %v784 = vunpack.c.l.b16 %v768
        %v785 = vunpack.c.l.b16 %v769
        %v786 = vpack.c.b16 %v779, %v778
        %v787 = vpack.c.b16 %v781, %v780
        %v788 = vpack.c.b16 %v783, %v782
        %v789 = vpack.c.b16 %v785, %v784
        %vm790 = vcmask 523264
        %v792 = vsel %vm790, %v786, 0
        %v795 = vsel %vm790, %v787, 0
        %v798 = vsel %vm790, %v788, 0
        %v801 = vsel %vm790, %v789, 0
        %803 = vmatprep.subr.bf16.mxu0 0
        %804 = vmatpush1.bf16.msra.mxu0 %v758
        %805 = vmatprep.subr.bf16.mxu0 0
        %806 = vmatpush1.bf16.msra.mxu0 %v759
        %807 = vmatprep.subr.bf16.mxu0 0
        %808 = vmatpush1.bf16.msra.mxu0 %v760
        %809 = vmatprep.subr.bf16.mxu0 0
        %810 = vmatpush1.bf16.msra.mxu0 %v761
        %811 = vmatprep.subr.bf16.mxu0 0
        %812 = vmatpush1.bf16.msra.mxu0 0
        %813 = vmatprep.subr.bf16.mxu0 0
        %814 = vmatpush1.bf16.msra.mxu0 0
        %815 = vmatprep.subr.bf16.mxu0 0
        %816 = vmatpush1.bf16.msra.mxu0 0
        %817 = vmatprep.subr.bf16.mxu0 0
        %818 = vmatpush1.bf16.msra.mxu0 0
        %819 = vmatprep.subr.bf16.mxu0 0
        %820 = vmatpush1.bf16.msra.mxu0 0
        %821 = vmatprep.subr.bf16.mxu0 0
        %822 = vmatpush1.bf16.msra.mxu0 0
        %823 = vmatprep.subr.bf16.mxu0 0
        %824 = vmatpush1.bf16.msra.mxu0 0
        %825 = vmatprep.subr.bf16.mxu0 0
        %826 = vmatpush1.bf16.msra.mxu0 0
        %827 = vmatprep.subr.bf16.mxu0 0
        %828 = vmatpush1.bf16.msra.mxu0 0
        %829 = vmatprep.subr.bf16.mxu0 0
        %830 = vmatpush1.bf16.msra.mxu0 0
        %831 = vmatprep.subr.bf16.mxu0 0
        %832 = vmatpush1.bf16.msra.mxu0 0
        %833 = vmatprep.subr.bf16.mxu0 0
        %834 = vmatpush1.bf16.msra.mxu0 0
        %835 = vmatprep.mubr.bf16.mxu0 0
        %836 = vmatmul.mubr.bf16.gmra.mrb[0].mxu0 %v792
        %v837 = vpop.f32.mrb[0].mxu0
        %v838 = vadd.f32 0.0, %v837
        %v839 = vpop.f32.mrb[0].mxu0
        %v840 = vpop.f32.mrb[0].mxu0
        %v841 = vadd.f32 0.0, %v840
        %v842 = vpop.f32.mrb[0].mxu0
        %843 = vmatprep.mubr.bf16.mxu0 0
        %844 = vmatmul.mubr.bf16.gmra.mrb[0].mxu0 %v795
        %v845 = vpop.f32.mrb[0].mxu0
        %v846 = vadd.f32 0.0, %v845
        %v847 = vpop.f32.mrb[0].mxu0
        %v848 = vpop.f32.mrb[0].mxu0
        %v849 = vadd.f32 0.0, %v848
        %v850 = vpop.f32.mrb[0].mxu0
        %851 = vmatprep.mubr.bf16.mxu0 0
        %852 = vmatmul.mubr.bf16.gmra.mrb[0].mxu0 %v798
        %v853 = vpop.f32.mrb[0].mxu0
        %v854 = vadd.f32 0.0, %v853
        %v855 = vpop.f32.mrb[0].mxu0
        %v856 = vpop.f32.mrb[0].mxu0
        %v857 = vadd.f32 0.0, %v856
        %v858 = vpop.f32.mrb[0].mxu0
        %859 = vmatprep.mubr.bf16.mxu0 0
        %860 = vmatmul.mubr.bf16.gmra.mrb[0].mxu0 %v801
        %v861 = vpop.f32.mrb[0].mxu0
        %v862 = vadd.f32 0.0, %v861
        %v863 = vpop.f32.mrb[0].mxu0
        %v864 = vpop.f32.mrb[0].mxu0
        %v865 = vadd.f32 0.0, %v864
        %v866 = vpop.f32.mrb[0].mxu0
        %867 = vdwg.mxu0
        %v868 = vpack.c.bf16 %v841, %v838
        %v869 = vpack.c.bf16 %v849, %v846
        %v870 = vpack.c.bf16 %v857, %v854
        %v871 = vpack.c.bf16 %v865, %v862
        %v872 = vld [vmem:[%s5] sm:$0xf]
        %v873 = vld [vmem:[%s5 + $0x4] sm:$0xf]
        %v874 = vld [vmem:[%s5 + $0x8] sm:$0xf]
        %v875 = vld [vmem:[%s5 + $0xc] sm:$0xf]
        %s876 = scalar_lea.vmem %s4, 32
        %v877 = vld [vmem:[%s876] sm:$0xf]
        %v878 = vld [vmem:[%s876 + $0x4] sm:$0xf]
        %v879 = vld [vmem:[%s876 + $0x8] sm:$0xf]
        %v880 = vld [vmem:[%s876 + $0xc] sm:$0xf]
        %v881 = vld [vmem:[%s876 + $0x10] sm:$0xf]
        %v882 = vld [vmem:[%s876 + $0x14] sm:$0xf]
        %v883 = vld [vmem:[%s876 + $0x18] sm:$0xf]
        %v884 = vld [vmem:[%s876 + $0x1c] sm:$0xf]
        %v893 = vunpack.c.l.b16 %v877
        %v894 = vunpack.c.l.b16 %v878
        %v895 = vunpack.c.l.b16 %v879
        %v896 = vunpack.c.l.b16 %v880
        %v897 = vunpack.c.l.b16 %v881
        %v898 = vunpack.c.l.b16 %v882
        %v899 = vunpack.c.l.b16 %v883
        %v900 = vunpack.c.l.b16 %v884
        %v901 = vpack.c.b16 %v894, %v893
        %v902 = vpack.c.b16 %v896, %v895
        %v903 = vpack.c.b16 %v898, %v897
        %v904 = vpack.c.b16 %v900, %v899
        %v906 = vsel %vm790, %v901, 0
        %v909 = vsel %vm790, %v902, 0
        %v912 = vsel %vm790, %v903, 0
        %v915 = vsel %vm790, %v904, 0
        %917 = vmatprep.subr.bf16.mxu0 0
        %918 = vmatpush1.bf16.msra.mxu0 %v758
        %919 = vmatprep.subr.bf16.mxu0 0
        %920 = vmatpush1.bf16.msra.mxu0 %v759
        %921 = vmatprep.subr.bf16.mxu0 0
        %922 = vmatpush1.bf16.msra.mxu0 %v760
        %923 = vmatprep.subr.bf16.mxu0 0
        %924 = vmatpush1.bf16.msra.mxu0 %v761
        %925 = vmatprep.subr.bf16.mxu0 0
        %926 = vmatpush1.bf16.msra.mxu0 0
        %927 = vmatprep.subr.bf16.mxu0 0
        %928 = vmatpush1.bf16.msra.mxu0 0
        %929 = vmatprep.subr.bf16.mxu0 0
        %930 = vmatpush1.bf16.msra.mxu0 0
        %931 = vmatprep.subr.bf16.mxu0 0
        %932 = vmatpush1.bf16.msra.mxu0 0
        %933 = vmatprep.subr.bf16.mxu0 0
        %934 = vmatpush1.bf16.msra.mxu0 0
        %935 = vmatprep.subr.bf16.mxu0 0
        %936 = vmatpush1.bf16.msra.mxu0 0
        %937 = vmatprep.subr.bf16.mxu0 0
        %938 = vmatpush1.bf16.msra.mxu0 0
        %939 = vmatprep.subr.bf16.mxu0 0
        %940 = vmatpush1.bf16.msra.mxu0 0
        %941 = vmatprep.subr.bf16.mxu0 0
        %942 = vmatpush1.bf16.msra.mxu0 0
        %943 = vmatprep.subr.bf16.mxu0 0
        %944 = vmatpush1.bf16.msra.mxu0 0
        %945 = vmatprep.subr.bf16.mxu0 0
        %946 = vmatpush1.bf16.msra.mxu0 0
        %947 = vmatprep.subr.bf16.mxu0 0
        %948 = vmatpush1.bf16.msra.mxu0 0
        %949 = vmatprep.mubr.bf16.mxu0 0
        %950 = vmatmul.mubr.bf16.gmra.mrb[0].mxu0 %v906
        %v951 = vpop.f32.mrb[0].mxu0
        %v952 = vadd.f32 0.0, %v951
        %v953 = vpop.f32.mrb[0].mxu0
        %v954 = vpop.f32.mrb[0].mxu0
        %v955 = vadd.f32 0.0, %v954
        %v956 = vpop.f32.mrb[0].mxu0
        %957 = vmatprep.mubr.bf16.mxu0 0
        %958 = vmatmul.mubr.bf16.gmra.mrb[0].mxu0 %v909
        %v959 = vpop.f32.mrb[0].mxu0
        %v960 = vadd.f32 0.0, %v959
        %v961 = vpop.f32.mrb[0].mxu0
        %v962 = vpop.f32.mrb[0].mxu0
        %v963 = vadd.f32 0.0, %v962
        %v964 = vpop.f32.mrb[0].mxu0
        %965 = vmatprep.mubr.bf16.mxu0 0
        %966 = vmatmul.mubr.bf16.gmra.mrb[0].mxu0 %v912
        %v967 = vpop.f32.mrb[0].mxu0
        %v968 = vadd.f32 0.0, %v967
        %v969 = vpop.f32.mrb[0].mxu0
        %v970 = vpop.f32.mrb[0].mxu0
        %v971 = vadd.f32 0.0, %v970
        %v972 = vpop.f32.mrb[0].mxu0
        %973 = vmatprep.mubr.bf16.mxu0 0
        %974 = vmatmul.mubr.bf16.gmra.mrb[0].mxu0 %v915
        %v975 = vpop.f32.mrb[0].mxu0
        %v976 = vadd.f32 0.0, %v975
        %v977 = vpop.f32.mrb[0].mxu0
        %v978 = vpop.f32.mrb[0].mxu0
        %v979 = vadd.f32 0.0, %v978
        %v980 = vpop.f32.mrb[0].mxu0
        %981 = vdwg.mxu0
        %v982 = vpack.c.bf16 %v955, %v952
        %v983 = vpack.c.bf16 %v963, %v960
        %v984 = vpack.c.bf16 %v971, %v968
        %v985 = vpack.c.bf16 %v979, %v976
        %s986 = scalar_lea.vmem %s5, 16
        %v987 = vld [vmem:[%s986] sm:$0xf]
        %v988 = vld [vmem:[%s986 + $0x4] sm:$0xf]
        %v989 = vld [vmem:[%s986 + $0x8] sm:$0xf]
        %v990 = vld [vmem:[%s986 + $0xc] sm:$0xf]
        %v995 = vunpack.c.l.b16 %v987
        %v996 = vunpack.c.l.b16 %v988
        %v997 = vunpack.c.l.b16 %v989
        %v998 = vunpack.c.l.b16 %v990
        %v999 = vpack.c.b16 %v996, %v995
        %v1000 = vpack.c.b16 %v998, %v997
        %v1004 = vsel %vm552, %v982, 0
        %v1007 = vsel %vm552, %v983, 0
        %v1010 = vsel %vm552, %v984, 0
        %v1013 = vsel %vm552, %v985, 0
        %1015 = vmatprep.subr.bf16.mxu0 0
        %1016 = vmatpush1.bf16.msra.mxu0 %v999
        %1017 = vmatprep.subr.bf16.mxu0 0
        %1018 = vmatpush1.bf16.msra.mxu0 %v1000
        %1019 = vmatprep.subr.bf16.mxu0 0
        %1020 = vmatpush1.bf16.msra.mxu0 0
        %1021 = vmatprep.subr.bf16.mxu0 0
        %1022 = vmatpush1.bf16.msra.mxu0 0
        %1023 = vmatprep.subr.bf16.mxu0 0
        %1024 = vmatpush1.bf16.msra.mxu0 0
        %1025 = vmatprep.subr.bf16.mxu0 0
        %1026 = vmatpush1.bf16.msra.mxu0 0
        %1027 = vmatprep.subr.bf16.mxu0 0
        %1028 = vmatpush1.bf16.msra.mxu0 0
        %1029 = vmatprep.subr.bf16.mxu0 0
        %1030 = vmatpush1.bf16.msra.mxu0 0
        %1031 = vmatprep.subr.bf16.mxu0 0
        %1032 = vmatpush1.bf16.msra.mxu0 0
        %1033 = vmatprep.subr.bf16.mxu0 0
        %1034 = vmatpush1.bf16.msra.mxu0 0
        %1035 = vmatprep.subr.bf16.mxu0 0
        %1036 = vmatpush1.bf16.msra.mxu0 0
        %1037 = vmatprep.subr.bf16.mxu0 0
        %1038 = vmatpush1.bf16.msra.mxu0 0
        %1039 = vmatprep.subr.bf16.mxu0 0
        %1040 = vmatpush1.bf16.msra.mxu0 0
        %1041 = vmatprep.subr.bf16.mxu0 0
        %1042 = vmatpush1.bf16.msra.mxu0 0
        %1043 = vmatprep.subr.bf16.mxu0 0
        %1044 = vmatpush1.bf16.msra.mxu0 0
        %1045 = vmatprep.subr.bf16.mxu0 0
        %1046 = vmatpush1.bf16.msra.mxu0 0
        %1047 = vmatprep.mubr.bf16.mxu0 0
        %1048 = vmatmul.mubr.bf16.gmra.mrb[0].mxu0 %v1004
        %v1049 = vpop.f32.mrb[0].mxu0
        %v1050 = vadd.f32 0.0, %v1049
        %v1051 = vpop.f32.mrb[0].mxu0
        %v1052 = vpop.f32.mrb[0].mxu0
        %v1053 = vadd.f32 0.0, %v1052
        %v1054 = vpop.f32.mrb[0].mxu0
        %1055 = vmatprep.mubr.bf16.mxu0 0
        %1056 = vmatmul.mubr.bf16.gmra.mrb[0].mxu0 %v1007
        %v1057 = vpop.f32.mrb[0].mxu0
        %v1058 = vadd.f32 0.0, %v1057
        %v1059 = vpop.f32.mrb[0].mxu0
        %v1060 = vpop.f32.mrb[0].mxu0
        %v1061 = vadd.f32 0.0, %v1060
        %v1062 = vpop.f32.mrb[0].mxu0
        %1063 = vmatprep.mubr.bf16.mxu0 0
        %1064 = vmatmul.mubr.bf16.gmra.mrb[0].mxu0 %v1010
        %v1065 = vpop.f32.mrb[0].mxu0
        %v1066 = vadd.f32 0.0, %v1065
        %v1067 = vpop.f32.mrb[0].mxu0
        %v1068 = vpop.f32.mrb[0].mxu0
        %v1069 = vadd.f32 0.0, %v1068
        %v1070 = vpop.f32.mrb[0].mxu0
        %1071 = vmatprep.mubr.bf16.mxu0 0
        %1072 = vmatmul.mubr.bf16.gmra.mrb[0].mxu0 %v1013
        %v1073 = vpop.f32.mrb[0].mxu0
        %v1074 = vadd.f32 0.0, %v1073
        %v1075 = vpop.f32.mrb[0].mxu0
        %v1076 = vpop.f32.mrb[0].mxu0
        %v1077 = vadd.f32 0.0, %v1076
        %v1078 = vpop.f32.mrb[0].mxu0
        %1079 = vdwg.mxu0
        %v1084 = vunpack.c.l.b16 %v872
        %v1085 = vunpack.c.l.b16 %v873
        %v1086 = vunpack.c.l.b16 %v874
        %v1087 = vunpack.c.l.b16 %v875
        %v1088 = vpack.c.b16 %v1085, %v1084
        %v1089 = vpack.c.b16 %v1087, %v1086
        %v1093 = vsel %vm552, %v868, 0
        %v1096 = vsel %vm552, %v869, 0
        %v1099 = vsel %vm552, %v870, 0
        %v1102 = vsel %vm552, %v871, 0
        %1104 = vmatprep.subr.bf16.mxu0 0
        %1105 = vmatpush1.bf16.msra.mxu0 %v1088
        %1106 = vmatprep.subr.bf16.mxu0 0
        %1107 = vmatpush1.bf16.msra.mxu0 %v1089
        %1108 = vmatprep.subr.bf16.mxu0 0
        %1109 = vmatpush1.bf16.msra.mxu0 0
        %1110 = vmatprep.subr.bf16.mxu0 0
        %1111 = vmatpush1.bf16.msra.mxu0 0
        %1112 = vmatprep.subr.bf16.mxu0 0
        %1113 = vmatpush1.bf16.msra.mxu0 0
        %1114 = vmatprep.subr.bf16.mxu0 0
        %1115 = vmatpush1.bf16.msra.mxu0 0
        %1116 = vmatprep.subr.bf16.mxu0 0
        %1117 = vmatpush1.bf16.msra.mxu0 0
        %1118 = vmatprep.subr.bf16.mxu0 0
        %1119 = vmatpush1.bf16.msra.mxu0 0
        %1120 = vmatprep.subr.bf16.mxu0 0
        %1121 = vmatpush1.bf16.msra.mxu0 0
        %1122 = vmatprep.subr.bf16.mxu0 0
        %1123 = vmatpush1.bf16.msra.mxu0 0
        %1124 = vmatprep.subr.bf16.mxu0 0
        %1125 = vmatpush1.bf16.msra.mxu0 0
        %1126 = vmatprep.subr.bf16.mxu0 0
        %1127 = vmatpush1.bf16.msra.mxu0 0
        %1128 = vmatprep.subr.bf16.mxu0 0
        %1129 = vmatpush1.bf16.msra.mxu0 0
        %1130 = vmatprep.subr.bf16.mxu0 0
        %1131 = vmatpush1.bf16.msra.mxu0 0
        %1132 = vmatprep.subr.bf16.mxu0 0
        %1133 = vmatpush1.bf16.msra.mxu0 0
        %1134 = vmatprep.subr.bf16.mxu0 0
        %1135 = vmatpush1.bf16.msra.mxu0 0
        %1136 = vmatprep.mubr.bf16.mxu0 0
        %1137 = vmatmul.mubr.bf16.gmra.mrb[0].mxu0 %v1093
        %v1138 = vpop.f32.mrb[0].mxu0
        %v1139 = vadd.f32 %v1050, %v1138
        %v1140 = vpop.f32.mrb[0].mxu0
        %v1141 = vpop.f32.mrb[0].mxu0
        %v1142 = vadd.f32 %v1053, %v1141
        %v1143 = vpop.f32.mrb[0].mxu0
        %1144 = vmatprep.mubr.bf16.mxu0 0
        %1145 = vmatmul.mubr.bf16.gmra.mrb[0].mxu0 %v1096
        %v1146 = vpop.f32.mrb[0].mxu0
        %v1147 = vadd.f32 %v1058, %v1146
        %v1148 = vpop.f32.mrb[0].mxu0
        %v1149 = vpop.f32.mrb[0].mxu0
        %v1150 = vadd.f32 %v1061, %v1149
        %v1151 = vpop.f32.mrb[0].mxu0
        %1152 = vmatprep.mubr.bf16.mxu0 0
        %1153 = vmatmul.mubr.bf16.gmra.mrb[0].mxu0 %v1099
        %v1154 = vpop.f32.mrb[0].mxu0
        %v1155 = vadd.f32 %v1066, %v1154
        %v1156 = vpop.f32.mrb[0].mxu0
        %v1157 = vpop.f32.mrb[0].mxu0
        %v1158 = vadd.f32 %v1069, %v1157
        %v1159 = vpop.f32.mrb[0].mxu0
        %1160 = vmatprep.mubr.bf16.mxu0 0
        %1161 = vmatmul.mubr.bf16.gmra.mrb[0].mxu0 %v1102
        %v1162 = vpop.f32.mrb[0].mxu0
        %v1163 = vadd.f32 %v1074, %v1162
        %v1164 = vpop.f32.mrb[0].mxu0
        %v1165 = vpop.f32.mrb[0].mxu0
        %v1166 = vadd.f32 %v1077, %v1165
        %v1167 = vpop.f32.mrb[0].mxu0
        %1168 = vdwg.mxu0
        %s1169 = scalar_lea.vmem %s4, 64
        %v1170 = vld [vmem:[%s1169] sm:$0xf]
        %v1171 = vld [vmem:[%s1169 + $0x4] sm:$0xf]
        %v1172 = vld [vmem:[%s1169 + $0x8] sm:$0xf]
        %v1173 = vld [vmem:[%s1169 + $0xc] sm:$0xf]
        %v1174 = vld [vmem:[%s1169 + $0x10] sm:$0xf]
        %v1175 = vld [vmem:[%s1169 + $0x14] sm:$0xf]
        %v1176 = vld [vmem:[%s1169 + $0x18] sm:$0xf]
        %v1177 = vld [vmem:[%s1169 + $0x1c] sm:$0xf]
        %v1186 = vunpack.c.l.b16 %v1170
        %v1187 = vunpack.c.l.b16 %v1171
        %v1188 = vunpack.c.l.b16 %v1172
        %v1189 = vunpack.c.l.b16 %v1173
        %v1190 = vunpack.c.l.b16 %v1174
        %v1191 = vunpack.c.l.b16 %v1175
        %v1192 = vunpack.c.l.b16 %v1176
        %v1193 = vunpack.c.l.b16 %v1177
        %v1194 = vpack.c.b16 %v1187, %v1186
        %v1195 = vpack.c.b16 %v1189, %v1188
        %v1196 = vpack.c.b16 %v1191, %v1190
        %v1197 = vpack.c.b16 %v1193, %v1192
        %v1199 = vsel %vm790, %v1194, 0
        %v1202 = vsel %vm790, %v1195, 0
        %v1205 = vsel %vm790, %v1196, 0
        %v1208 = vsel %vm790, %v1197, 0
        %1210 = vmatprep.subr.bf16.mxu0 0
        %1211 = vmatpush1.bf16.msra.mxu0 %v758
        %1212 = vmatprep.subr.bf16.mxu0 0
        %1213 = vmatpush1.bf16.msra.mxu0 %v759
        %1214 = vmatprep.subr.bf16.mxu0 0
        %1215 = vmatpush1.bf16.msra.mxu0 %v760
        %1216 = vmatprep.subr.bf16.mxu0 0
        %1217 = vmatpush1.bf16.msra.mxu0 %v761
        %1218 = vmatprep.subr.bf16.mxu0 0
        %1219 = vmatpush1.bf16.msra.mxu0 0
        %1220 = vmatprep.subr.bf16.mxu0 0
        %1221 = vmatpush1.bf16.msra.mxu0 0
        %1222 = vmatprep.subr.bf16.mxu0 0
        %1223 = vmatpush1.bf16.msra.mxu0 0
        %1224 = vmatprep.subr.bf16.mxu0 0
        %1225 = vmatpush1.bf16.msra.mxu0 0
        %1226 = vmatprep.subr.bf16.mxu0 0
        %1227 = vmatpush1.bf16.msra.mxu0 0
        %1228 = vmatprep.subr.bf16.mxu0 0
        %1229 = vmatpush1.bf16.msra.mxu0 0
        %1230 = vmatprep.subr.bf16.mxu0 0
        %1231 = vmatpush1.bf16.msra.mxu0 0
        %1232 = vmatprep.subr.bf16.mxu0 0
        %1233 = vmatpush1.bf16.msra.mxu0 0
        %1234 = vmatprep.subr.bf16.mxu0 0
        %1235 = vmatpush1.bf16.msra.mxu0 0
        %1236 = vmatprep.subr.bf16.mxu0 0
        %1237 = vmatpush1.bf16.msra.mxu0 0
        %1238 = vmatprep.subr.bf16.mxu0 0
        %1239 = vmatpush1.bf16.msra.mxu0 0
        %1240 = vmatprep.subr.bf16.mxu0 0
        %1241 = vmatpush1.bf16.msra.mxu0 0
        %1242 = vmatprep.mubr.bf16.mxu0 0
        %1243 = vmatmul.mubr.bf16.gmra.mrb[0].mxu0 %v1199
        %v1244 = vpop.f32.mrb[0].mxu0
        %v1245 = vadd.f32 0.0, %v1244
        %v1246 = vpop.f32.mrb[0].mxu0
        %v1247 = vpop.f32.mrb[0].mxu0
        %v1248 = vadd.f32 0.0, %v1247
        %v1249 = vpop.f32.mrb[0].mxu0
        %1250 = vmatprep.mubr.bf16.mxu0 0
        %1251 = vmatmul.mubr.bf16.gmra.mrb[0].mxu0 %v1202
        %v1252 = vpop.f32.mrb[0].mxu0
        %v1253 = vadd.f32 0.0, %v1252
        %v1254 = vpop.f32.mrb[0].mxu0
        %v1255 = vpop.f32.mrb[0].mxu0
        %v1256 = vadd.f32 0.0, %v1255
        %v1257 = vpop.f32.mrb[0].mxu0
        %1258 = vmatprep.mubr.bf16.mxu0 0
        %1259 = vmatmul.mubr.bf16.gmra.mrb[0].mxu0 %v1205
        %v1260 = vpop.f32.mrb[0].mxu0
        %v1261 = vadd.f32 0.0, %v1260
        %v1262 = vpop.f32.mrb[0].mxu0
        %v1263 = vpop.f32.mrb[0].mxu0
        %v1264 = vadd.f32 0.0, %v1263
        %v1265 = vpop.f32.mrb[0].mxu0
        %1266 = vmatprep.mubr.bf16.mxu0 0
        %1267 = vmatmul.mubr.bf16.gmra.mrb[0].mxu0 %v1208
        %v1268 = vpop.f32.mrb[0].mxu0
        %v1269 = vadd.f32 0.0, %v1268
        %v1270 = vpop.f32.mrb[0].mxu0
        %v1271 = vpop.f32.mrb[0].mxu0
        %v1272 = vadd.f32 0.0, %v1271
        %v1273 = vpop.f32.mrb[0].mxu0
        %1274 = vdwg.mxu0
        %v1275 = vpack.c.bf16 %v1248, %v1245
        %v1276 = vpack.c.bf16 %v1256, %v1253
        %v1277 = vpack.c.bf16 %v1264, %v1261
        %v1278 = vpack.c.bf16 %v1272, %v1269
        %s1279 = scalar_lea.vmem %s5, 32
        %v1280 = vld [vmem:[%s1279] sm:$0xf]
        %v1281 = vld [vmem:[%s1279 + $0x4] sm:$0xf]
        %v1282 = vld [vmem:[%s1279 + $0x8] sm:$0xf]
        %v1283 = vld [vmem:[%s1279 + $0xc] sm:$0xf]
        %v1288 = vunpack.c.l.b16 %v1280
        %v1289 = vunpack.c.l.b16 %v1281
        %v1290 = vunpack.c.l.b16 %v1282
        %v1291 = vunpack.c.l.b16 %v1283
        %v1292 = vpack.c.b16 %v1289, %v1288
        %v1293 = vpack.c.b16 %v1291, %v1290
        %v1297 = vsel %vm552, %v1275, 0
        %v1300 = vsel %vm552, %v1276, 0
        %v1303 = vsel %vm552, %v1277, 0
        %v1306 = vsel %vm552, %v1278, 0
        %1308 = vmatprep.subr.bf16.mxu0 0
        %1309 = vmatpush1.bf16.msra.mxu0 %v1292
        %1310 = vmatprep.subr.bf16.mxu0 0
        %1311 = vmatpush1.bf16.msra.mxu0 %v1293
        %1312 = vmatprep.subr.bf16.mxu0 0
        %1313 = vmatpush1.bf16.msra.mxu0 0
        %1314 = vmatprep.subr.bf16.mxu0 0
        %1315 = vmatpush1.bf16.msra.mxu0 0
        %1316 = vmatprep.subr.bf16.mxu0 0
        %1317 = vmatpush1.bf16.msra.mxu0 0
        %1318 = vmatprep.subr.bf16.mxu0 0
        %1319 = vmatpush1.bf16.msra.mxu0 0
        %1320 = vmatprep.subr.bf16.mxu0 0
        %1321 = vmatpush1.bf16.msra.mxu0 0
        %1322 = vmatprep.subr.bf16.mxu0 0
        %1323 = vmatpush1.bf16.msra.mxu0 0
        %1324 = vmatprep.subr.bf16.mxu0 0
        %1325 = vmatpush1.bf16.msra.mxu0 0
        %1326 = vmatprep.subr.bf16.mxu0 0
        %1327 = vmatpush1.bf16.msra.mxu0 0
        %1328 = vmatprep.subr.bf16.mxu0 0
        %1329 = vmatpush1.bf16.msra.mxu0 0
        %1330 = vmatprep.subr.bf16.mxu0 0
        %1331 = vmatpush1.bf16.msra.mxu0 0
        %1332 = vmatprep.subr.bf16.mxu0 0
        %1333 = vmatpush1.bf16.msra.mxu0 0
        %1334 = vmatprep.subr.bf16.mxu0 0
        %1335 = vmatpush1.bf16.msra.mxu0 0
        %1336 = vmatprep.subr.bf16.mxu0 0
        %1337 = vmatpush1.bf16.msra.mxu0 0
        %1338 = vmatprep.subr.bf16.mxu0 0
        %1339 = vmatpush1.bf16.msra.mxu0 0
        %1340 = vmatprep.mubr.bf16.mxu0 0
        %1341 = vmatmul.mubr.bf16.gmra.mrb[0].mxu0 %v1297
        %v1342 = vpop.f32.mrb[0].mxu0
        %v1343 = vadd.f32 0.0, %v1342
        %v1344 = vpop.f32.mrb[0].mxu0
        %v1345 = vpop.f32.mrb[0].mxu0
        %v1346 = vadd.f32 0.0, %v1345
        %v1347 = vpop.f32.mrb[0].mxu0
        %1348 = vmatprep.mubr.bf16.mxu0 0
        %1349 = vmatmul.mubr.bf16.gmra.mrb[0].mxu0 %v1300
        %v1350 = vpop.f32.mrb[0].mxu0
        %v1351 = vadd.f32 0.0, %v1350
        %v1352 = vpop.f32.mrb[0].mxu0
        %v1353 = vpop.f32.mrb[0].mxu0
        %v1354 = vadd.f32 0.0, %v1353
        %v1355 = vpop.f32.mrb[0].mxu0
        %1356 = vmatprep.mubr.bf16.mxu0 0
        %1357 = vmatmul.mubr.bf16.gmra.mrb[0].mxu0 %v1303
        %v1358 = vpop.f32.mrb[0].mxu0
        %v1359 = vadd.f32 0.0, %v1358
        %v1360 = vpop.f32.mrb[0].mxu0
        %v1361 = vpop.f32.mrb[0].mxu0
        %v1362 = vadd.f32 0.0, %v1361
        %v1363 = vpop.f32.mrb[0].mxu0
        %1364 = vmatprep.mubr.bf16.mxu0 0
        %1365 = vmatmul.mubr.bf16.gmra.mrb[0].mxu0 %v1306
        %v1366 = vpop.f32.mrb[0].mxu0
        %v1367 = vadd.f32 0.0, %v1366
        %v1368 = vpop.f32.mrb[0].mxu0
        %v1369 = vpop.f32.mrb[0].mxu0
        %v1370 = vadd.f32 0.0, %v1369
        %v1371 = vpop.f32.mrb[0].mxu0
        %1372 = vdwg.mxu0
        %v1373 = vadd.f32 %v1139, %v1343
        %v1374 = vadd.f32 %v1142, %v1346
        %v1375 = vadd.f32 %v1147, %v1351
        %v1376 = vadd.f32 %v1150, %v1354
        %v1377 = vadd.f32 %v1155, %v1359
        %v1378 = vadd.f32 %v1158, %v1362
        %v1379 = vadd.f32 %v1163, %v1367
        %v1380 = vadd.f32 %v1166, %v1370
        %s1381 = scalar_lea.vmem %s4, 96
        %v1382 = vld [vmem:[%s1381] sm:$0xf]
        %v1383 = vld [vmem:[%s1381 + $0x4] sm:$0xf]
        %v1384 = vld [vmem:[%s1381 + $0x8] sm:$0xf]
        %v1385 = vld [vmem:[%s1381 + $0xc] sm:$0xf]
        %v1386 = vld [vmem:[%s1381 + $0x10] sm:$0xf]
        %v1387 = vld [vmem:[%s1381 + $0x14] sm:$0xf]
        %v1388 = vld [vmem:[%s1381 + $0x18] sm:$0xf]
        %v1389 = vld [vmem:[%s1381 + $0x1c] sm:$0xf]
        %v1398 = vunpack.c.l.b16 %v1382
        %v1399 = vunpack.c.l.b16 %v1383
        %v1400 = vunpack.c.l.b16 %v1384
        %v1401 = vunpack.c.l.b16 %v1385
        %v1402 = vunpack.c.l.b16 %v1386
        %v1403 = vunpack.c.l.b16 %v1387
        %v1404 = vunpack.c.l.b16 %v1388
        %v1405 = vunpack.c.l.b16 %v1389
        %v1406 = vpack.c.b16 %v1399, %v1398
        %v1407 = vpack.c.b16 %v1401, %v1400
        %v1408 = vpack.c.b16 %v1403, %v1402
        %v1409 = vpack.c.b16 %v1405, %v1404
        %v1411 = vsel %vm790, %v1406, 0
        %v1414 = vsel %vm790, %v1407, 0
        %v1417 = vsel %vm790, %v1408, 0
        %v1420 = vsel %vm790, %v1409, 0
        %1422 = vmatprep.subr.bf16.mxu0 0
        %1423 = vmatpush1.bf16.msra.mxu0 %v758
        %1424 = vmatprep.subr.bf16.mxu0 0
        %1425 = vmatpush1.bf16.msra.mxu0 %v759
        %1426 = vmatprep.subr.bf16.mxu0 0
        %1427 = vmatpush1.bf16.msra.mxu0 %v760
        %1428 = vmatprep.subr.bf16.mxu0 0
        %1429 = vmatpush1.bf16.msra.mxu0 %v761
        %1430 = vmatprep.subr.bf16.mxu0 0
        %1431 = vmatpush1.bf16.msra.mxu0 0
        %1432 = vmatprep.subr.bf16.mxu0 0
        %1433 = vmatpush1.bf16.msra.mxu0 0
        %1434 = vmatprep.subr.bf16.mxu0 0
        %1435 = vmatpush1.bf16.msra.mxu0 0
        %1436 = vmatprep.subr.bf16.mxu0 0
        %1437 = vmatpush1.bf16.msra.mxu0 0
        %1438 = vmatprep.subr.bf16.mxu0 0
        %1439 = vmatpush1.bf16.msra.mxu0 0
        %1440 = vmatprep.subr.bf16.mxu0 0
        %1441 = vmatpush1.bf16.msra.mxu0 0
        %1442 = vmatprep.subr.bf16.mxu0 0
        %1443 = vmatpush1.bf16.msra.mxu0 0
        %1444 = vmatprep.subr.bf16.mxu0 0
        %1445 = vmatpush1.bf16.msra.mxu0 0
        %1446 = vmatprep.subr.bf16.mxu0 0
        %1447 = vmatpush1.bf16.msra.mxu0 0
        %1448 = vmatprep.subr.bf16.mxu0 0
        %1449 = vmatpush1.bf16.msra.mxu0 0
        %1450 = vmatprep.subr.bf16.mxu0 0
        %1451 = vmatpush1.bf16.msra.mxu0 0
        %1452 = vmatprep.subr.bf16.mxu0 0
        %1453 = vmatpush1.bf16.msra.mxu0 0
        %1454 = vmatprep.mubr.bf16.mxu0 0
        %1455 = vmatmul.mubr.bf16.gmra.mrb[0].mxu0 %v1411
        %v1456 = vpop.f32.mrb[0].mxu0
        %v1457 = vadd.f32 0.0, %v1456
        %v1458 = vpop.f32.mrb[0].mxu0
        %v1459 = vpop.f32.mrb[0].mxu0
        %v1460 = vadd.f32 0.0, %v1459
        %v1461 = vpop.f32.mrb[0].mxu0
        %1462 = vmatprep.mubr.bf16.mxu0 0
        %1463 = vmatmul.mubr.bf16.gmra.mrb[0].mxu0 %v1414
        %v1464 = vpop.f32.mrb[0].mxu0
        %v1465 = vadd.f32 0.0, %v1464
        %v1466 = vpop.f32.mrb[0].mxu0
        %v1467 = vpop.f32.mrb[0].mxu0
        %v1468 = vadd.f32 0.0, %v1467
        %v1469 = vpop.f32.mrb[0].mxu0
        %1470 = vmatprep.mubr.bf16.mxu0 0
        %1471 = vmatmul.mubr.bf16.gmra.mrb[0].mxu0 %v1417
        %v1472 = vpop.f32.mrb[0].mxu0
        %v1473 = vadd.f32 0.0, %v1472
        %v1474 = vpop.f32.mrb[0].mxu0
        %v1475 = vpop.f32.mrb[0].mxu0
        %v1476 = vadd.f32 0.0, %v1475
        %v1477 = vpop.f32.mrb[0].mxu0
        %1478 = vmatprep.mubr.bf16.mxu0 0
        %1479 = vmatmul.mubr.bf16.gmra.mrb[0].mxu0 %v1420
        %v1480 = vpop.f32.mrb[0].mxu0
        %v1481 = vadd.f32 0.0, %v1480
        %v1482 = vpop.f32.mrb[0].mxu0
        %v1483 = vpop.f32.mrb[0].mxu0
        %v1484 = vadd.f32 0.0, %v1483
        %v1485 = vpop.f32.mrb[0].mxu0
        %1486 = vdwg.mxu0
        %v1487 = vpack.c.bf16 %v1460, %v1457
        %v1488 = vpack.c.bf16 %v1468, %v1465
        %v1489 = vpack.c.bf16 %v1476, %v1473
        %v1490 = vpack.c.bf16 %v1484, %v1481
        %s1491 = scalar_lea.vmem %s5, 48
        %v1492 = vld [vmem:[%s1491] sm:$0xf]
        %v1493 = vld [vmem:[%s1491 + $0x4] sm:$0xf]
        %v1494 = vld [vmem:[%s1491 + $0x8] sm:$0xf]
        %v1495 = vld [vmem:[%s1491 + $0xc] sm:$0xf]
        %v1500 = vunpack.c.l.b16 %v1492
        %v1501 = vunpack.c.l.b16 %v1493
        %v1502 = vunpack.c.l.b16 %v1494
        %v1503 = vunpack.c.l.b16 %v1495
        %v1504 = vpack.c.b16 %v1501, %v1500
        %v1505 = vpack.c.b16 %v1503, %v1502
        %v1509 = vsel %vm552, %v1487, 0
        %v1512 = vsel %vm552, %v1488, 0
        %v1515 = vsel %vm552, %v1489, 0
        %v1518 = vsel %vm552, %v1490, 0
        %1520 = vmatprep.subr.bf16.mxu0 0
        %1521 = vmatpush1.bf16.msra.mxu0 %v1504
        %1522 = vmatprep.subr.bf16.mxu0 0
        %1523 = vmatpush1.bf16.msra.mxu0 %v1505
        %1524 = vmatprep.subr.bf16.mxu0 0
        %1525 = vmatpush1.bf16.msra.mxu0 0
        %1526 = vmatprep.subr.bf16.mxu0 0
        %1527 = vmatpush1.bf16.msra.mxu0 0
        %1528 = vmatprep.subr.bf16.mxu0 0
        %1529 = vmatpush1.bf16.msra.mxu0 0
        %1530 = vmatprep.subr.bf16.mxu0 0
        %1531 = vmatpush1.bf16.msra.mxu0 0
        %1532 = vmatprep.subr.bf16.mxu0 0
        %1533 = vmatpush1.bf16.msra.mxu0 0
        %1534 = vmatprep.subr.bf16.mxu0 0
        %1535 = vmatpush1.bf16.msra.mxu0 0
        %1536 = vmatprep.subr.bf16.mxu0 0
        %1537 = vmatpush1.bf16.msra.mxu0 0
        %1538 = vmatprep.subr.bf16.mxu0 0
        %1539 = vmatpush1.bf16.msra.mxu0 0
        %1540 = vmatprep.subr.bf16.mxu0 0
        %1541 = vmatpush1.bf16.msra.mxu0 0
        %1542 = vmatprep.subr.bf16.mxu0 0
        %1543 = vmatpush1.bf16.msra.mxu0 0
        %1544 = vmatprep.subr.bf16.mxu0 0
        %1545 = vmatpush1.bf16.msra.mxu0 0
        %1546 = vmatprep.subr.bf16.mxu0 0
        %1547 = vmatpush1.bf16.msra.mxu0 0
        %1548 = vmatprep.subr.bf16.mxu0 0
        %1549 = vmatpush1.bf16.msra.mxu0 0
        %1550 = vmatprep.subr.bf16.mxu0 0
        %1551 = vmatpush1.bf16.msra.mxu0 0
        %1552 = vmatprep.mubr.bf16.mxu0 0
        %1553 = vmatmul.mubr.bf16.gmra.mrb[0].mxu0 %v1509
        %v1554 = vpop.f32.mrb[0].mxu0
        %v1555 = vadd.f32 0.0, %v1554
        %v1556 = vpop.f32.mrb[0].mxu0
        %v1557 = vpop.f32.mrb[0].mxu0
        %v1558 = vadd.f32 0.0, %v1557
        %v1559 = vpop.f32.mrb[0].mxu0
        %1560 = vmatprep.mubr.bf16.mxu0 0
        %1561 = vmatmul.mubr.bf16.gmra.mrb[0].mxu0 %v1512
        %v1562 = vpop.f32.mrb[0].mxu0
        %v1563 = vadd.f32 0.0, %v1562
        %v1564 = vpop.f32.mrb[0].mxu0
        %v1565 = vpop.f32.mrb[0].mxu0
        %v1566 = vadd.f32 0.0, %v1565
        %v1567 = vpop.f32.mrb[0].mxu0
        %1568 = vmatprep.mubr.bf16.mxu0 0
        %1569 = vmatmul.mubr.bf16.gmra.mrb[0].mxu0 %v1515
        %v1570 = vpop.f32.mrb[0].mxu0
        %v1571 = vadd.f32 0.0, %v1570
        %v1572 = vpop.f32.mrb[0].mxu0
        %v1573 = vpop.f32.mrb[0].mxu0
        %v1574 = vadd.f32 0.0, %v1573
        %v1575 = vpop.f32.mrb[0].mxu0
        %1576 = vmatprep.mubr.bf16.mxu0 0
        %1577 = vmatmul.mubr.bf16.gmra.mrb[0].mxu0 %v1518
        %v1578 = vpop.f32.mrb[0].mxu0
        %v1579 = vadd.f32 0.0, %v1578
        %v1580 = vpop.f32.mrb[0].mxu0
        %v1581 = vpop.f32.mrb[0].mxu0
        %v1582 = vadd.f32 0.0, %v1581
        %v1583 = vpop.f32.mrb[0].mxu0
        %1584 = vdwg.mxu0
        %v1585 = vadd.f32 %v1373, %v1555
        %v1586 = vadd.f32 %v1374, %v1558
        %v1587 = vadd.f32 %v1375, %v1563
        %v1588 = vadd.f32 %v1376, %v1566
        %v1589 = vadd.f32 %v1377, %v1571
        %v1590 = vadd.f32 %v1378, %v1574
        %v1591 = vadd.f32 %v1379, %v1579
        %v1592 = vadd.f32 %v1380, %v1582
        %s1593 = scalar_lea.vmem %s4, 128
        %v1594 = vld [vmem:[%s1593] sm:$0xf]
        %v1595 = vld [vmem:[%s1593 + $0x4] sm:$0xf]
        %v1596 = vld [vmem:[%s1593 + $0x8] sm:$0xf]
        %v1597 = vld [vmem:[%s1593 + $0xc] sm:$0xf]
        %v1598 = vld [vmem:[%s1593 + $0x10] sm:$0xf]
        %v1599 = vld [vmem:[%s1593 + $0x14] sm:$0xf]
        %v1600 = vld [vmem:[%s1593 + $0x18] sm:$0xf]
        %v1601 = vld [vmem:[%s1593 + $0x1c] sm:$0xf]
        %v1610 = vunpack.c.l.b16 %v1594
        %v1611 = vunpack.c.l.b16 %v1595
        %v1612 = vunpack.c.l.b16 %v1596
        %v1613 = vunpack.c.l.b16 %v1597
        %v1614 = vunpack.c.l.b16 %v1598
        %v1615 = vunpack.c.l.b16 %v1599
        %v1616 = vunpack.c.l.b16 %v1600
        %v1617 = vunpack.c.l.b16 %v1601
        %v1618 = vpack.c.b16 %v1611, %v1610
        %v1619 = vpack.c.b16 %v1613, %v1612
        %v1620 = vpack.c.b16 %v1615, %v1614
        %v1621 = vpack.c.b16 %v1617, %v1616
        %v1623 = vsel %vm790, %v1618, 0
        %v1626 = vsel %vm790, %v1619, 0
        %v1629 = vsel %vm790, %v1620, 0
        %v1632 = vsel %vm790, %v1621, 0
        %1634 = vmatprep.subr.bf16.mxu0 0
        %1635 = vmatpush1.bf16.msra.mxu0 %v758
        %1636 = vmatprep.subr.bf16.mxu0 0
        %1637 = vmatpush1.bf16.msra.mxu0 %v759
        %1638 = vmatprep.subr.bf16.mxu0 0
        %1639 = vmatpush1.bf16.msra.mxu0 %v760
        %1640 = vmatprep.subr.bf16.mxu0 0
        %1641 = vmatpush1.bf16.msra.mxu0 %v761
        %1642 = vmatprep.subr.bf16.mxu0 0
        %1643 = vmatpush1.bf16.msra.mxu0 0
        %1644 = vmatprep.subr.bf16.mxu0 0
        %1645 = vmatpush1.bf16.msra.mxu0 0
        %1646 = vmatprep.subr.bf16.mxu0 0
        %1647 = vmatpush1.bf16.msra.mxu0 0
        %1648 = vmatprep.subr.bf16.mxu0 0
        %1649 = vmatpush1.bf16.msra.mxu0 0
        %1650 = vmatprep.subr.bf16.mxu0 0
        %1651 = vmatpush1.bf16.msra.mxu0 0
        %1652 = vmatprep.subr.bf16.mxu0 0
        %1653 = vmatpush1.bf16.msra.mxu0 0
        %1654 = vmatprep.subr.bf16.mxu0 0
        %1655 = vmatpush1.bf16.msra.mxu0 0
        %1656 = vmatprep.subr.bf16.mxu0 0
        %1657 = vmatpush1.bf16.msra.mxu0 0
        %1658 = vmatprep.subr.bf16.mxu0 0
        %1659 = vmatpush1.bf16.msra.mxu0 0
        %1660 = vmatprep.subr.bf16.mxu0 0
        %1661 = vmatpush1.bf16.msra.mxu0 0
        %1662 = vmatprep.subr.bf16.mxu0 0
        %1663 = vmatpush1.bf16.msra.mxu0 0
        %1664 = vmatprep.subr.bf16.mxu0 0
        %1665 = vmatpush1.bf16.msra.mxu0 0
        %1666 = vmatprep.mubr.bf16.mxu0 0
        %1667 = vmatmul.mubr.bf16.gmra.mrb[0].mxu0 %v1623
        %v1668 = vpop.f32.mrb[0].mxu0
        %v1669 = vadd.f32 0.0, %v1668
        %v1670 = vpop.f32.mrb[0].mxu0
        %v1671 = vpop.f32.mrb[0].mxu0
        %v1672 = vadd.f32 0.0, %v1671
        %v1673 = vpop.f32.mrb[0].mxu0
        %1674 = vmatprep.mubr.bf16.mxu0 0
        %1675 = vmatmul.mubr.bf16.gmra.mrb[0].mxu0 %v1626
        %v1676 = vpop.f32.mrb[0].mxu0
        %v1677 = vadd.f32 0.0, %v1676
        %v1678 = vpop.f32.mrb[0].mxu0
        %v1679 = vpop.f32.mrb[0].mxu0
        %v1680 = vadd.f32 0.0, %v1679
        %v1681 = vpop.f32.mrb[0].mxu0
        %1682 = vmatprep.mubr.bf16.mxu0 0
        %1683 = vmatmul.mubr.bf16.gmra.mrb[0].mxu0 %v1629
        %v1684 = vpop.f32.mrb[0].mxu0
        %v1685 = vadd.f32 0.0, %v1684
        %v1686 = vpop.f32.mrb[0].mxu0
        %v1687 = vpop.f32.mrb[0].mxu0
        %v1688 = vadd.f32 0.0, %v1687
        %v1689 = vpop.f32.mrb[0].mxu0
        %1690 = vmatprep.mubr.bf16.mxu0 0
        %1691 = vmatmul.mubr.bf16.gmra.mrb[0].mxu0 %v1632
        %v1692 = vpop.f32.mrb[0].mxu0
        %v1693 = vadd.f32 0.0, %v1692
        %v1694 = vpop.f32.mrb[0].mxu0
        %v1695 = vpop.f32.mrb[0].mxu0
        %v1696 = vadd.f32 0.0, %v1695
        %v1697 = vpop.f32.mrb[0].mxu0
        %1698 = vdwg.mxu0
        %v1699 = vpack.c.bf16 %v1672, %v1669
        %v1700 = vpack.c.bf16 %v1680, %v1677
        %v1701 = vpack.c.bf16 %v1688, %v1685
        %v1702 = vpack.c.bf16 %v1696, %v1693
        %s1703 = scalar_lea.vmem %s5, 64
        %v1704 = vld [vmem:[%s1703] sm:$0xf]
        %v1705 = vld [vmem:[%s1703 + $0x4] sm:$0xf]
        %v1706 = vld [vmem:[%s1703 + $0x8] sm:$0xf]
        %v1707 = vld [vmem:[%s1703 + $0xc] sm:$0xf]
        %v1712 = vunpack.c.l.b16 %v1704
        %v1713 = vunpack.c.l.b16 %v1705
        %v1714 = vunpack.c.l.b16 %v1706
        %v1715 = vunpack.c.l.b16 %v1707
        %v1716 = vpack.c.b16 %v1713, %v1712
        %v1717 = vpack.c.b16 %v1715, %v1714
        %v1721 = vsel %vm552, %v1699, 0
        %v1724 = vsel %vm552, %v1700, 0
        %v1727 = vsel %vm552, %v1701, 0
        %v1730 = vsel %vm552, %v1702, 0
        %1732 = vmatprep.subr.bf16.mxu0 0
        %1733 = vmatpush1.bf16.msra.mxu0 %v1716
        %1734 = vmatprep.subr.bf16.mxu0 0
        %1735 = vmatpush1.bf16.msra.mxu0 %v1717
        %1736 = vmatprep.subr.bf16.mxu0 0
        %1737 = vmatpush1.bf16.msra.mxu0 0
        %1738 = vmatprep.subr.bf16.mxu0 0
        %1739 = vmatpush1.bf16.msra.mxu0 0
        %1740 = vmatprep.subr.bf16.mxu0 0
        %1741 = vmatpush1.bf16.msra.mxu0 0
        %1742 = vmatprep.subr.bf16.mxu0 0
        %1743 = vmatpush1.bf16.msra.mxu0 0
        %1744 = vmatprep.subr.bf16.mxu0 0
        %1745 = vmatpush1.bf16.msra.mxu0 0
        %1746 = vmatprep.subr.bf16.mxu0 0
        %1747 = vmatpush1.bf16.msra.mxu0 0
        %1748 = vmatprep.subr.bf16.mxu0 0
        %1749 = vmatpush1.bf16.msra.mxu0 0
        %1750 = vmatprep.subr.bf16.mxu0 0
        %1751 = vmatpush1.bf16.msra.mxu0 0
        %1752 = vmatprep.subr.bf16.mxu0 0
        %1753 = vmatpush1.bf16.msra.mxu0 0
        %1754 = vmatprep.subr.bf16.mxu0 0
        %1755 = vmatpush1.bf16.msra.mxu0 0
        %1756 = vmatprep.subr.bf16.mxu0 0
        %1757 = vmatpush1.bf16.msra.mxu0 0
        %1758 = vmatprep.subr.bf16.mxu0 0
        %1759 = vmatpush1.bf16.msra.mxu0 0
        %1760 = vmatprep.subr.bf16.mxu0 0
        %1761 = vmatpush1.bf16.msra.mxu0 0
        %1762 = vmatprep.subr.bf16.mxu0 0
        %1763 = vmatpush1.bf16.msra.mxu0 0
        %1764 = vmatprep.mubr.bf16.mxu0 0
        %1765 = vmatmul.mubr.bf16.gmra.mrb[0].mxu0 %v1721
        %v1766 = vpop.f32.mrb[0].mxu0
        %v1767 = vadd.f32 0.0, %v1766
        %v1768 = vpop.f32.mrb[0].mxu0
        %v1769 = vpop.f32.mrb[0].mxu0
        %v1770 = vadd.f32 0.0, %v1769
        %v1771 = vpop.f32.mrb[0].mxu0
        %1772 = vmatprep.mubr.bf16.mxu0 0
        %1773 = vmatmul.mubr.bf16.gmra.mrb[0].mxu0 %v1724
        %v1774 = vpop.f32.mrb[0].mxu0
        %v1775 = vadd.f32 0.0, %v1774
        %v1776 = vpop.f32.mrb[0].mxu0
        %v1777 = vpop.f32.mrb[0].mxu0
        %v1778 = vadd.f32 0.0, %v1777
        %v1779 = vpop.f32.mrb[0].mxu0
        %1780 = vmatprep.mubr.bf16.mxu0 0
        %1781 = vmatmul.mubr.bf16.gmra.mrb[0].mxu0 %v1727
        %v1782 = vpop.f32.mrb[0].mxu0
        %v1783 = vadd.f32 0.0, %v1782
        %v1784 = vpop.f32.mrb[0].mxu0
        %v1785 = vpop.f32.mrb[0].mxu0
        %v1786 = vadd.f32 0.0, %v1785
        %v1787 = vpop.f32.mrb[0].mxu0
        %1788 = vmatprep.mubr.bf16.mxu0 0
        %1789 = vmatmul.mubr.bf16.gmra.mrb[0].mxu0 %v1730
        %v1790 = vpop.f32.mrb[0].mxu0
        %v1791 = vadd.f32 0.0, %v1790
        %v1792 = vpop.f32.mrb[0].mxu0
        %v1793 = vpop.f32.mrb[0].mxu0
        %v1794 = vadd.f32 0.0, %v1793
        %v1795 = vpop.f32.mrb[0].mxu0
        %1796 = vdwg.mxu0
        %v1797 = vadd.f32 %v1585, %v1767
        %v1798 = vadd.f32 %v1586, %v1770
        %v1799 = vadd.f32 %v1587, %v1775
        %v1800 = vadd.f32 %v1588, %v1778
        %v1801 = vadd.f32 %v1589, %v1783
        %v1802 = vadd.f32 %v1590, %v1786
        %v1803 = vadd.f32 %v1591, %v1791
        %v1804 = vadd.f32 %v1592, %v1794
        %s1805 = scalar_lea.vmem %s4, 160
        %v1806 = vld [vmem:[%s1805] sm:$0xf]
        %v1807 = vld [vmem:[%s1805 + $0x4] sm:$0xf]
        %v1808 = vld [vmem:[%s1805 + $0x8] sm:$0xf]
        %v1809 = vld [vmem:[%s1805 + $0xc] sm:$0xf]
        %v1810 = vld [vmem:[%s1805 + $0x10] sm:$0xf]
        %v1811 = vld [vmem:[%s1805 + $0x14] sm:$0xf]
        %v1812 = vld [vmem:[%s1805 + $0x18] sm:$0xf]
        %v1813 = vld [vmem:[%s1805 + $0x1c] sm:$0xf]
        %v1822 = vunpack.c.l.b16 %v1806
        %v1823 = vunpack.c.l.b16 %v1807
        %v1824 = vunpack.c.l.b16 %v1808
        %v1825 = vunpack.c.l.b16 %v1809
        %v1826 = vunpack.c.l.b16 %v1810
        %v1827 = vunpack.c.l.b16 %v1811
        %v1828 = vunpack.c.l.b16 %v1812
        %v1829 = vunpack.c.l.b16 %v1813
        %v1830 = vpack.c.b16 %v1823, %v1822
        %v1831 = vpack.c.b16 %v1825, %v1824
        %v1832 = vpack.c.b16 %v1827, %v1826
        %v1833 = vpack.c.b16 %v1829, %v1828
        %v1835 = vsel %vm790, %v1830, 0
        %v1838 = vsel %vm790, %v1831, 0
        %v1841 = vsel %vm790, %v1832, 0
        %v1844 = vsel %vm790, %v1833, 0
        %1846 = vmatprep.subr.bf16.mxu0 0
        %1847 = vmatpush1.bf16.msra.mxu0 %v758
        %1848 = vmatprep.subr.bf16.mxu0 0
        %1849 = vmatpush1.bf16.msra.mxu0 %v759
        %1850 = vmatprep.subr.bf16.mxu0 0
        %1851 = vmatpush1.bf16.msra.mxu0 %v760
        %1852 = vmatprep.subr.bf16.mxu0 0
        %1853 = vmatpush1.bf16.msra.mxu0 %v761
        %1854 = vmatprep.subr.bf16.mxu0 0
        %1855 = vmatpush1.bf16.msra.mxu0 0
        %1856 = vmatprep.subr.bf16.mxu0 0
        %1857 = vmatpush1.bf16.msra.mxu0 0
        %1858 = vmatprep.subr.bf16.mxu0 0
        %1859 = vmatpush1.bf16.msra.mxu0 0
        %1860 = vmatprep.subr.bf16.mxu0 0
        %1861 = vmatpush1.bf16.msra.mxu0 0
        %1862 = vmatprep.subr.bf16.mxu0 0
        %1863 = vmatpush1.bf16.msra.mxu0 0
        %1864 = vmatprep.subr.bf16.mxu0 0
        %1865 = vmatpush1.bf16.msra.mxu0 0
        %1866 = vmatprep.subr.bf16.mxu0 0
        %1867 = vmatpush1.bf16.msra.mxu0 0
        %1868 = vmatprep.subr.bf16.mxu0 0
        %1869 = vmatpush1.bf16.msra.mxu0 0
        %1870 = vmatprep.subr.bf16.mxu0 0
        %1871 = vmatpush1.bf16.msra.mxu0 0
        %1872 = vmatprep.subr.bf16.mxu0 0
        %1873 = vmatpush1.bf16.msra.mxu0 0
        %1874 = vmatprep.subr.bf16.mxu0 0
        %1875 = vmatpush1.bf16.msra.mxu0 0
        %1876 = vmatprep.subr.bf16.mxu0 0
        %1877 = vmatpush1.bf16.msra.mxu0 0
        %1878 = vmatprep.mubr.bf16.mxu0 0
        %1879 = vmatmul.mubr.bf16.gmra.mrb[0].mxu0 %v1835
        %v1880 = vpop.f32.mrb[0].mxu0
        %v1881 = vadd.f32 0.0, %v1880
        %v1882 = vpop.f32.mrb[0].mxu0
        %v1883 = vpop.f32.mrb[0].mxu0
        %v1884 = vadd.f32 0.0, %v1883
        %v1885 = vpop.f32.mrb[0].mxu0
        %1886 = vmatprep.mubr.bf16.mxu0 0
        %1887 = vmatmul.mubr.bf16.gmra.mrb[0].mxu0 %v1838
        %v1888 = vpop.f32.mrb[0].mxu0
        %v1889 = vadd.f32 0.0, %v1888
        %v1890 = vpop.f32.mrb[0].mxu0
        %v1891 = vpop.f32.mrb[0].mxu0
        %v1892 = vadd.f32 0.0, %v1891
        %v1893 = vpop.f32.mrb[0].mxu0
        %1894 = vmatprep.mubr.bf16.mxu0 0
        %1895 = vmatmul.mubr.bf16.gmra.mrb[0].mxu0 %v1841
        %v1896 = vpop.f32.mrb[0].mxu0
        %v1897 = vadd.f32 0.0, %v1896
        %v1898 = vpop.f32.mrb[0].mxu0
        %v1899 = vpop.f32.mrb[0].mxu0
        %v1900 = vadd.f32 0.0, %v1899
        %v1901 = vpop.f32.mrb[0].mxu0
        %1902 = vmatprep.mubr.bf16.mxu0 0
        %1903 = vmatmul.mubr.bf16.gmra.mrb[0].mxu0 %v1844
        %v1904 = vpop.f32.mrb[0].mxu0
        %v1905 = vadd.f32 0.0, %v1904
        %v1906 = vpop.f32.mrb[0].mxu0
        %v1907 = vpop.f32.mrb[0].mxu0
        %v1908 = vadd.f32 0.0, %v1907
        %v1909 = vpop.f32.mrb[0].mxu0
        %1910 = vdwg.mxu0
        %v1911 = vpack.c.bf16 %v1884, %v1881
        %v1912 = vpack.c.bf16 %v1892, %v1889
        %v1913 = vpack.c.bf16 %v1900, %v1897
        %v1914 = vpack.c.bf16 %v1908, %v1905
        %s1915 = scalar_lea.vmem %s5, 80
        %v1916 = vld [vmem:[%s1915] sm:$0xf]
        %v1917 = vld [vmem:[%s1915 + $0x4] sm:$0xf]
        %v1918 = vld [vmem:[%s1915 + $0x8] sm:$0xf]
        %v1919 = vld [vmem:[%s1915 + $0xc] sm:$0xf]
        %v1924 = vunpack.c.l.b16 %v1916
        %v1925 = vunpack.c.l.b16 %v1917
        %v1926 = vunpack.c.l.b16 %v1918
        %v1927 = vunpack.c.l.b16 %v1919
        %v1928 = vpack.c.b16 %v1925, %v1924
        %v1929 = vpack.c.b16 %v1927, %v1926
        %v1933 = vsel %vm552, %v1911, 0
        %v1936 = vsel %vm552, %v1912, 0
        %v1939 = vsel %vm552, %v1913, 0
        %v1942 = vsel %vm552, %v1914, 0
        %1944 = vmatprep.subr.bf16.mxu0 0
        %1945 = vmatpush1.bf16.msra.mxu0 %v1928
        %1946 = vmatprep.subr.bf16.mxu0 0
        %1947 = vmatpush1.bf16.msra.mxu0 %v1929
        %1948 = vmatprep.subr.bf16.mxu0 0
        %1949 = vmatpush1.bf16.msra.mxu0 0
        %1950 = vmatprep.subr.bf16.mxu0 0
        %1951 = vmatpush1.bf16.msra.mxu0 0
        %1952 = vmatprep.subr.bf16.mxu0 0
        %1953 = vmatpush1.bf16.msra.mxu0 0
        %1954 = vmatprep.subr.bf16.mxu0 0
        %1955 = vmatpush1.bf16.msra.mxu0 0
        %1956 = vmatprep.subr.bf16.mxu0 0
        %1957 = vmatpush1.bf16.msra.mxu0 0
        %1958 = vmatprep.subr.bf16.mxu0 0
        %1959 = vmatpush1.bf16.msra.mxu0 0
        %1960 = vmatprep.subr.bf16.mxu0 0
        %1961 = vmatpush1.bf16.msra.mxu0 0
        %1962 = vmatprep.subr.bf16.mxu0 0
        %1963 = vmatpush1.bf16.msra.mxu0 0
        %1964 = vmatprep.subr.bf16.mxu0 0
        %1965 = vmatpush1.bf16.msra.mxu0 0
        %1966 = vmatprep.subr.bf16.mxu0 0
        %1967 = vmatpush1.bf16.msra.mxu0 0
        %1968 = vmatprep.subr.bf16.mxu0 0
        %1969 = vmatpush1.bf16.msra.mxu0 0
        %1970 = vmatprep.subr.bf16.mxu0 0
        %1971 = vmatpush1.bf16.msra.mxu0 0
        %1972 = vmatprep.subr.bf16.mxu0 0
        %1973 = vmatpush1.bf16.msra.mxu0 0
        %1974 = vmatprep.subr.bf16.mxu0 0
        %1975 = vmatpush1.bf16.msra.mxu0 0
        %1976 = vmatprep.mubr.bf16.mxu0 0
        %1977 = vmatmul.mubr.bf16.gmra.mrb[0].mxu0 %v1933
        %v1978 = vpop.f32.mrb[0].mxu0
        %v1979 = vadd.f32 0.0, %v1978
        %v1980 = vpop.f32.mrb[0].mxu0
        %v1981 = vpop.f32.mrb[0].mxu0
        %v1982 = vadd.f32 0.0, %v1981
        %v1983 = vpop.f32.mrb[0].mxu0
        %1984 = vmatprep.mubr.bf16.mxu0 0
        %1985 = vmatmul.mubr.bf16.gmra.mrb[0].mxu0 %v1936
        %v1986 = vpop.f32.mrb[0].mxu0
        %v1987 = vadd.f32 0.0, %v1986
        %v1988 = vpop.f32.mrb[0].mxu0
        %v1989 = vpop.f32.mrb[0].mxu0
        %v1990 = vadd.f32 0.0, %v1989
        %v1991 = vpop.f32.mrb[0].mxu0
        %1992 = vmatprep.mubr.bf16.mxu0 0
        %1993 = vmatmul.mubr.bf16.gmra.mrb[0].mxu0 %v1939
        %v1994 = vpop.f32.mrb[0].mxu0
        %v1995 = vadd.f32 0.0, %v1994
        %v1996 = vpop.f32.mrb[0].mxu0
        %v1997 = vpop.f32.mrb[0].mxu0
        %v1998 = vadd.f32 0.0, %v1997
        %v1999 = vpop.f32.mrb[0].mxu0
        %2000 = vmatprep.mubr.bf16.mxu0 0
        %2001 = vmatmul.mubr.bf16.gmra.mrb[0].mxu0 %v1942
        %v2002 = vpop.f32.mrb[0].mxu0
        %v2003 = vadd.f32 0.0, %v2002
        %v2004 = vpop.f32.mrb[0].mxu0
        %v2005 = vpop.f32.mrb[0].mxu0
        %v2006 = vadd.f32 0.0, %v2005
        %v2007 = vpop.f32.mrb[0].mxu0
        %2008 = vdwg.mxu0
        %v2009 = vadd.f32 %v1797, %v1979
        %v2010 = vadd.f32 %v1798, %v1982
        %v2011 = vadd.f32 %v1799, %v1987
        %v2012 = vadd.f32 %v1800, %v1990
        %v2013 = vadd.f32 %v1801, %v1995
        %v2014 = vadd.f32 %v1802, %v1998
        %v2015 = vadd.f32 %v1803, %v2003
        %v2016 = vadd.f32 %v1804, %v2006
        %s2017 = scalar_lea.vmem %s4, 192
        %v2018 = vld [vmem:[%s2017] sm:$0xf]
        %v2019 = vld [vmem:[%s2017 + $0x4] sm:$0xf]
        %v2020 = vld [vmem:[%s2017 + $0x8] sm:$0xf]
        %v2021 = vld [vmem:[%s2017 + $0xc] sm:$0xf]
        %v2022 = vld [vmem:[%s2017 + $0x10] sm:$0xf]
        %v2023 = vld [vmem:[%s2017 + $0x14] sm:$0xf]
        %v2024 = vld [vmem:[%s2017 + $0x18] sm:$0xf]
        %v2025 = vld [vmem:[%s2017 + $0x1c] sm:$0xf]
        %v2034 = vunpack.c.l.b16 %v2018
        %v2035 = vunpack.c.l.b16 %v2019
        %v2036 = vunpack.c.l.b16 %v2020
        %v2037 = vunpack.c.l.b16 %v2021
        %v2038 = vunpack.c.l.b16 %v2022
        %v2039 = vunpack.c.l.b16 %v2023
        %v2040 = vunpack.c.l.b16 %v2024
        %v2041 = vunpack.c.l.b16 %v2025
        %v2042 = vpack.c.b16 %v2035, %v2034
        %v2043 = vpack.c.b16 %v2037, %v2036
        %v2044 = vpack.c.b16 %v2039, %v2038
        %v2045 = vpack.c.b16 %v2041, %v2040
        %v2047 = vsel %vm790, %v2042, 0
        %v2050 = vsel %vm790, %v2043, 0
        %v2053 = vsel %vm790, %v2044, 0
        %v2056 = vsel %vm790, %v2045, 0
        %2058 = vmatprep.subr.bf16.mxu0 0
        %2059 = vmatpush1.bf16.msra.mxu0 %v758
        %2060 = vmatprep.subr.bf16.mxu0 0
        %2061 = vmatpush1.bf16.msra.mxu0 %v759
        %2062 = vmatprep.subr.bf16.mxu0 0
        %2063 = vmatpush1.bf16.msra.mxu0 %v760
        %2064 = vmatprep.subr.bf16.mxu0 0
        %2065 = vmatpush1.bf16.msra.mxu0 %v761
        %2066 = vmatprep.subr.bf16.mxu0 0
        %2067 = vmatpush1.bf16.msra.mxu0 0
        %2068 = vmatprep.subr.bf16.mxu0 0
        %2069 = vmatpush1.bf16.msra.mxu0 0
        %2070 = vmatprep.subr.bf16.mxu0 0
        %2071 = vmatpush1.bf16.msra.mxu0 0
        %2072 = vmatprep.subr.bf16.mxu0 0
        %2073 = vmatpush1.bf16.msra.mxu0 0
        %2074 = vmatprep.subr.bf16.mxu0 0
        %2075 = vmatpush1.bf16.msra.mxu0 0
        %2076 = vmatprep.subr.bf16.mxu0 0
        %2077 = vmatpush1.bf16.msra.mxu0 0
        %2078 = vmatprep.subr.bf16.mxu0 0
        %2079 = vmatpush1.bf16.msra.mxu0 0
        %2080 = vmatprep.subr.bf16.mxu0 0
        %2081 = vmatpush1.bf16.msra.mxu0 0
        %2082 = vmatprep.subr.bf16.mxu0 0
        %2083 = vmatpush1.bf16.msra.mxu0 0
        %2084 = vmatprep.subr.bf16.mxu0 0
        %2085 = vmatpush1.bf16.msra.mxu0 0
        %2086 = vmatprep.subr.bf16.mxu0 0
        %2087 = vmatpush1.bf16.msra.mxu0 0
        %2088 = vmatprep.subr.bf16.mxu0 0
        %2089 = vmatpush1.bf16.msra.mxu0 0
        %2090 = vmatprep.mubr.bf16.mxu0 0
        %2091 = vmatmul.mubr.bf16.gmra.mrb[0].mxu0 %v2047
        %v2092 = vpop.f32.mrb[0].mxu0
        %v2093 = vadd.f32 0.0, %v2092
        %v2094 = vpop.f32.mrb[0].mxu0
        %v2095 = vpop.f32.mrb[0].mxu0
        %v2096 = vadd.f32 0.0, %v2095
        %v2097 = vpop.f32.mrb[0].mxu0
        %2098 = vmatprep.mubr.bf16.mxu0 0
        %2099 = vmatmul.mubr.bf16.gmra.mrb[0].mxu0 %v2050
        %v2100 = vpop.f32.mrb[0].mxu0
        %v2101 = vadd.f32 0.0, %v2100
        %v2102 = vpop.f32.mrb[0].mxu0
        %v2103 = vpop.f32.mrb[0].mxu0
        %v2104 = vadd.f32 0.0, %v2103
        %v2105 = vpop.f32.mrb[0].mxu0
        %2106 = vmatprep.mubr.bf16.mxu0 0
        %2107 = vmatmul.mubr.bf16.gmra.mrb[0].mxu0 %v2053
        %v2108 = vpop.f32.mrb[0].mxu0
        %v2109 = vadd.f32 0.0, %v2108
        %v2110 = vpop.f32.mrb[0].mxu0
        %v2111 = vpop.f32.mrb[0].mxu0
        %v2112 = vadd.f32 0.0, %v2111
        %v2113 = vpop.f32.mrb[0].mxu0
        %2114 = vmatprep.mubr.bf16.mxu0 0
        %2115 = vmatmul.mubr.bf16.gmra.mrb[0].mxu0 %v2056
        %v2116 = vpop.f32.mrb[0].mxu0
        %v2117 = vadd.f32 0.0, %v2116
        %v2118 = vpop.f32.mrb[0].mxu0
        %v2119 = vpop.f32.mrb[0].mxu0
        %v2120 = vadd.f32 0.0, %v2119
        %v2121 = vpop.f32.mrb[0].mxu0
        %2122 = vdwg.mxu0
        %v2123 = vpack.c.bf16 %v2096, %v2093
        %v2124 = vpack.c.bf16 %v2104, %v2101
        %v2125 = vpack.c.bf16 %v2112, %v2109
        %v2126 = vpack.c.bf16 %v2120, %v2117
        %s2127 = scalar_lea.vmem %s5, 96
        %v2128 = vld [vmem:[%s2127] sm:$0xf]
        %v2129 = vld [vmem:[%s2127 + $0x4] sm:$0xf]
        %v2130 = vld [vmem:[%s2127 + $0x8] sm:$0xf]
        %v2131 = vld [vmem:[%s2127 + $0xc] sm:$0xf]
        %v2136 = vunpack.c.l.b16 %v2128
        %v2137 = vunpack.c.l.b16 %v2129
        %v2138 = vunpack.c.l.b16 %v2130
        %v2139 = vunpack.c.l.b16 %v2131
        %v2140 = vpack.c.b16 %v2137, %v2136
        %v2141 = vpack.c.b16 %v2139, %v2138
        %v2145 = vsel %vm552, %v2123, 0
        %v2148 = vsel %vm552, %v2124, 0
        %v2151 = vsel %vm552, %v2125, 0
        %v2154 = vsel %vm552, %v2126, 0
        %2156 = vmatprep.subr.bf16.mxu0 0
        %2157 = vmatpush1.bf16.msra.mxu0 %v2140
        %2158 = vmatprep.subr.bf16.mxu0 0
        %2159 = vmatpush1.bf16.msra.mxu0 %v2141
        %2160 = vmatprep.subr.bf16.mxu0 0
        %2161 = vmatpush1.bf16.msra.mxu0 0
        %2162 = vmatprep.subr.bf16.mxu0 0
        %2163 = vmatpush1.bf16.msra.mxu0 0
        %2164 = vmatprep.subr.bf16.mxu0 0
        %2165 = vmatpush1.bf16.msra.mxu0 0
        %2166 = vmatprep.subr.bf16.mxu0 0
        %2167 = vmatpush1.bf16.msra.mxu0 0
        %2168 = vmatprep.subr.bf16.mxu0 0
        %2169 = vmatpush1.bf16.msra.mxu0 0
        %2170 = vmatprep.subr.bf16.mxu0 0
        %2171 = vmatpush1.bf16.msra.mxu0 0
        %2172 = vmatprep.subr.bf16.mxu0 0
        %2173 = vmatpush1.bf16.msra.mxu0 0
        %2174 = vmatprep.subr.bf16.mxu0 0
        %2175 = vmatpush1.bf16.msra.mxu0 0
        %2176 = vmatprep.subr.bf16.mxu0 0
        %2177 = vmatpush1.bf16.msra.mxu0 0
        %2178 = vmatprep.subr.bf16.mxu0 0
        %2179 = vmatpush1.bf16.msra.mxu0 0
        %2180 = vmatprep.subr.bf16.mxu0 0
        %2181 = vmatpush1.bf16.msra.mxu0 0
        %2182 = vmatprep.subr.bf16.mxu0 0
        %2183 = vmatpush1.bf16.msra.mxu0 0
        %2184 = vmatprep.subr.bf16.mxu0 0
        %2185 = vmatpush1.bf16.msra.mxu0 0
        %2186 = vmatprep.subr.bf16.mxu0 0
        %2187 = vmatpush1.bf16.msra.mxu0 0
        %2188 = vmatprep.mubr.bf16.mxu0 0
        %2189 = vmatmul.mubr.bf16.gmra.mrb[0].mxu0 %v2145
        %v2190 = vpop.f32.mrb[0].mxu0
        %v2191 = vadd.f32 0.0, %v2190
        %v2192 = vpop.f32.mrb[0].mxu0
        %v2193 = vpop.f32.mrb[0].mxu0
        %v2194 = vadd.f32 0.0, %v2193
        %v2195 = vpop.f32.mrb[0].mxu0
        %2196 = vmatprep.mubr.bf16.mxu0 0
        %2197 = vmatmul.mubr.bf16.gmra.mrb[0].mxu0 %v2148
        %v2198 = vpop.f32.mrb[0].mxu0
        %v2199 = vadd.f32 0.0, %v2198
        %v2200 = vpop.f32.mrb[0].mxu0
        %v2201 = vpop.f32.mrb[0].mxu0
        %v2202 = vadd.f32 0.0, %v2201
        %v2203 = vpop.f32.mrb[0].mxu0
        %2204 = vmatprep.mubr.bf16.mxu0 0
        %2205 = vmatmul.mubr.bf16.gmra.mrb[0].mxu0 %v2151
        %v2206 = vpop.f32.mrb[0].mxu0
        %v2207 = vadd.f32 0.0, %v2206
        %v2208 = vpop.f32.mrb[0].mxu0
        %v2209 = vpop.f32.mrb[0].mxu0
        %v2210 = vadd.f32 0.0, %v2209
        %v2211 = vpop.f32.mrb[0].mxu0
        %2212 = vmatprep.mubr.bf16.mxu0 0
        %2213 = vmatmul.mubr.bf16.gmra.mrb[0].mxu0 %v2154
        %v2214 = vpop.f32.mrb[0].mxu0
        %v2215 = vadd.f32 0.0, %v2214
        %v2216 = vpop.f32.mrb[0].mxu0
        %v2217 = vpop.f32.mrb[0].mxu0
        %v2218 = vadd.f32 0.0, %v2217
        %v2219 = vpop.f32.mrb[0].mxu0
        %2220 = vdwg.mxu0
        %v2221 = vadd.f32 %v2009, %v2191
        %v2222 = vadd.f32 %v2010, %v2194
        %v2223 = vadd.f32 %v2011, %v2199
        %v2224 = vadd.f32 %v2012, %v2202
        %v2225 = vadd.f32 %v2013, %v2207
        %v2226 = vadd.f32 %v2014, %v2210
        %v2227 = vadd.f32 %v2015, %v2215
        %v2228 = vadd.f32 %v2016, %v2218
        %s2229 = scalar_lea.vmem %s4, 224
        %v2230 = vld [vmem:[%s2229] sm:$0xf]
        %v2231 = vld [vmem:[%s2229 + $0x4] sm:$0xf]
        %v2232 = vld [vmem:[%s2229 + $0x8] sm:$0xf]
        %v2233 = vld [vmem:[%s2229 + $0xc] sm:$0xf]
        %v2234 = vld [vmem:[%s2229 + $0x10] sm:$0xf]
        %v2235 = vld [vmem:[%s2229 + $0x14] sm:$0xf]
        %v2236 = vld [vmem:[%s2229 + $0x18] sm:$0xf]
        %v2237 = vld [vmem:[%s2229 + $0x1c] sm:$0xf]
        %v2246 = vunpack.c.l.b16 %v2230
        %v2247 = vunpack.c.l.b16 %v2231
        %v2248 = vunpack.c.l.b16 %v2232
        %v2249 = vunpack.c.l.b16 %v2233
        %v2250 = vunpack.c.l.b16 %v2234
        %v2251 = vunpack.c.l.b16 %v2235
        %v2252 = vunpack.c.l.b16 %v2236
        %v2253 = vunpack.c.l.b16 %v2237
        %v2254 = vpack.c.b16 %v2247, %v2246
        %v2255 = vpack.c.b16 %v2249, %v2248
        %v2256 = vpack.c.b16 %v2251, %v2250
        %v2257 = vpack.c.b16 %v2253, %v2252
        %v2259 = vsel %vm790, %v2254, 0
        %v2262 = vsel %vm790, %v2255, 0
        %v2265 = vsel %vm790, %v2256, 0
        %v2268 = vsel %vm790, %v2257, 0
        %2270 = vmatprep.subr.bf16.mxu0 0
        %2271 = vmatpush1.bf16.msra.mxu0 %v758
        %2272 = vmatprep.subr.bf16.mxu0 0
        %2273 = vmatpush1.bf16.msra.mxu0 %v759
        %2274 = vmatprep.subr.bf16.mxu0 0
        %2275 = vmatpush1.bf16.msra.mxu0 %v760
        %2276 = vmatprep.subr.bf16.mxu0 0
        %2277 = vmatpush1.bf16.msra.mxu0 %v761
        %2278 = vmatprep.subr.bf16.mxu0 0
        %2279 = vmatpush1.bf16.msra.mxu0 0
        %2280 = vmatprep.subr.bf16.mxu0 0
        %2281 = vmatpush1.bf16.msra.mxu0 0
        %2282 = vmatprep.subr.bf16.mxu0 0
        %2283 = vmatpush1.bf16.msra.mxu0 0
        %2284 = vmatprep.subr.bf16.mxu0 0
        %2285 = vmatpush1.bf16.msra.mxu0 0
        %2286 = vmatprep.subr.bf16.mxu0 0
        %2287 = vmatpush1.bf16.msra.mxu0 0
        %2288 = vmatprep.subr.bf16.mxu0 0
        %2289 = vmatpush1.bf16.msra.mxu0 0
        %2290 = vmatprep.subr.bf16.mxu0 0
        %2291 = vmatpush1.bf16.msra.mxu0 0
        %2292 = vmatprep.subr.bf16.mxu0 0
        %2293 = vmatpush1.bf16.msra.mxu0 0
        %2294 = vmatprep.subr.bf16.mxu0 0
        %2295 = vmatpush1.bf16.msra.mxu0 0
        %2296 = vmatprep.subr.bf16.mxu0 0
        %2297 = vmatpush1.bf16.msra.mxu0 0
        %2298 = vmatprep.subr.bf16.mxu0 0
        %2299 = vmatpush1.bf16.msra.mxu0 0
        %2300 = vmatprep.subr.bf16.mxu0 0
        %2301 = vmatpush1.bf16.msra.mxu0 0
        %2302 = vmatprep.mubr.bf16.mxu0 0
        %2303 = vmatmul.mubr.bf16.gmra.mrb[0].mxu0 %v2259
        %v2304 = vpop.f32.mrb[0].mxu0
        %v2305 = vadd.f32 0.0, %v2304
        %v2306 = vpop.f32.mrb[0].mxu0
        %v2307 = vpop.f32.mrb[0].mxu0
        %v2308 = vadd.f32 0.0, %v2307
        %v2309 = vpop.f32.mrb[0].mxu0
        %2310 = vmatprep.mubr.bf16.mxu0 0
        %2311 = vmatmul.mubr.bf16.gmra.mrb[0].mxu0 %v2262
        %v2312 = vpop.f32.mrb[0].mxu0
        %v2313 = vadd.f32 0.0, %v2312
        %v2314 = vpop.f32.mrb[0].mxu0
        %v2315 = vpop.f32.mrb[0].mxu0
        %v2316 = vadd.f32 0.0, %v2315
        %v2317 = vpop.f32.mrb[0].mxu0
        %2318 = vmatprep.mubr.bf16.mxu0 0
        %2319 = vmatmul.mubr.bf16.gmra.mrb[0].mxu0 %v2265
        %v2320 = vpop.f32.mrb[0].mxu0
        %v2321 = vadd.f32 0.0, %v2320
        %v2322 = vpop.f32.mrb[0].mxu0
        %v2323 = vpop.f32.mrb[0].mxu0
        %v2324 = vadd.f32 0.0, %v2323
        %v2325 = vpop.f32.mrb[0].mxu0
        %2326 = vmatprep.mubr.bf16.mxu0 0
        %2327 = vmatmul.mubr.bf16.gmra.mrb[0].mxu0 %v2268
        %v2328 = vpop.f32.mrb[0].mxu0
        %v2329 = vadd.f32 0.0, %v2328
        %v2330 = vpop.f32.mrb[0].mxu0
        %v2331 = vpop.f32.mrb[0].mxu0
        %v2332 = vadd.f32 0.0, %v2331
        %v2333 = vpop.f32.mrb[0].mxu0
        %2334 = vdwg.mxu0
        %v2335 = vpack.c.bf16 %v2308, %v2305
        %v2336 = vpack.c.bf16 %v2316, %v2313
        %v2337 = vpack.c.bf16 %v2324, %v2321
        %v2338 = vpack.c.bf16 %v2332, %v2329
        %s2339 = scalar_lea.vmem %s5, 112
        %v2340 = vld [vmem:[%s2339] sm:$0xf]
        %v2341 = vld [vmem:[%s2339 + $0x4] sm:$0xf]
        %v2342 = vld [vmem:[%s2339 + $0x8] sm:$0xf]
        %v2343 = vld [vmem:[%s2339 + $0xc] sm:$0xf]
        %v2348 = vunpack.c.l.b16 %v2340
        %v2349 = vunpack.c.l.b16 %v2341
        %v2350 = vunpack.c.l.b16 %v2342
        %v2351 = vunpack.c.l.b16 %v2343
        %v2352 = vpack.c.b16 %v2349, %v2348
        %v2353 = vpack.c.b16 %v2351, %v2350
        %v2357 = vsel %vm552, %v2335, 0
        %v2360 = vsel %vm552, %v2336, 0
        %v2363 = vsel %vm552, %v2337, 0
        %v2366 = vsel %vm552, %v2338, 0
        %2368 = vmatprep.subr.bf16.mxu0 0
        %2369 = vmatpush1.bf16.msra.mxu0 %v2352
        %2370 = vmatprep.subr.bf16.mxu0 0
        %2371 = vmatpush1.bf16.msra.mxu0 %v2353
        %2372 = vmatprep.subr.bf16.mxu0 0
        %2373 = vmatpush1.bf16.msra.mxu0 0
        %2374 = vmatprep.subr.bf16.mxu0 0
        %2375 = vmatpush1.bf16.msra.mxu0 0
        %2376 = vmatprep.subr.bf16.mxu0 0
        %2377 = vmatpush1.bf16.msra.mxu0 0
        %2378 = vmatprep.subr.bf16.mxu0 0
        %2379 = vmatpush1.bf16.msra.mxu0 0
        %2380 = vmatprep.subr.bf16.mxu0 0
        %2381 = vmatpush1.bf16.msra.mxu0 0
        %2382 = vmatprep.subr.bf16.mxu0 0
        %2383 = vmatpush1.bf16.msra.mxu0 0
        %2384 = vmatprep.subr.bf16.mxu0 0
        %2385 = vmatpush1.bf16.msra.mxu0 0
        %2386 = vmatprep.subr.bf16.mxu0 0
        %2387 = vmatpush1.bf16.msra.mxu0 0
        %2388 = vmatprep.subr.bf16.mxu0 0
        %2389 = vmatpush1.bf16.msra.mxu0 0
        %2390 = vmatprep.subr.bf16.mxu0 0
        %2391 = vmatpush1.bf16.msra.mxu0 0
        %2392 = vmatprep.subr.bf16.mxu0 0
        %2393 = vmatpush1.bf16.msra.mxu0 0
        %2394 = vmatprep.subr.bf16.mxu0 0
        %2395 = vmatpush1.bf16.msra.mxu0 0
        %2396 = vmatprep.subr.bf16.mxu0 0
        %2397 = vmatpush1.bf16.msra.mxu0 0
        %2398 = vmatprep.subr.bf16.mxu0 0
        %2399 = vmatpush1.bf16.msra.mxu0 0
        %2400 = vmatprep.mubr.bf16.mxu0 0
        %2401 = vmatmul.mubr.bf16.gmra.mrb[0].mxu0 %v2357
        %v2402 = vpop.f32.mrb[0].mxu0
        %v2403 = vadd.f32 0.0, %v2402
        %v2404 = vpop.f32.mrb[0].mxu0
        %v2405 = vpop.f32.mrb[0].mxu0
        %v2406 = vadd.f32 0.0, %v2405
        %v2407 = vpop.f32.mrb[0].mxu0
        %2408 = vmatprep.mubr.bf16.mxu0 0
        %2409 = vmatmul.mubr.bf16.gmra.mrb[0].mxu0 %v2360
        %v2410 = vpop.f32.mrb[0].mxu0
        %v2411 = vadd.f32 0.0, %v2410
        %v2412 = vpop.f32.mrb[0].mxu0
        %v2413 = vpop.f32.mrb[0].mxu0
        %v2414 = vadd.f32 0.0, %v2413
        %v2415 = vpop.f32.mrb[0].mxu0
        %2416 = vmatprep.mubr.bf16.mxu0 0
        %2417 = vmatmul.mubr.bf16.gmra.mrb[0].mxu0 %v2363
        %v2418 = vpop.f32.mrb[0].mxu0
        %v2419 = vadd.f32 0.0, %v2418
        %v2420 = vpop.f32.mrb[0].mxu0
        %v2421 = vpop.f32.mrb[0].mxu0
        %v2422 = vadd.f32 0.0, %v2421
        %v2423 = vpop.f32.mrb[0].mxu0
        %2424 = vmatprep.mubr.bf16.mxu0 0
        %2425 = vmatmul.mubr.bf16.gmra.mrb[0].mxu0 %v2366
        %v2426 = vpop.f32.mrb[0].mxu0
        %v2427 = vadd.f32 0.0, %v2426
        %v2428 = vpop.f32.mrb[0].mxu0
        %v2429 = vpop.f32.mrb[0].mxu0
        %v2430 = vadd.f32 0.0, %v2429
        %v2431 = vpop.f32.mrb[0].mxu0
        %2432 = vdwg.mxu0
        %v2433 = vadd.f32 %v2221, %v2403
        %v2434 = vadd.f32 %v2222, %v2406
        %v2435 = vadd.f32 %v2223, %v2411
        %v2436 = vadd.f32 %v2224, %v2414
        %v2437 = vadd.f32 %v2225, %v2419
        %v2438 = vadd.f32 %v2226, %v2422
        %v2439 = vadd.f32 %v2227, %v2427
        %v2440 = vadd.f32 %v2228, %v2430
        %s2441 = scalar_lea.vmem %s4, 256
        %v2442 = vld [vmem:[%s2441] sm:$0xf]
        %v2443 = vld [vmem:[%s2441 + $0x4] sm:$0xf]
        %v2444 = vld [vmem:[%s2441 + $0x8] sm:$0xf]
        %v2445 = vld [vmem:[%s2441 + $0xc] sm:$0xf]
        %v2446 = vld [vmem:[%s2441 + $0x10] sm:$0xf]
        %v2447 = vld [vmem:[%s2441 + $0x14] sm:$0xf]
        %v2448 = vld [vmem:[%s2441 + $0x18] sm:$0xf]
        %v2449 = vld [vmem:[%s2441 + $0x1c] sm:$0xf]
        %v2458 = vunpack.c.l.b16 %v2442
        %v2459 = vunpack.c.l.b16 %v2443
        %v2460 = vunpack.c.l.b16 %v2444
        %v2461 = vunpack.c.l.b16 %v2445
        %v2462 = vunpack.c.l.b16 %v2446
        %v2463 = vunpack.c.l.b16 %v2447
        %v2464 = vunpack.c.l.b16 %v2448
        %v2465 = vunpack.c.l.b16 %v2449
        %v2466 = vpack.c.b16 %v2459, %v2458
        %v2467 = vpack.c.b16 %v2461, %v2460
        %v2468 = vpack.c.b16 %v2463, %v2462
        %v2469 = vpack.c.b16 %v2465, %v2464
        %v2471 = vsel %vm790, %v2466, 0
        %v2474 = vsel %vm790, %v2467, 0
        %v2477 = vsel %vm790, %v2468, 0
        %v2480 = vsel %vm790, %v2469, 0
        %2482 = vmatprep.subr.bf16.mxu0 0
        %2483 = vmatpush1.bf16.msra.mxu0 %v758
        %2484 = vmatprep.subr.bf16.mxu0 0
        %2485 = vmatpush1.bf16.msra.mxu0 %v759
        %2486 = vmatprep.subr.bf16.mxu0 0
        %2487 = vmatpush1.bf16.msra.mxu0 %v760
        %2488 = vmatprep.subr.bf16.mxu0 0
        %2489 = vmatpush1.bf16.msra.mxu0 %v761
        %2490 = vmatprep.subr.bf16.mxu0 0
        %2491 = vmatpush1.bf16.msra.mxu0 0
        %2492 = vmatprep.subr.bf16.mxu0 0
        %2493 = vmatpush1.bf16.msra.mxu0 0
        %2494 = vmatprep.subr.bf16.mxu0 0
        %2495 = vmatpush1.bf16.msra.mxu0 0
        %2496 = vmatprep.subr.bf16.mxu0 0
        %2497 = vmatpush1.bf16.msra.mxu0 0
        %2498 = vmatprep.subr.bf16.mxu0 0
        %2499 = vmatpush1.bf16.msra.mxu0 0
        %2500 = vmatprep.subr.bf16.mxu0 0
        %2501 = vmatpush1.bf16.msra.mxu0 0
        %2502 = vmatprep.subr.bf16.mxu0 0
        %2503 = vmatpush1.bf16.msra.mxu0 0
        %2504 = vmatprep.subr.bf16.mxu0 0
        %2505 = vmatpush1.bf16.msra.mxu0 0
        %2506 = vmatprep.subr.bf16.mxu0 0
        %2507 = vmatpush1.bf16.msra.mxu0 0
        %2508 = vmatprep.subr.bf16.mxu0 0
        %2509 = vmatpush1.bf16.msra.mxu0 0
        %2510 = vmatprep.subr.bf16.mxu0 0
        %2511 = vmatpush1.bf16.msra.mxu0 0
        %2512 = vmatprep.subr.bf16.mxu0 0
        %2513 = vmatpush1.bf16.msra.mxu0 0
        %2514 = vmatprep.mubr.bf16.mxu0 0
        %2515 = vmatmul.mubr.bf16.gmra.mrb[0].mxu0 %v2471
        %v2516 = vpop.f32.mrb[0].mxu0
        %v2517 = vadd.f32 0.0, %v2516
        %v2518 = vpop.f32.mrb[0].mxu0
        %v2519 = vpop.f32.mrb[0].mxu0
        %v2520 = vadd.f32 0.0, %v2519
        %v2521 = vpop.f32.mrb[0].mxu0
        %2522 = vmatprep.mubr.bf16.mxu0 0
        %2523 = vmatmul.mubr.bf16.gmra.mrb[0].mxu0 %v2474
        %v2524 = vpop.f32.mrb[0].mxu0
        %v2525 = vadd.f32 0.0, %v2524
        %v2526 = vpop.f32.mrb[0].mxu0
        %v2527 = vpop.f32.mrb[0].mxu0
        %v2528 = vadd.f32 0.0, %v2527
        %v2529 = vpop.f32.mrb[0].mxu0
        %2530 = vmatprep.mubr.bf16.mxu0 0
        %2531 = vmatmul.mubr.bf16.gmra.mrb[0].mxu0 %v2477
        %v2532 = vpop.f32.mrb[0].mxu0
        %v2533 = vadd.f32 0.0, %v2532
        %v2534 = vpop.f32.mrb[0].mxu0
        %v2535 = vpop.f32.mrb[0].mxu0
        %v2536 = vadd.f32 0.0, %v2535
        %v2537 = vpop.f32.mrb[0].mxu0
        %2538 = vmatprep.mubr.bf16.mxu0 0
        %2539 = vmatmul.mubr.bf16.gmra.mrb[0].mxu0 %v2480
        %v2540 = vpop.f32.mrb[0].mxu0
        %v2541 = vadd.f32 0.0, %v2540
        %v2542 = vpop.f32.mrb[0].mxu0
        %v2543 = vpop.f32.mrb[0].mxu0
        %v2544 = vadd.f32 0.0, %v2543
        %v2545 = vpop.f32.mrb[0].mxu0
        %2546 = vdwg.mxu0
        %v2547 = vpack.c.bf16 %v2520, %v2517
        %v2548 = vpack.c.bf16 %v2528, %v2525
        %v2549 = vpack.c.bf16 %v2536, %v2533
        %v2550 = vpack.c.bf16 %v2544, %v2541
        %s2551 = scalar_lea.vmem %s5, 128
        %v2552 = vld [vmem:[%s2551] sm:$0xf]
        %v2553 = vld [vmem:[%s2551 + $0x4] sm:$0xf]
        %v2554 = vld [vmem:[%s2551 + $0x8] sm:$0xf]
        %v2555 = vld [vmem:[%s2551 + $0xc] sm:$0xf]
        %v2560 = vunpack.c.l.b16 %v2552
        %v2561 = vunpack.c.l.b16 %v2553
        %v2562 = vunpack.c.l.b16 %v2554
        %v2563 = vunpack.c.l.b16 %v2555
        %v2564 = vpack.c.b16 %v2561, %v2560
        %v2565 = vpack.c.b16 %v2563, %v2562
        %v2569 = vsel %vm552, %v2547, 0
        %v2572 = vsel %vm552, %v2548, 0
        %v2575 = vsel %vm552, %v2549, 0
        %v2578 = vsel %vm552, %v2550, 0
        %2580 = vmatprep.subr.bf16.mxu0 0
        %2581 = vmatpush1.bf16.msra.mxu0 %v2564
        %2582 = vmatprep.subr.bf16.mxu0 0
        %2583 = vmatpush1.bf16.msra.mxu0 %v2565
        %2584 = vmatprep.subr.bf16.mxu0 0
        %2585 = vmatpush1.bf16.msra.mxu0 0
        %2586 = vmatprep.subr.bf16.mxu0 0
        %2587 = vmatpush1.bf16.msra.mxu0 0
        %2588 = vmatprep.subr.bf16.mxu0 0
        %2589 = vmatpush1.bf16.msra.mxu0 0
        %2590 = vmatprep.subr.bf16.mxu0 0
        %2591 = vmatpush1.bf16.msra.mxu0 0
        %2592 = vmatprep.subr.bf16.mxu0 0
        %2593 = vmatpush1.bf16.msra.mxu0 0
        %2594 = vmatprep.subr.bf16.mxu0 0
        %2595 = vmatpush1.bf16.msra.mxu0 0
        %2596 = vmatprep.subr.bf16.mxu0 0
        %2597 = vmatpush1.bf16.msra.mxu0 0
        %2598 = vmatprep.subr.bf16.mxu0 0
        %2599 = vmatpush1.bf16.msra.mxu0 0
        %2600 = vmatprep.subr.bf16.mxu0 0
        %2601 = vmatpush1.bf16.msra.mxu0 0
        %2602 = vmatprep.subr.bf16.mxu0 0
        %2603 = vmatpush1.bf16.msra.mxu0 0
        %2604 = vmatprep.subr.bf16.mxu0 0
        %2605 = vmatpush1.bf16.msra.mxu0 0
        %2606 = vmatprep.subr.bf16.mxu0 0
        %2607 = vmatpush1.bf16.msra.mxu0 0
        %2608 = vmatprep.subr.bf16.mxu0 0
        %2609 = vmatpush1.bf16.msra.mxu0 0
        %2610 = vmatprep.subr.bf16.mxu0 0
        %2611 = vmatpush1.bf16.msra.mxu0 0
        %2612 = vmatprep.mubr.bf16.mxu0 0
        %2613 = vmatmul.mubr.bf16.gmra.mrb[0].mxu0 %v2569
        %v2614 = vpop.f32.mrb[0].mxu0
        %v2615 = vadd.f32 0.0, %v2614
        %v2616 = vpop.f32.mrb[0].mxu0
        %v2617 = vpop.f32.mrb[0].mxu0
        %v2618 = vadd.f32 0.0, %v2617
        %v2619 = vpop.f32.mrb[0].mxu0
        %2620 = vmatprep.mubr.bf16.mxu0 0
        %2621 = vmatmul.mubr.bf16.gmra.mrb[0].mxu0 %v2572
        %v2622 = vpop.f32.mrb[0].mxu0
        %v2623 = vadd.f32 0.0, %v2622
        %v2624 = vpop.f32.mrb[0].mxu0
        %v2625 = vpop.f32.mrb[0].mxu0
        %v2626 = vadd.f32 0.0, %v2625
        %v2627 = vpop.f32.mrb[0].mxu0
        %2628 = vmatprep.mubr.bf16.mxu0 0
        %2629 = vmatmul.mubr.bf16.gmra.mrb[0].mxu0 %v2575
        %v2630 = vpop.f32.mrb[0].mxu0
        %v2631 = vadd.f32 0.0, %v2630
        %v2632 = vpop.f32.mrb[0].mxu0
        %v2633 = vpop.f32.mrb[0].mxu0
        %v2634 = vadd.f32 0.0, %v2633
        %v2635 = vpop.f32.mrb[0].mxu0
        %2636 = vmatprep.mubr.bf16.mxu0 0
        %2637 = vmatmul.mubr.bf16.gmra.mrb[0].mxu0 %v2578
        %v2638 = vpop.f32.mrb[0].mxu0
        %v2639 = vadd.f32 0.0, %v2638
        %v2640 = vpop.f32.mrb[0].mxu0
        %v2641 = vpop.f32.mrb[0].mxu0
        %v2642 = vadd.f32 0.0, %v2641
        %v2643 = vpop.f32.mrb[0].mxu0
        %2644 = vdwg.mxu0
        %v2645 = vadd.f32 %v2433, %v2615
        %v2646 = vadd.f32 %v2434, %v2618
        %v2647 = vadd.f32 %v2435, %v2623
        %v2648 = vadd.f32 %v2436, %v2626
        %v2649 = vadd.f32 %v2437, %v2631
        %v2650 = vadd.f32 %v2438, %v2634
        %v2651 = vadd.f32 %v2439, %v2639
        %v2652 = vadd.f32 %v2440, %v2642
        %v2653 = vld [vmem:[%s6] sm:$0x1]
        %v2654 = vlaneseq
        %v2655 = vshrl.u32 %v2654, 7
        %v2656 = vsub.s32 0, %v2655
        %v2657 = vrot.slane %v2653, %v2656
        %v2658 = vadd.f32 %v2645, %v2657
        %v2659 = vadd.f32 %v2646, %v2657
        %v2660 = vadd.f32 %v2647, %v2657
        %v2661 = vadd.f32 %v2648, %v2657
        %v2662 = vadd.f32 %v2649, %v2657
        %v2663 = vadd.f32 %v2650, %v2657
        %v2664 = vadd.f32 %v2651, %v2657
        %v2665 = vadd.f32 %v2652, %v2657
        %v2666 = vld [vmem:[%s7] sm:$0xff]
        %v2667 = vld [vmem:[%s7 + $0x8] sm:$0xff]
        %v2668 = vld [vmem:[%s7 + $0x10] sm:$0xff]
        %v2669 = vld [vmem:[%s7 + $0x18] sm:$0xff]
        %v2670 = vld [vmem:[%s6 + $0x1] sm:$0x1]
        %v2671 = vld [vmem:[%s6 + $0x2] sm:$0x1]
        %v2672 = vsel %vm552, %v2658, 0.0
        %v2673 = vsel %vm552, %v2659, 0.0
        %v2674 = vadd.f32 %v2672, %v2673
        %v2675 = vsel %vm552, %v2660, 0.0
        %v2676 = vadd.f32 %v2674, %v2675
        %v2677 = vsel %vm552, %v2661, 0.0
        %v2678 = vadd.f32 %v2676, %v2677
        %v2679 = vsel %vm552, %v2662, 0.0
        %v2680 = vadd.f32 %v2678, %v2679
        %v2681 = vsel %vm552, %v2663, 0.0
        %v2682 = vadd.f32 %v2680, %v2681
        %v2683 = vsel %vm552, %v2664, 0.0
        %v2684 = vadd.f32 %v2682, %v2683
        %v2685 = vsel %vm552, %v2665, 0.0
        %v2686 = vadd.f32 %v2684, %v2685
        %v2687 = vrot.slane %v2686, 4
        %v2688 = vadd.f32 %v2686, %v2687
        %v2689 = vrot.slane %v2688, 2
        %v2690 = vadd.f32 %v2688, %v2689
        %v2691 = vrot.slane %v2690, 1
        %v2692 = vadd.f32 %v2690, %v2691
        %v2693 = vmul.f32 %v2658, %v2658
        %v2694 = vmul.f32 %v2659, %v2659
        %v2695 = vmul.f32 %v2660, %v2660
        %v2696 = vmul.f32 %v2661, %v2661
        %v2697 = vmul.f32 %v2662, %v2662
        %v2698 = vmul.f32 %v2663, %v2663
        %v2699 = vmul.f32 %v2664, %v2664
        %v2700 = vmul.f32 %v2665, %v2665
        %v2701 = vsel %vm552, %v2693, 0.0
        %v2702 = vsel %vm552, %v2694, 0.0
        %v2703 = vadd.f32 %v2701, %v2702
        %v2704 = vsel %vm552, %v2695, 0.0
        %v2705 = vadd.f32 %v2703, %v2704
        %v2706 = vsel %vm552, %v2696, 0.0
        %v2707 = vadd.f32 %v2705, %v2706
        %v2708 = vsel %vm552, %v2697, 0.0
        %v2709 = vadd.f32 %v2707, %v2708
        %v2710 = vsel %vm552, %v2698, 0.0
        %v2711 = vadd.f32 %v2709, %v2710
        %v2712 = vsel %vm552, %v2699, 0.0
        %v2713 = vadd.f32 %v2711, %v2712
        %v2714 = vsel %vm552, %v2700, 0.0
        %v2715 = vadd.f32 %v2713, %v2714
        %v2716 = vrot.slane %v2715, 4
        %v2717 = vadd.f32 %v2715, %v2716
        %v2718 = vrot.slane %v2717, 2
        %v2719 = vadd.f32 %v2717, %v2718
        %v2720 = vrot.slane %v2719, 1
        %v2721 = vadd.f32 %v2719, %v2720
        %v2722 = vsel %vm603, %v2692, %v2721
        %v2724 = vsel %vm552, %v2722, 0
        %2726 = vmatprep.subr.mxu0 0.0
        %2727 = vmatpush1.msra.mxu0 %v2666
        %2728 = vmatprep.subr.mxu0 0.0
        %2729 = vmatpush1.msra.mxu0 %v2667
        %2730 = vmatprep.subr.mxu0 0.0
        %2731 = vmatpush1.msra.mxu0 %v2668
        %2732 = vmatprep.subr.mxu0 0.0
        %2733 = vmatpush1.msra.mxu0 %v2669
        %2734 = vmatprep.subr.mxu0 0.0
        %2735 = vmatpush1.msra.mxu0 0.0
        %2736 = vmatprep.subr.mxu0 0.0
        %2737 = vmatpush1.msra.mxu0 0.0
        %2738 = vmatprep.subr.mxu0 0.0
        %2739 = vmatpush1.msra.mxu0 0.0
        %2740 = vmatprep.subr.mxu0 0.0
        %2741 = vmatpush1.msra.mxu0 0.0
        %2742 = vmatprep.subr.mxu0 0.0
        %2743 = vmatpush1.msra.mxu0 0.0
        %2744 = vmatprep.subr.mxu0 0.0
        %2745 = vmatpush1.msra.mxu0 0.0
        %2746 = vmatprep.subr.mxu0 0.0
        %2747 = vmatpush1.msra.mxu0 0.0
        %2748 = vmatprep.subr.mxu0 0.0
        %2749 = vmatpush1.msra.mxu0 0.0
        %2750 = vmatprep.subr.mxu0 0.0
        %2751 = vmatpush1.msra.mxu0 0.0
        %2752 = vmatprep.subr.mxu0 0.0
        %2753 = vmatpush1.msra.mxu0 0.0
        %2754 = vmatprep.subr.mxu0 0.0
        %2755 = vmatpush1.msra.mxu0 0.0
        %2756 = vmatprep.subr.mxu0 0.0
        %2757 = vmatpush1.msra.mxu0 0.0
        %2758 = vmatprep.subr.mxu0 0.0
        %2759 = vmatpush1.msra.mxu0 0.0
        %2760 = vmatprep.subr.mxu0 0.0
        %2761 = vmatpush1.msra.mxu0 0.0
        %2762 = vmatprep.subr.mxu0 0.0
        %2763 = vmatpush1.msra.mxu0 0.0
        %2764 = vmatprep.subr.mxu0 0.0
        %2765 = vmatpush1.msra.mxu0 0.0
        %2766 = vmatprep.subr.mxu0 0.0
        %2767 = vmatpush1.msra.mxu0 0.0
        %2768 = vmatprep.subr.mxu0 0.0
        %2769 = vmatpush1.msra.mxu0 0.0
        %2770 = vmatprep.subr.mxu0 0.0
        %2771 = vmatpush1.msra.mxu0 0.0
        %2772 = vmatprep.subr.mxu0 0.0
        %2773 = vmatpush1.msra.mxu0 0.0
        %2774 = vmatprep.subr.mxu0 0.0
        %2775 = vmatpush1.msra.mxu0 0.0
        %2776 = vmatprep.subr.mxu0 0.0
        %2777 = vmatpush1.msra.mxu0 0.0
        %2778 = vmatprep.subr.mxu0 0.0
        %2779 = vmatpush1.msra.mxu0 0.0
        %2780 = vmatprep.subr.mxu0 0.0
        %2781 = vmatpush1.msra.mxu0 0.0
        %2782 = vmatprep.subr.mxu0 0.0
        %2783 = vmatpush1.msra.mxu0 0.0
        %2784 = vmatprep.subr.mxu0 0.0
        %2785 = vmatpush1.msra.mxu0 0.0
        %2786 = vmatprep.subr.mxu0 0.0
        %2787 = vmatpush1.msra.mxu0 0.0
        %2788 = vmatprep.subr.mxu0 0.0
        %2789 = vmatpush1.msra.mxu0 0.0
        %2790 = vmatprep.mubr.f32.mxu0 0.0
        %2791 = vmatmul.mubr.f32.gmra.mrb[0].mxu0 %v2724
        %v2792 = vpop.f32.mrb[0].mxu0
        %v2793 = vadd.f32 0.0, %v2792
        %v2794 = vpop.f32.mrb[0].mxu0
        %2795 = vdwg.mxu0
        %v2796 = vmul.f32 %v2793, %v2793
        %v2798 = vrot.slane %v2796, 7
        %v2800 = vsub.f32 %v2793, %v2798
        %v2801 = vmax.f32 %v2800, 0.0
        %v2802 = vadd.f32 %v2801, 1e-05
        %v2803 = vrsqrt.pop %v2802
        %v2804 = vlaneseq
        %v2805 = vshrl.u32 %v2804, 7
        %v2806 = vsub.s32 0, %v2805
        %v2807 = vrot.slane %v2793, %v2806
        %v2808 = vsub.f32 %v2658, %v2807
        %v2809 = vsub.f32 %v2659, %v2807
        %v2810 = vsub.f32 %v2660, %v2807
        %v2811 = vsub.f32 %v2661, %v2807
        %v2812 = vsub.f32 %v2662, %v2807
        %v2813 = vsub.f32 %v2663, %v2807
        %v2814 = vsub.f32 %v2664, %v2807
        %v2815 = vsub.f32 %v2665, %v2807
        %v2816 = vlaneseq
        %v2817 = vshrl.u32 %v2816, 7
        %v2818 = vsub.s32 1, %v2817
        %v2819 = vrot.slane %v2803, %v2818
        %v2820 = vmul.f32 %v2808, %v2819
        %v2821 = vmul.f32 %v2809, %v2819
        %v2822 = vmul.f32 %v2810, %v2819
        %v2823 = vmul.f32 %v2811, %v2819
        %v2824 = vmul.f32 %v2812, %v2819
        %v2825 = vmul.f32 %v2813, %v2819
        %v2826 = vmul.f32 %v2814, %v2819
        %v2827 = vmul.f32 %v2815, %v2819
        %v2828 = vlaneseq
        %v2829 = vshrl.u32 %v2828, 7
        %v2830 = vsub.s32 0, %v2829
        %v2831 = vrot.slane %v2670, %v2830
        %v2832 = vmul.f32 %v2820, %v2831
        %v2833 = vmul.f32 %v2821, %v2831
        %v2834 = vmul.f32 %v2822, %v2831
        %v2835 = vmul.f32 %v2823, %v2831
        %v2836 = vmul.f32 %v2824, %v2831
        %v2837 = vmul.f32 %v2825, %v2831
        %v2838 = vmul.f32 %v2826, %v2831
        %v2839 = vmul.f32 %v2827, %v2831
        %v2840 = vlaneseq
        %v2841 = vshrl.u32 %v2840, 7
        %v2842 = vsub.s32 0, %v2841
        %v2843 = vrot.slane %v2671, %v2842
        %v2844 = vadd.f32 %v2832, %v2843
        %v2845 = vadd.f32 %v2833, %v2843
        %v2846 = vadd.f32 %v2834, %v2843
        %v2847 = vadd.f32 %v2835, %v2843
        %v2848 = vadd.f32 %v2836, %v2843
        %v2849 = vadd.f32 %v2837, %v2843
        %v2850 = vadd.f32 %v2838, %v2843
        %v2851 = vadd.f32 %v2839, %v2843
        %vm2852 = vcmp.gt.f32.partialorder %v2844, 0.0
        %vm2853 = vcmp.gt.f32.partialorder %v2845, 0.0
        %vm2854 = vcmp.gt.f32.partialorder %v2846, 0.0
        %vm2855 = vcmp.gt.f32.partialorder %v2847, 0.0
        %vm2856 = vcmp.gt.f32.partialorder %v2848, 0.0
        %vm2857 = vcmp.gt.f32.partialorder %v2849, 0.0
        %vm2858 = vcmp.gt.f32.partialorder %v2850, 0.0
        %vm2859 = vcmp.gt.f32.partialorder %v2851, 0.0
        %v2860 = vmul.f32 %v2844, 0.2
        %v2861 = vmul.f32 %v2845, 0.2
        %v2862 = vmul.f32 %v2846, 0.2
        %v2863 = vmul.f32 %v2847, 0.2
        %v2864 = vmul.f32 %v2848, 0.2
        %v2865 = vmul.f32 %v2849, 0.2
        %v2866 = vmul.f32 %v2850, 0.2
        %v2867 = vmul.f32 %v2851, 0.2
        %v2868 = vsel %vm2852, %v2844, %v2860
        %v2869 = vsel %vm2853, %v2845, %v2861
        %v2870 = vsel %vm2854, %v2846, %v2862
        %v2871 = vsel %vm2855, %v2847, %v2863
        %v2872 = vsel %vm2856, %v2848, %v2864
        %v2873 = vsel %vm2857, %v2849, %v2865
        %v2874 = vsel %vm2858, %v2850, %v2866
        %v2875 = vsel %vm2859, %v2851, %v2867
        %v2876 = vpack.c.bf16 %v2869, %v2868
        %v2877 = vpack.c.bf16 %v2871, %v2870
        %v2878 = vpack.c.bf16 %v2873, %v2872
        %v2879 = vpack.c.bf16 %v2875, %v2874
        %v2880 = vld [vmem:[%s8] sm:$0xf]
        %v2881 = vld [vmem:[%s8 + $0x4] sm:$0xf]
        %v2884 = vunpack.c.l.b16 %v2880
        %v2885 = vunpack.c.l.b16 %v2881
        %v2886 = vpack.c.b16 %v2885, %v2884
        %v2888 = vsel %vm790, %v2886, 0
        %2890 = vmatprep.subr.bf16.mxu0 0
        %2891 = vmatpush1.bf16.msra.mxu0 %v2876
        %2892 = vmatprep.subr.bf16.mxu0 0
        %2893 = vmatpush1.bf16.msra.mxu0 %v2877
        %2894 = vmatprep.subr.bf16.mxu0 0
        %2895 = vmatpush1.bf16.msra.mxu0 %v2878
        %2896 = vmatprep.subr.bf16.mxu0 0
        %2897 = vmatpush1.bf16.msra.mxu0 %v2879
        %2898 = vmatprep.subr.bf16.mxu0 0
        %2899 = vmatpush1.bf16.msra.mxu0 0
        %2900 = vmatprep.subr.bf16.mxu0 0
        %2901 = vmatpush1.bf16.msra.mxu0 0
        %2902 = vmatprep.subr.bf16.mxu0 0
        %2903 = vmatpush1.bf16.msra.mxu0 0
        %2904 = vmatprep.subr.bf16.mxu0 0
        %2905 = vmatpush1.bf16.msra.mxu0 0
        %2906 = vmatprep.subr.bf16.mxu0 0
        %2907 = vmatpush1.bf16.msra.mxu0 0
        %2908 = vmatprep.subr.bf16.mxu0 0
        %2909 = vmatpush1.bf16.msra.mxu0 0
        %2910 = vmatprep.subr.bf16.mxu0 0
        %2911 = vmatpush1.bf16.msra.mxu0 0
        %2912 = vmatprep.subr.bf16.mxu0 0
        %2913 = vmatpush1.bf16.msra.mxu0 0
        %2914 = vmatprep.subr.bf16.mxu0 0
        %2915 = vmatpush1.bf16.msra.mxu0 0
        %2916 = vmatprep.subr.bf16.mxu0 0
        %2917 = vmatpush1.bf16.msra.mxu0 0
        %2918 = vmatprep.subr.bf16.mxu0 0
        %2919 = vmatpush1.bf16.msra.mxu0 0
        %2920 = vmatprep.subr.bf16.mxu0 0
        %2921 = vmatpush1.bf16.msra.mxu0 0
        %2922 = vmatprep.mubr.bf16.mxu0 0
        %2923 = vmatmul.mubr.bf16.gmra.mrb[0].mxu0 %v2888
        %v2924 = vpop.f32.mrb[0].mxu0
        %v2925 = vadd.f32 0.0, %v2924
        %v2926 = vpop.f32.mrb[0].mxu0
        %v2927 = vpop.f32.mrb[0].mxu0
        %v2928 = vadd.f32 0.0, %v2927
        %v2929 = vpop.f32.mrb[0].mxu0
        %2930 = vdwg.mxu0
        %v2931 = vpack.c.bf16 %v2928, %v2925
        %v2932 = vld [vmem:[%s9] sm:$0xf]
        %v2933 = vld [vmem:[%s9 + $0x4] sm:$0xf]
        %v2934 = vld [vmem:[%s9 + $0x8] sm:$0xf]
        %v2935 = vld [vmem:[%s9 + $0xc] sm:$0xf]
        %s2936 = scalar_lea.vmem %s8, 8
        %v2937 = vld [vmem:[%s2936] sm:$0xf]
        %v2938 = vld [vmem:[%s2936 + $0x4] sm:$0xf]
        %v2941 = vunpack.c.l.b16 %v2937
        %v2942 = vunpack.c.l.b16 %v2938
        %v2943 = vpack.c.b16 %v2942, %v2941
        %v2945 = vsel %vm790, %v2943, 0
        %2947 = vmatprep.subr.bf16.mxu0 0
        %2948 = vmatpush1.bf16.msra.mxu0 %v2876
        %2949 = vmatprep.subr.bf16.mxu0 0
        %2950 = vmatpush1.bf16.msra.mxu0 %v2877
        %2951 = vmatprep.subr.bf16.mxu0 0
        %2952 = vmatpush1.bf16.msra.mxu0 %v2878
        %2953 = vmatprep.subr.bf16.mxu0 0
        %2954 = vmatpush1.bf16.msra.mxu0 %v2879
        %2955 = vmatprep.subr.bf16.mxu0 0
        %2956 = vmatpush1.bf16.msra.mxu0 0
        %2957 = vmatprep.subr.bf16.mxu0 0
        %2958 = vmatpush1.bf16.msra.mxu0 0
        %2959 = vmatprep.subr.bf16.mxu0 0
        %2960 = vmatpush1.bf16.msra.mxu0 0
        %2961 = vmatprep.subr.bf16.mxu0 0
        %2962 = vmatpush1.bf16.msra.mxu0 0
        %2963 = vmatprep.subr.bf16.mxu0 0
        %2964 = vmatpush1.bf16.msra.mxu0 0
        %2965 = vmatprep.subr.bf16.mxu0 0
        %2966 = vmatpush1.bf16.msra.mxu0 0
        %2967 = vmatprep.subr.bf16.mxu0 0
        %2968 = vmatpush1.bf16.msra.mxu0 0
        %2969 = vmatprep.subr.bf16.mxu0 0
        %2970 = vmatpush1.bf16.msra.mxu0 0
        %2971 = vmatprep.subr.bf16.mxu0 0
        %2972 = vmatpush1.bf16.msra.mxu0 0
        %2973 = vmatprep.subr.bf16.mxu0 0
        %2974 = vmatpush1.bf16.msra.mxu0 0
        %2975 = vmatprep.subr.bf16.mxu0 0
        %2976 = vmatpush1.bf16.msra.mxu0 0
        %2977 = vmatprep.subr.bf16.mxu0 0
        %2978 = vmatpush1.bf16.msra.mxu0 0
        %2979 = vmatprep.mubr.bf16.mxu0 0
        %2980 = vmatmul.mubr.bf16.gmra.mrb[0].mxu0 %v2945
        %v2981 = vpop.f32.mrb[0].mxu0
        %v2982 = vadd.f32 0.0, %v2981
        %v2983 = vpop.f32.mrb[0].mxu0
        %v2984 = vpop.f32.mrb[0].mxu0
        %v2985 = vadd.f32 0.0, %v2984
        %v2986 = vpop.f32.mrb[0].mxu0
        %2987 = vdwg.mxu0
        %v2988 = vpack.c.bf16 %v2985, %v2982
        %s2989 = scalar_lea.vmem %s9, 16
        %v2990 = vld [vmem:[%s2989] sm:$0xf]
        %v2991 = vld [vmem:[%s2989 + $0x4] sm:$0xf]
        %v2992 = vld [vmem:[%s2989 + $0x8] sm:$0xf]
        %v2993 = vld [vmem:[%s2989 + $0xc] sm:$0xf]
        %v2998 = vunpack.c.l.b16 %v2990
        %v2999 = vunpack.c.l.b16 %v2991
        %v3000 = vunpack.c.l.b16 %v2992
        %v3001 = vunpack.c.l.b16 %v2993
        %v3002 = vpack.c.b16 %v2999, %v2998
        %v3003 = vpack.c.b16 %v3001, %v3000
        %v3007 = vsel %vm552, %v2988, 0
        %3009 = vmatprep.subr.bf16.mxu0 0
        %3010 = vmatpush1.bf16.msra.mxu0 %v3002
        %3011 = vmatprep.subr.bf16.mxu0 0
        %3012 = vmatpush1.bf16.msra.mxu0 %v3003
        %3013 = vmatprep.subr.bf16.mxu0 0
        %3014 = vmatpush1.bf16.msra.mxu0 0
        %3015 = vmatprep.subr.bf16.mxu0 0
        %3016 = vmatpush1.bf16.msra.mxu0 0
        %3017 = vmatprep.subr.bf16.mxu0 0
        %3018 = vmatpush1.bf16.msra.mxu0 0
        %3019 = vmatprep.subr.bf16.mxu0 0
        %3020 = vmatpush1.bf16.msra.mxu0 0
        %3021 = vmatprep.subr.bf16.mxu0 0
        %3022 = vmatpush1.bf16.msra.mxu0 0
        %3023 = vmatprep.subr.bf16.mxu0 0
        %3024 = vmatpush1.bf16.msra.mxu0 0
        %3025 = vmatprep.subr.bf16.mxu0 0
        %3026 = vmatpush1.bf16.msra.mxu0 0
        %3027 = vmatprep.subr.bf16.mxu0 0
        %3028 = vmatpush1.bf16.msra.mxu0 0
        %3029 = vmatprep.subr.bf16.mxu0 0
        %3030 = vmatpush1.bf16.msra.mxu0 0
        %3031 = vmatprep.subr.bf16.mxu0 0
        %3032 = vmatpush1.bf16.msra.mxu0 0
        %3033 = vmatprep.subr.bf16.mxu0 0
        %3034 = vmatpush1.bf16.msra.mxu0 0
        %3035 = vmatprep.subr.bf16.mxu0 0
        %3036 = vmatpush1.bf16.msra.mxu0 0
        %3037 = vmatprep.subr.bf16.mxu0 0
        %3038 = vmatpush1.bf16.msra.mxu0 0
        %3039 = vmatprep.subr.bf16.mxu0 0
        %3040 = vmatpush1.bf16.msra.mxu0 0
        %3041 = vmatprep.mubr.bf16.mxu0 0
        %3042 = vmatmul.mubr.bf16.gmra.mrb[0].mxu0 %v3007
        %v3043 = vpop.f32.mrb[0].mxu0
        %v3044 = vadd.f32 0.0, %v3043
        %v3045 = vpop.f32.mrb[0].mxu0
        %v3046 = vpop.f32.mrb[0].mxu0
        %v3047 = vadd.f32 0.0, %v3046
        %v3048 = vpop.f32.mrb[0].mxu0
        %3049 = vdwg.mxu0
        %v3054 = vunpack.c.l.b16 %v2932
        %v3055 = vunpack.c.l.b16 %v2933
        %v3056 = vunpack.c.l.b16 %v2934
        %v3057 = vunpack.c.l.b16 %v2935
        %v3058 = vpack.c.b16 %v3055, %v3054
        %v3059 = vpack.c.b16 %v3057, %v3056
        %v3063 = vsel %vm552, %v2931, 0
        %3065 = vmatprep.subr.bf16.mxu0 0
        %3066 = vmatpush1.bf16.msra.mxu0 %v3058
        %3067 = vmatprep.subr.bf16.mxu0 0
        %3068 = vmatpush1.bf16.msra.mxu0 %v3059
        %3069 = vmatprep.subr.bf16.mxu0 0
        %3070 = vmatpush1.bf16.msra.mxu0 0
        %3071 = vmatprep.subr.bf16.mxu0 0
        %3072 = vmatpush1.bf16.msra.mxu0 0
        %3073 = vmatprep.subr.bf16.mxu0 0
        %3074 = vmatpush1.bf16.msra.mxu0 0
        %3075 = vmatprep.subr.bf16.mxu0 0
        %3076 = vmatpush1.bf16.msra.mxu0 0
        %3077 = vmatprep.subr.bf16.mxu0 0
        %3078 = vmatpush1.bf16.msra.mxu0 0
        %3079 = vmatprep.subr.bf16.mxu0 0
        %3080 = vmatpush1.bf16.msra.mxu0 0
        %3081 = vmatprep.subr.bf16.mxu0 0
        %3082 = vmatpush1.bf16.msra.mxu0 0
        %3083 = vmatprep.subr.bf16.mxu0 0
        %3084 = vmatpush1.bf16.msra.mxu0 0
        %3085 = vmatprep.subr.bf16.mxu0 0
        %3086 = vmatpush1.bf16.msra.mxu0 0
        %3087 = vmatprep.subr.bf16.mxu0 0
        %3088 = vmatpush1.bf16.msra.mxu0 0
        %3089 = vmatprep.subr.bf16.mxu0 0
        %3090 = vmatpush1.bf16.msra.mxu0 0
        %3091 = vmatprep.subr.bf16.mxu0 0
        %3092 = vmatpush1.bf16.msra.mxu0 0
        %3093 = vmatprep.subr.bf16.mxu0 0
        %3094 = vmatpush1.bf16.msra.mxu0 0
        %3095 = vmatprep.subr.bf16.mxu0 0
        %3096 = vmatpush1.bf16.msra.mxu0 0
        %3097 = vmatprep.mubr.bf16.mxu0 0
        %3098 = vmatmul.mubr.bf16.gmra.mrb[0].mxu0 %v3063
        %v3099 = vpop.f32.mrb[0].mxu0
        %v3100 = vadd.f32 %v3044, %v3099
        %v3101 = vpop.f32.mrb[0].mxu0
        %v3102 = vpop.f32.mrb[0].mxu0
        %v3103 = vadd.f32 %v3047, %v3102
        %v3104 = vpop.f32.mrb[0].mxu0
        %3105 = vdwg.mxu0
        %s3106 = scalar_lea.vmem %s8, 16
        %v3107 = vld [vmem:[%s3106] sm:$0xf]
        %v3108 = vld [vmem:[%s3106 + $0x4] sm:$0xf]
        %v3111 = vunpack.c.l.b16 %v3107
        %v3112 = vunpack.c.l.b16 %v3108
        %v3113 = vpack.c.b16 %v3112, %v3111
        %v3115 = vsel %vm790, %v3113, 0
        %3117 = vmatprep.subr.bf16.mxu0 0
        %3118 = vmatpush1.bf16.msra.mxu0 %v2876
        %3119 = vmatprep.subr.bf16.mxu0 0
        %3120 = vmatpush1.bf16.msra.mxu0 %v2877
        %3121 = vmatprep.subr.bf16.mxu0 0
        %3122 = vmatpush1.bf16.msra.mxu0 %v2878
        %3123 = vmatprep.subr.bf16.mxu0 0
        %3124 = vmatpush1.bf16.msra.mxu0 %v2879
        %3125 = vmatprep.subr.bf16.mxu0 0
        %3126 = vmatpush1.bf16.msra.mxu0 0
        %3127 = vmatprep.subr.bf16.mxu0 0
        %3128 = vmatpush1.bf16.msra.mxu0 0
        %3129 = vmatprep.subr.bf16.mxu0 0
        %3130 = vmatpush1.bf16.msra.mxu0 0
        %3131 = vmatprep.subr.bf16.mxu0 0
        %3132 = vmatpush1.bf16.msra.mxu0 0
        %3133 = vmatprep.subr.bf16.mxu0 0
        %3134 = vmatpush1.bf16.msra.mxu0 0
        %3135 = vmatprep.subr.bf16.mxu0 0
        %3136 = vmatpush1.bf16.msra.mxu0 0
        %3137 = vmatprep.subr.bf16.mxu0 0
        %3138 = vmatpush1.bf16.msra.mxu0 0
        %3139 = vmatprep.subr.bf16.mxu0 0
        %3140 = vmatpush1.bf16.msra.mxu0 0
        %3141 = vmatprep.subr.bf16.mxu0 0
        %3142 = vmatpush1.bf16.msra.mxu0 0
        %3143 = vmatprep.subr.bf16.mxu0 0
        %3144 = vmatpush1.bf16.msra.mxu0 0
        %3145 = vmatprep.subr.bf16.mxu0 0
        %3146 = vmatpush1.bf16.msra.mxu0 0
        %3147 = vmatprep.subr.bf16.mxu0 0
        %3148 = vmatpush1.bf16.msra.mxu0 0
        %3149 = vmatprep.mubr.bf16.mxu0 0
        %3150 = vmatmul.mubr.bf16.gmra.mrb[0].mxu0 %v3115
        %v3151 = vpop.f32.mrb[0].mxu0
        %v3152 = vadd.f32 0.0, %v3151
        %v3153 = vpop.f32.mrb[0].mxu0
        %v3154 = vpop.f32.mrb[0].mxu0
        %v3155 = vadd.f32 0.0, %v3154
        %v3156 = vpop.f32.mrb[0].mxu0
        %3157 = vdwg.mxu0
        %v3158 = vpack.c.bf16 %v3155, %v3152
        %s3159 = scalar_lea.vmem %s9, 32
        %v3160 = vld [vmem:[%s3159] sm:$0xf]
        %v3161 = vld [vmem:[%s3159 + $0x4] sm:$0xf]
        %v3162 = vld [vmem:[%s3159 + $0x8] sm:$0xf]
        %v3163 = vld [vmem:[%s3159 + $0xc] sm:$0xf]
        %v3168 = vunpack.c.l.b16 %v3160
        %v3169 = vunpack.c.l.b16 %v3161
        %v3170 = vunpack.c.l.b16 %v3162
        %v3171 = vunpack.c.l.b16 %v3163
        %v3172 = vpack.c.b16 %v3169, %v3168
        %v3173 = vpack.c.b16 %v3171, %v3170
        %v3177 = vsel %vm552, %v3158, 0
        %3179 = vmatprep.subr.bf16.mxu0 0
        %3180 = vmatpush1.bf16.msra.mxu0 %v3172
        %3181 = vmatprep.subr.bf16.mxu0 0
        %3182 = vmatpush1.bf16.msra.mxu0 %v3173
        %3183 = vmatprep.subr.bf16.mxu0 0
        %3184 = vmatpush1.bf16.msra.mxu0 0
        %3185 = vmatprep.subr.bf16.mxu0 0
        %3186 = vmatpush1.bf16.msra.mxu0 0
        %3187 = vmatprep.subr.bf16.mxu0 0
        %3188 = vmatpush1.bf16.msra.mxu0 0
        %3189 = vmatprep.subr.bf16.mxu0 0
        %3190 = vmatpush1.bf16.msra.mxu0 0
        %3191 = vmatprep.subr.bf16.mxu0 0
        %3192 = vmatpush1.bf16.msra.mxu0 0
        %3193 = vmatprep.subr.bf16.mxu0 0
        %3194 = vmatpush1.bf16.msra.mxu0 0
        %3195 = vmatprep.subr.bf16.mxu0 0
        %3196 = vmatpush1.bf16.msra.mxu0 0
        %3197 = vmatprep.subr.bf16.mxu0 0
        %3198 = vmatpush1.bf16.msra.mxu0 0
        %3199 = vmatprep.subr.bf16.mxu0 0
        %3200 = vmatpush1.bf16.msra.mxu0 0
        %3201 = vmatprep.subr.bf16.mxu0 0
        %3202 = vmatpush1.bf16.msra.mxu0 0
        %3203 = vmatprep.subr.bf16.mxu0 0
        %3204 = vmatpush1.bf16.msra.mxu0 0
        %3205 = vmatprep.subr.bf16.mxu0 0
        %3206 = vmatpush1.bf16.msra.mxu0 0
        %3207 = vmatprep.subr.bf16.mxu0 0
        %3208 = vmatpush1.bf16.msra.mxu0 0
        %3209 = vmatprep.subr.bf16.mxu0 0
        %3210 = vmatpush1.bf16.msra.mxu0 0
        %3211 = vmatprep.mubr.bf16.mxu0 0
        %3212 = vmatmul.mubr.bf16.gmra.mrb[0].mxu0 %v3177
        %v3213 = vpop.f32.mrb[0].mxu0
        %v3214 = vadd.f32 0.0, %v3213
        %v3215 = vpop.f32.mrb[0].mxu0
        %v3216 = vpop.f32.mrb[0].mxu0
        %v3217 = vadd.f32 0.0, %v3216
        %v3218 = vpop.f32.mrb[0].mxu0
        %3219 = vdwg.mxu0
        %v3220 = vadd.f32 %v3100, %v3214
        %v3221 = vadd.f32 %v3103, %v3217
        %s3222 = scalar_lea.vmem %s8, 24
        %v3223 = vld [vmem:[%s3222] sm:$0xf]
        %v3224 = vld [vmem:[%s3222 + $0x4] sm:$0xf]
        %v3227 = vunpack.c.l.b16 %v3223
        %v3228 = vunpack.c.l.b16 %v3224
        %v3229 = vpack.c.b16 %v3228, %v3227
        %v3231 = vsel %vm790, %v3229, 0
        %3233 = vmatprep.subr.bf16.mxu0 0
        %3234 = vmatpush1.bf16.msra.mxu0 %v2876
        %3235 = vmatprep.subr.bf16.mxu0 0
        %3236 = vmatpush1.bf16.msra.mxu0 %v2877
        %3237 = vmatprep.subr.bf16.mxu0 0
        %3238 = vmatpush1.bf16.msra.mxu0 %v2878
        %3239 = vmatprep.subr.bf16.mxu0 0
        %3240 = vmatpush1.bf16.msra.mxu0 %v2879
        %3241 = vmatprep.subr.bf16.mxu0 0
        %3242 = vmatpush1.bf16.msra.mxu0 0
        %3243 = vmatprep.subr.bf16.mxu0 0
        %3244 = vmatpush1.bf16.msra.mxu0 0
        %3245 = vmatprep.subr.bf16.mxu0 0
        %3246 = vmatpush1.bf16.msra.mxu0 0
        %3247 = vmatprep.subr.bf16.mxu0 0
        %3248 = vmatpush1.bf16.msra.mxu0 0
        %3249 = vmatprep.subr.bf16.mxu0 0
        %3250 = vmatpush1.bf16.msra.mxu0 0
        %3251 = vmatprep.subr.bf16.mxu0 0
        %3252 = vmatpush1.bf16.msra.mxu0 0
        %3253 = vmatprep.subr.bf16.mxu0 0
        %3254 = vmatpush1.bf16.msra.mxu0 0
        %3255 = vmatprep.subr.bf16.mxu0 0
        %3256 = vmatpush1.bf16.msra.mxu0 0
        %3257 = vmatprep.subr.bf16.mxu0 0
        %3258 = vmatpush1.bf16.msra.mxu0 0
        %3259 = vmatprep.subr.bf16.mxu0 0
        %3260 = vmatpush1.bf16.msra.mxu0 0
        %3261 = vmatprep.subr.bf16.mxu0 0
        %3262 = vmatpush1.bf16.msra.mxu0 0
        %3263 = vmatprep.subr.bf16.mxu0 0
        %3264 = vmatpush1.bf16.msra.mxu0 0
        %3265 = vmatprep.mubr.bf16.mxu0 0
        %3266 = vmatmul.mubr.bf16.gmra.mrb[0].mxu0 %v3231
        %v3267 = vpop.f32.mrb[0].mxu0
        %v3268 = vadd.f32 0.0, %v3267
        %v3269 = vpop.f32.mrb[0].mxu0
        %v3270 = vpop.f32.mrb[0].mxu0
        %v3271 = vadd.f32 0.0, %v3270
        %v3272 = vpop.f32.mrb[0].mxu0
        %3273 = vdwg.mxu0
        %v3274 = vpack.c.bf16 %v3271, %v3268
        %s3275 = scalar_lea.vmem %s9, 48
        %v3276 = vld [vmem:[%s3275] sm:$0xf]
        %v3277 = vld [vmem:[%s3275 + $0x4] sm:$0xf]
        %v3278 = vld [vmem:[%s3275 + $0x8] sm:$0xf]
        %v3279 = vld [vmem:[%s3275 + $0xc] sm:$0xf]
        %v3284 = vunpack.c.l.b16 %v3276
        %v3285 = vunpack.c.l.b16 %v3277
        %v3286 = vunpack.c.l.b16 %v3278
        %v3287 = vunpack.c.l.b16 %v3279
        %v3288 = vpack.c.b16 %v3285, %v3284
        %v3289 = vpack.c.b16 %v3287, %v3286
        %v3293 = vsel %vm552, %v3274, 0
        %3295 = vmatprep.subr.bf16.mxu0 0
        %3296 = vmatpush1.bf16.msra.mxu0 %v3288
        %3297 = vmatprep.subr.bf16.mxu0 0
        %3298 = vmatpush1.bf16.msra.mxu0 %v3289
        %3299 = vmatprep.subr.bf16.mxu0 0
        %3300 = vmatpush1.bf16.msra.mxu0 0
        %3301 = vmatprep.subr.bf16.mxu0 0
        %3302 = vmatpush1.bf16.msra.mxu0 0
        %3303 = vmatprep.subr.bf16.mxu0 0
        %3304 = vmatpush1.bf16.msra.mxu0 0
        %3305 = vmatprep.subr.bf16.mxu0 0
        %3306 = vmatpush1.bf16.msra.mxu0 0
        %3307 = vmatprep.subr.bf16.mxu0 0
        %3308 = vmatpush1.bf16.msra.mxu0 0
        %3309 = vmatprep.subr.bf16.mxu0 0
        %3310 = vmatpush1.bf16.msra.mxu0 0
        %3311 = vmatprep.subr.bf16.mxu0 0
        %3312 = vmatpush1.bf16.msra.mxu0 0
        %3313 = vmatprep.subr.bf16.mxu0 0
        %3314 = vmatpush1.bf16.msra.mxu0 0
        %3315 = vmatprep.subr.bf16.mxu0 0
        %3316 = vmatpush1.bf16.msra.mxu0 0
        %3317 = vmatprep.subr.bf16.mxu0 0
        %3318 = vmatpush1.bf16.msra.mxu0 0
        %3319 = vmatprep.subr.bf16.mxu0 0
        %3320 = vmatpush1.bf16.msra.mxu0 0
        %3321 = vmatprep.subr.bf16.mxu0 0
        %3322 = vmatpush1.bf16.msra.mxu0 0
        %3323 = vmatprep.subr.bf16.mxu0 0
        %3324 = vmatpush1.bf16.msra.mxu0 0
        %3325 = vmatprep.subr.bf16.mxu0 0
        %3326 = vmatpush1.bf16.msra.mxu0 0
        %3327 = vmatprep.mubr.bf16.mxu0 0
        %3328 = vmatmul.mubr.bf16.gmra.mrb[0].mxu0 %v3293
        %v3329 = vpop.f32.mrb[0].mxu0
        %v3330 = vadd.f32 0.0, %v3329
        %v3331 = vpop.f32.mrb[0].mxu0
        %v3332 = vpop.f32.mrb[0].mxu0
        %v3333 = vadd.f32 0.0, %v3332
        %v3334 = vpop.f32.mrb[0].mxu0
        %3335 = vdwg.mxu0
        %v3336 = vadd.f32 %v3220, %v3330
        %v3337 = vadd.f32 %v3221, %v3333
        %s3338 = scalar_lea.vmem %s8, 32
        %v3339 = vld [vmem:[%s3338] sm:$0xf]
        %v3340 = vld [vmem:[%s3338 + $0x4] sm:$0xf]
        %v3343 = vunpack.c.l.b16 %v3339
        %v3344 = vunpack.c.l.b16 %v3340
        %v3345 = vpack.c.b16 %v3344, %v3343
        %v3347 = vsel %vm790, %v3345, 0
        %3349 = vmatprep.subr.bf16.mxu0 0
        %3350 = vmatpush1.bf16.msra.mxu0 %v2876
        %3351 = vmatprep.subr.bf16.mxu0 0
        %3352 = vmatpush1.bf16.msra.mxu0 %v2877
        %3353 = vmatprep.subr.bf16.mxu0 0
        %3354 = vmatpush1.bf16.msra.mxu0 %v2878
        %3355 = vmatprep.subr.bf16.mxu0 0
        %3356 = vmatpush1.bf16.msra.mxu0 %v2879
        %3357 = vmatprep.subr.bf16.mxu0 0
        %3358 = vmatpush1.bf16.msra.mxu0 0
        %3359 = vmatprep.subr.bf16.mxu0 0
        %3360 = vmatpush1.bf16.msra.mxu0 0
        %3361 = vmatprep.subr.bf16.mxu0 0
        %3362 = vmatpush1.bf16.msra.mxu0 0
        %3363 = vmatprep.subr.bf16.mxu0 0
        %3364 = vmatpush1.bf16.msra.mxu0 0
        %3365 = vmatprep.subr.bf16.mxu0 0
        %3366 = vmatpush1.bf16.msra.mxu0 0
        %3367 = vmatprep.subr.bf16.mxu0 0
        %3368 = vmatpush1.bf16.msra.mxu0 0
        %3369 = vmatprep.subr.bf16.mxu0 0
        %3370 = vmatpush1.bf16.msra.mxu0 0
        %3371 = vmatprep.subr.bf16.mxu0 0
        %3372 = vmatpush1.bf16.msra.mxu0 0
        %3373 = vmatprep.subr.bf16.mxu0 0
        %3374 = vmatpush1.bf16.msra.mxu0 0
        %3375 = vmatprep.subr.bf16.mxu0 0
        %3376 = vmatpush1.bf16.msra.mxu0 0
        %3377 = vmatprep.subr.bf16.mxu0 0
        %3378 = vmatpush1.bf16.msra.mxu0 0
        %3379 = vmatprep.subr.bf16.mxu0 0
        %3380 = vmatpush1.bf16.msra.mxu0 0
        %3381 = vmatprep.mubr.bf16.mxu0 0
        %3382 = vmatmul.mubr.bf16.gmra.mrb[0].mxu0 %v3347
        %v3383 = vpop.f32.mrb[0].mxu0
        %v3384 = vadd.f32 0.0, %v3383
        %v3385 = vpop.f32.mrb[0].mxu0
        %v3386 = vpop.f32.mrb[0].mxu0
        %v3387 = vadd.f32 0.0, %v3386
        %v3388 = vpop.f32.mrb[0].mxu0
        %3389 = vdwg.mxu0
        %v3390 = vpack.c.bf16 %v3387, %v3384
        %s3391 = scalar_lea.vmem %s9, 64
        %v3392 = vld [vmem:[%s3391] sm:$0xf]
        %v3393 = vld [vmem:[%s3391 + $0x4] sm:$0xf]
        %v3394 = vld [vmem:[%s3391 + $0x8] sm:$0xf]
        %v3395 = vld [vmem:[%s3391 + $0xc] sm:$0xf]
        %v3400 = vunpack.c.l.b16 %v3392
        %v3401 = vunpack.c.l.b16 %v3393
        %v3402 = vunpack.c.l.b16 %v3394
        %v3403 = vunpack.c.l.b16 %v3395
        %v3404 = vpack.c.b16 %v3401, %v3400
        %v3405 = vpack.c.b16 %v3403, %v3402
        %v3409 = vsel %vm552, %v3390, 0
        %3411 = vmatprep.subr.bf16.mxu0 0
        %3412 = vmatpush1.bf16.msra.mxu0 %v3404
        %3413 = vmatprep.subr.bf16.mxu0 0
        %3414 = vmatpush1.bf16.msra.mxu0 %v3405
        %3415 = vmatprep.subr.bf16.mxu0 0
        %3416 = vmatpush1.bf16.msra.mxu0 0
        %3417 = vmatprep.subr.bf16.mxu0 0
        %3418 = vmatpush1.bf16.msra.mxu0 0
        %3419 = vmatprep.subr.bf16.mxu0 0
        %3420 = vmatpush1.bf16.msra.mxu0 0
        %3421 = vmatprep.subr.bf16.mxu0 0
        %3422 = vmatpush1.bf16.msra.mxu0 0
        %3423 = vmatprep.subr.bf16.mxu0 0
        %3424 = vmatpush1.bf16.msra.mxu0 0
        %3425 = vmatprep.subr.bf16.mxu0 0
        %3426 = vmatpush1.bf16.msra.mxu0 0
        %3427 = vmatprep.subr.bf16.mxu0 0
        %3428 = vmatpush1.bf16.msra.mxu0 0
        %3429 = vmatprep.subr.bf16.mxu0 0
        %3430 = vmatpush1.bf16.msra.mxu0 0
        %3431 = vmatprep.subr.bf16.mxu0 0
        %3432 = vmatpush1.bf16.msra.mxu0 0
        %3433 = vmatprep.subr.bf16.mxu0 0
        %3434 = vmatpush1.bf16.msra.mxu0 0
        %3435 = vmatprep.subr.bf16.mxu0 0
        %3436 = vmatpush1.bf16.msra.mxu0 0
        %3437 = vmatprep.subr.bf16.mxu0 0
        %3438 = vmatpush1.bf16.msra.mxu0 0
        %3439 = vmatprep.subr.bf16.mxu0 0
        %3440 = vmatpush1.bf16.msra.mxu0 0
        %3441 = vmatprep.subr.bf16.mxu0 0
        %3442 = vmatpush1.bf16.msra.mxu0 0
        %3443 = vmatprep.mubr.bf16.mxu0 0
        %3444 = vmatmul.mubr.bf16.gmra.mrb[0].mxu0 %v3409
        %v3445 = vpop.f32.mrb[0].mxu0
        %v3446 = vadd.f32 0.0, %v3445
        %v3447 = vpop.f32.mrb[0].mxu0
        %v3448 = vpop.f32.mrb[0].mxu0
        %v3449 = vadd.f32 0.0, %v3448
        %v3450 = vpop.f32.mrb[0].mxu0
        %3451 = vdwg.mxu0
        %v3452 = vadd.f32 %v3336, %v3446
        %v3453 = vadd.f32 %v3337, %v3449
        %s3454 = scalar_lea.vmem %s8, 40
        %v3455 = vld [vmem:[%s3454] sm:$0xf]
        %v3456 = vld [vmem:[%s3454 + $0x4] sm:$0xf]
        %v3459 = vunpack.c.l.b16 %v3455
        %v3460 = vunpack.c.l.b16 %v3456
        %v3461 = vpack.c.b16 %v3460, %v3459
        %v3463 = vsel %vm790, %v3461, 0
        %3465 = vmatprep.subr.bf16.mxu0 0
        %3466 = vmatpush1.bf16.msra.mxu0 %v2876
        %3467 = vmatprep.subr.bf16.mxu0 0
        %3468 = vmatpush1.bf16.msra.mxu0 %v2877
        %3469 = vmatprep.subr.bf16.mxu0 0
        %3470 = vmatpush1.bf16.msra.mxu0 %v2878
        %3471 = vmatprep.subr.bf16.mxu0 0
        %3472 = vmatpush1.bf16.msra.mxu0 %v2879
        %3473 = vmatprep.subr.bf16.mxu0 0
        %3474 = vmatpush1.bf16.msra.mxu0 0
        %3475 = vmatprep.subr.bf16.mxu0 0
        %3476 = vmatpush1.bf16.msra.mxu0 0
        %3477 = vmatprep.subr.bf16.mxu0 0
        %3478 = vmatpush1.bf16.msra.mxu0 0
        %3479 = vmatprep.subr.bf16.mxu0 0
        %3480 = vmatpush1.bf16.msra.mxu0 0
        %3481 = vmatprep.subr.bf16.mxu0 0
        %3482 = vmatpush1.bf16.msra.mxu0 0
        %3483 = vmatprep.subr.bf16.mxu0 0
        %3484 = vmatpush1.bf16.msra.mxu0 0
        %3485 = vmatprep.subr.bf16.mxu0 0
        %3486 = vmatpush1.bf16.msra.mxu0 0
        %3487 = vmatprep.subr.bf16.mxu0 0
        %3488 = vmatpush1.bf16.msra.mxu0 0
        %3489 = vmatprep.subr.bf16.mxu0 0
        %3490 = vmatpush1.bf16.msra.mxu0 0
        %3491 = vmatprep.subr.bf16.mxu0 0
        %3492 = vmatpush1.bf16.msra.mxu0 0
        %3493 = vmatprep.subr.bf16.mxu0 0
        %3494 = vmatpush1.bf16.msra.mxu0 0
        %3495 = vmatprep.subr.bf16.mxu0 0
        %3496 = vmatpush1.bf16.msra.mxu0 0
        %3497 = vmatprep.mubr.bf16.mxu0 0
        %3498 = vmatmul.mubr.bf16.gmra.mrb[0].mxu0 %v3463
        %v3499 = vpop.f32.mrb[0].mxu0
        %v3500 = vadd.f32 0.0, %v3499
        %v3501 = vpop.f32.mrb[0].mxu0
        %v3502 = vpop.f32.mrb[0].mxu0
        %v3503 = vadd.f32 0.0, %v3502
        %v3504 = vpop.f32.mrb[0].mxu0
        %3505 = vdwg.mxu0
        %v3506 = vpack.c.bf16 %v3503, %v3500
        %s3507 = scalar_lea.vmem %s9, 80
        %v3508 = vld [vmem:[%s3507] sm:$0xf]
        %v3509 = vld [vmem:[%s3507 + $0x4] sm:$0xf]
        %v3510 = vld [vmem:[%s3507 + $0x8] sm:$0xf]
        %v3511 = vld [vmem:[%s3507 + $0xc] sm:$0xf]
        %v3516 = vunpack.c.l.b16 %v3508
        %v3517 = vunpack.c.l.b16 %v3509
        %v3518 = vunpack.c.l.b16 %v3510
        %v3519 = vunpack.c.l.b16 %v3511
        %v3520 = vpack.c.b16 %v3517, %v3516
        %v3521 = vpack.c.b16 %v3519, %v3518
        %v3525 = vsel %vm552, %v3506, 0
        %3527 = vmatprep.subr.bf16.mxu0 0
        %3528 = vmatpush1.bf16.msra.mxu0 %v3520
        %3529 = vmatprep.subr.bf16.mxu0 0
        %3530 = vmatpush1.bf16.msra.mxu0 %v3521
        %3531 = vmatprep.subr.bf16.mxu0 0
        %3532 = vmatpush1.bf16.msra.mxu0 0
        %3533 = vmatprep.subr.bf16.mxu0 0
        %3534 = vmatpush1.bf16.msra.mxu0 0
        %3535 = vmatprep.subr.bf16.mxu0 0
        %3536 = vmatpush1.bf16.msra.mxu0 0
        %3537 = vmatprep.subr.bf16.mxu0 0
        %3538 = vmatpush1.bf16.msra.mxu0 0
        %3539 = vmatprep.subr.bf16.mxu0 0
        %3540 = vmatpush1.bf16.msra.mxu0 0
        %3541 = vmatprep.subr.bf16.mxu0 0
        %3542 = vmatpush1.bf16.msra.mxu0 0
        %3543 = vmatprep.subr.bf16.mxu0 0
        %3544 = vmatpush1.bf16.msra.mxu0 0
        %3545 = vmatprep.subr.bf16.mxu0 0
        %3546 = vmatpush1.bf16.msra.mxu0 0
        %3547 = vmatprep.subr.bf16.mxu0 0
        %3548 = vmatpush1.bf16.msra.mxu0 0
        %3549 = vmatprep.subr.bf16.mxu0 0
        %3550 = vmatpush1.bf16.msra.mxu0 0
        %3551 = vmatprep.subr.bf16.mxu0 0
        %3552 = vmatpush1.bf16.msra.mxu0 0
        %3553 = vmatprep.subr.bf16.mxu0 0
        %3554 = vmatpush1.bf16.msra.mxu0 0
        %3555 = vmatprep.subr.bf16.mxu0 0
        %3556 = vmatpush1.bf16.msra.mxu0 0
        %3557 = vmatprep.subr.bf16.mxu0 0
        %3558 = vmatpush1.bf16.msra.mxu0 0
        %3559 = vmatprep.mubr.bf16.mxu0 0
        %3560 = vmatmul.mubr.bf16.gmra.mrb[0].mxu0 %v3525
        %v3561 = vpop.f32.mrb[0].mxu0
        %v3562 = vadd.f32 0.0, %v3561
        %v3563 = vpop.f32.mrb[0].mxu0
        %v3564 = vpop.f32.mrb[0].mxu0
        %v3565 = vadd.f32 0.0, %v3564
        %v3566 = vpop.f32.mrb[0].mxu0
        %3567 = vdwg.mxu0
        %v3568 = vadd.f32 %v3452, %v3562
        %v3569 = vadd.f32 %v3453, %v3565
        %s3570 = scalar_lea.vmem %s8, 48
        %v3571 = vld [vmem:[%s3570] sm:$0xf]
        %v3572 = vld [vmem:[%s3570 + $0x4] sm:$0xf]
        %v3575 = vunpack.c.l.b16 %v3571
        %v3576 = vunpack.c.l.b16 %v3572
        %v3577 = vpack.c.b16 %v3576, %v3575
        %v3579 = vsel %vm790, %v3577, 0
        %3581 = vmatprep.subr.bf16.mxu0 0
        %3582 = vmatpush1.bf16.msra.mxu0 %v2876
        %3583 = vmatprep.subr.bf16.mxu0 0
        %3584 = vmatpush1.bf16.msra.mxu0 %v2877
        %3585 = vmatprep.subr.bf16.mxu0 0
        %3586 = vmatpush1.bf16.msra.mxu0 %v2878
        %3587 = vmatprep.subr.bf16.mxu0 0
        %3588 = vmatpush1.bf16.msra.mxu0 %v2879
        %3589 = vmatprep.subr.bf16.mxu0 0
        %3590 = vmatpush1.bf16.msra.mxu0 0
        %3591 = vmatprep.subr.bf16.mxu0 0
        %3592 = vmatpush1.bf16.msra.mxu0 0
        %3593 = vmatprep.subr.bf16.mxu0 0
        %3594 = vmatpush1.bf16.msra.mxu0 0
        %3595 = vmatprep.subr.bf16.mxu0 0
        %3596 = vmatpush1.bf16.msra.mxu0 0
        %3597 = vmatprep.subr.bf16.mxu0 0
        %3598 = vmatpush1.bf16.msra.mxu0 0
        %3599 = vmatprep.subr.bf16.mxu0 0
        %3600 = vmatpush1.bf16.msra.mxu0 0
        %3601 = vmatprep.subr.bf16.mxu0 0
        %3602 = vmatpush1.bf16.msra.mxu0 0
        %3603 = vmatprep.subr.bf16.mxu0 0
        %3604 = vmatpush1.bf16.msra.mxu0 0
        %3605 = vmatprep.subr.bf16.mxu0 0
        %3606 = vmatpush1.bf16.msra.mxu0 0
        %3607 = vmatprep.subr.bf16.mxu0 0
        %3608 = vmatpush1.bf16.msra.mxu0 0
        %3609 = vmatprep.subr.bf16.mxu0 0
        %3610 = vmatpush1.bf16.msra.mxu0 0
        %3611 = vmatprep.subr.bf16.mxu0 0
        %3612 = vmatpush1.bf16.msra.mxu0 0
        %3613 = vmatprep.mubr.bf16.mxu0 0
        %3614 = vmatmul.mubr.bf16.gmra.mrb[0].mxu0 %v3579
        %v3615 = vpop.f32.mrb[0].mxu0
        %v3616 = vadd.f32 0.0, %v3615
        %v3617 = vpop.f32.mrb[0].mxu0
        %v3618 = vpop.f32.mrb[0].mxu0
        %v3619 = vadd.f32 0.0, %v3618
        %v3620 = vpop.f32.mrb[0].mxu0
        %3621 = vdwg.mxu0
        %v3622 = vpack.c.bf16 %v3619, %v3616
        %s3623 = scalar_lea.vmem %s9, 96
        %v3624 = vld [vmem:[%s3623] sm:$0xf]
        %v3625 = vld [vmem:[%s3623 + $0x4] sm:$0xf]
        %v3626 = vld [vmem:[%s3623 + $0x8] sm:$0xf]
        %v3627 = vld [vmem:[%s3623 + $0xc] sm:$0xf]
        %v3632 = vunpack.c.l.b16 %v3624
        %v3633 = vunpack.c.l.b16 %v3625
        %v3634 = vunpack.c.l.b16 %v3626
        %v3635 = vunpack.c.l.b16 %v3627
        %v3636 = vpack.c.b16 %v3633, %v3632
        %v3637 = vpack.c.b16 %v3635, %v3634
        %v3641 = vsel %vm552, %v3622, 0
        %3643 = vmatprep.subr.bf16.mxu0 0
        %3644 = vmatpush1.bf16.msra.mxu0 %v3636
        %3645 = vmatprep.subr.bf16.mxu0 0
        %3646 = vmatpush1.bf16.msra.mxu0 %v3637
        %3647 = vmatprep.subr.bf16.mxu0 0
        %3648 = vmatpush1.bf16.msra.mxu0 0
        %3649 = vmatprep.subr.bf16.mxu0 0
        %3650 = vmatpush1.bf16.msra.mxu0 0
        %3651 = vmatprep.subr.bf16.mxu0 0
        %3652 = vmatpush1.bf16.msra.mxu0 0
        %3653 = vmatprep.subr.bf16.mxu0 0
        %3654 = vmatpush1.bf16.msra.mxu0 0
        %3655 = vmatprep.subr.bf16.mxu0 0
        %3656 = vmatpush1.bf16.msra.mxu0 0
        %3657 = vmatprep.subr.bf16.mxu0 0
        %3658 = vmatpush1.bf16.msra.mxu0 0
        %3659 = vmatprep.subr.bf16.mxu0 0
        %3660 = vmatpush1.bf16.msra.mxu0 0
        %3661 = vmatprep.subr.bf16.mxu0 0
        %3662 = vmatpush1.bf16.msra.mxu0 0
        %3663 = vmatprep.subr.bf16.mxu0 0
        %3664 = vmatpush1.bf16.msra.mxu0 0
        %3665 = vmatprep.subr.bf16.mxu0 0
        %3666 = vmatpush1.bf16.msra.mxu0 0
        %3667 = vmatprep.subr.bf16.mxu0 0
        %3668 = vmatpush1.bf16.msra.mxu0 0
        %3669 = vmatprep.subr.bf16.mxu0 0
        %3670 = vmatpush1.bf16.msra.mxu0 0
        %3671 = vmatprep.subr.bf16.mxu0 0
        %3672 = vmatpush1.bf16.msra.mxu0 0
        %3673 = vmatprep.subr.bf16.mxu0 0
        %3674 = vmatpush1.bf16.msra.mxu0 0
        %3675 = vmatprep.mubr.bf16.mxu0 0
        %3676 = vmatmul.mubr.bf16.gmra.mrb[0].mxu0 %v3641
        %v3677 = vpop.f32.mrb[0].mxu0
        %v3678 = vadd.f32 0.0, %v3677
        %v3679 = vpop.f32.mrb[0].mxu0
        %v3680 = vpop.f32.mrb[0].mxu0
        %v3681 = vadd.f32 0.0, %v3680
        %v3682 = vpop.f32.mrb[0].mxu0
        %3683 = vdwg.mxu0
        %v3684 = vadd.f32 %v3568, %v3678
        %v3685 = vadd.f32 %v3569, %v3681
        %s3686 = scalar_lea.vmem %s8, 56
        %v3687 = vld [vmem:[%s3686] sm:$0xf]
        %v3688 = vld [vmem:[%s3686 + $0x4] sm:$0xf]
        %v3691 = vunpack.c.l.b16 %v3687
        %v3692 = vunpack.c.l.b16 %v3688
        %v3693 = vpack.c.b16 %v3692, %v3691
        %v3695 = vsel %vm790, %v3693, 0
        %3697 = vmatprep.subr.bf16.mxu0 0
        %3698 = vmatpush1.bf16.msra.mxu0 %v2876
        %3699 = vmatprep.subr.bf16.mxu0 0
        %3700 = vmatpush1.bf16.msra.mxu0 %v2877
        %3701 = vmatprep.subr.bf16.mxu0 0
        %3702 = vmatpush1.bf16.msra.mxu0 %v2878
        %3703 = vmatprep.subr.bf16.mxu0 0
        %3704 = vmatpush1.bf16.msra.mxu0 %v2879
        %3705 = vmatprep.subr.bf16.mxu0 0
        %3706 = vmatpush1.bf16.msra.mxu0 0
        %3707 = vmatprep.subr.bf16.mxu0 0
        %3708 = vmatpush1.bf16.msra.mxu0 0
        %3709 = vmatprep.subr.bf16.mxu0 0
        %3710 = vmatpush1.bf16.msra.mxu0 0
        %3711 = vmatprep.subr.bf16.mxu0 0
        %3712 = vmatpush1.bf16.msra.mxu0 0
        %3713 = vmatprep.subr.bf16.mxu0 0
        %3714 = vmatpush1.bf16.msra.mxu0 0
        %3715 = vmatprep.subr.bf16.mxu0 0
        %3716 = vmatpush1.bf16.msra.mxu0 0
        %3717 = vmatprep.subr.bf16.mxu0 0
        %3718 = vmatpush1.bf16.msra.mxu0 0
        %3719 = vmatprep.subr.bf16.mxu0 0
        %3720 = vmatpush1.bf16.msra.mxu0 0
        %3721 = vmatprep.subr.bf16.mxu0 0
        %3722 = vmatpush1.bf16.msra.mxu0 0
        %3723 = vmatprep.subr.bf16.mxu0 0
        %3724 = vmatpush1.bf16.msra.mxu0 0
        %3725 = vmatprep.subr.bf16.mxu0 0
        %3726 = vmatpush1.bf16.msra.mxu0 0
        %3727 = vmatprep.subr.bf16.mxu0 0
        %3728 = vmatpush1.bf16.msra.mxu0 0
        %3729 = vmatprep.mubr.bf16.mxu0 0
        %3730 = vmatmul.mubr.bf16.gmra.mrb[0].mxu0 %v3695
        %v3731 = vpop.f32.mrb[0].mxu0
        %v3732 = vadd.f32 0.0, %v3731
        %v3733 = vpop.f32.mrb[0].mxu0
        %v3734 = vpop.f32.mrb[0].mxu0
        %v3735 = vadd.f32 0.0, %v3734
        %v3736 = vpop.f32.mrb[0].mxu0
        %3737 = vdwg.mxu0
        %v3738 = vpack.c.bf16 %v3735, %v3732
        %s3739 = scalar_lea.vmem %s9, 112
        %v3740 = vld [vmem:[%s3739] sm:$0xf]
        %v3741 = vld [vmem:[%s3739 + $0x4] sm:$0xf]
        %v3742 = vld [vmem:[%s3739 + $0x8] sm:$0xf]
        %v3743 = vld [vmem:[%s3739 + $0xc] sm:$0xf]
        %v3748 = vunpack.c.l.b16 %v3740
        %v3749 = vunpack.c.l.b16 %v3741
        %v3750 = vunpack.c.l.b16 %v3742
        %v3751 = vunpack.c.l.b16 %v3743
        %v3752 = vpack.c.b16 %v3749, %v3748
        %v3753 = vpack.c.b16 %v3751, %v3750
        %v3757 = vsel %vm552, %v3738, 0
        %3759 = vmatprep.subr.bf16.mxu0 0
        %3760 = vmatpush1.bf16.msra.mxu0 %v3752
        %3761 = vmatprep.subr.bf16.mxu0 0
        %3762 = vmatpush1.bf16.msra.mxu0 %v3753
        %3763 = vmatprep.subr.bf16.mxu0 0
        %3764 = vmatpush1.bf16.msra.mxu0 0
        %3765 = vmatprep.subr.bf16.mxu0 0
        %3766 = vmatpush1.bf16.msra.mxu0 0
        %3767 = vmatprep.subr.bf16.mxu0 0
        %3768 = vmatpush1.bf16.msra.mxu0 0
        %3769 = vmatprep.subr.bf16.mxu0 0
        %3770 = vmatpush1.bf16.msra.mxu0 0
        %3771 = vmatprep.subr.bf16.mxu0 0
        %3772 = vmatpush1.bf16.msra.mxu0 0
        %3773 = vmatprep.subr.bf16.mxu0 0
        %3774 = vmatpush1.bf16.msra.mxu0 0
        %3775 = vmatprep.subr.bf16.mxu0 0
        %3776 = vmatpush1.bf16.msra.mxu0 0
        %3777 = vmatprep.subr.bf16.mxu0 0
        %3778 = vmatpush1.bf16.msra.mxu0 0
        %3779 = vmatprep.subr.bf16.mxu0 0
        %3780 = vmatpush1.bf16.msra.mxu0 0
        %3781 = vmatprep.subr.bf16.mxu0 0
        %3782 = vmatpush1.bf16.msra.mxu0 0
        %3783 = vmatprep.subr.bf16.mxu0 0
        %3784 = vmatpush1.bf16.msra.mxu0 0
        %3785 = vmatprep.subr.bf16.mxu0 0
        %3786 = vmatpush1.bf16.msra.mxu0 0
        %3787 = vmatprep.subr.bf16.mxu0 0
        %3788 = vmatpush1.bf16.msra.mxu0 0
        %3789 = vmatprep.subr.bf16.mxu0 0
        %3790 = vmatpush1.bf16.msra.mxu0 0
        %3791 = vmatprep.mubr.bf16.mxu0 0
        %3792 = vmatmul.mubr.bf16.gmra.mrb[0].mxu0 %v3757
        %v3793 = vpop.f32.mrb[0].mxu0
        %v3794 = vadd.f32 0.0, %v3793
        %v3795 = vpop.f32.mrb[0].mxu0
        %v3796 = vpop.f32.mrb[0].mxu0
        %v3797 = vadd.f32 0.0, %v3796
        %v3798 = vpop.f32.mrb[0].mxu0
        %3799 = vdwg.mxu0
        %v3800 = vadd.f32 %v3684, %v3794
        %v3801 = vadd.f32 %v3685, %v3797
        %s3802 = scalar_lea.vmem %s8, 64
        %v3803 = vld [vmem:[%s3802] sm:$0xf]
        %v3804 = vld [vmem:[%s3802 + $0x4] sm:$0xf]
        %v3807 = vunpack.c.l.b16 %v3803
        %v3808 = vunpack.c.l.b16 %v3804
        %v3809 = vpack.c.b16 %v3808, %v3807
        %v3811 = vsel %vm790, %v3809, 0
        %3813 = vmatprep.subr.bf16.mxu0 0
        %3814 = vmatpush1.bf16.msra.mxu0 %v2876
        %3815 = vmatprep.subr.bf16.mxu0 0
        %3816 = vmatpush1.bf16.msra.mxu0 %v2877
        %3817 = vmatprep.subr.bf16.mxu0 0
        %3818 = vmatpush1.bf16.msra.mxu0 %v2878
        %3819 = vmatprep.subr.bf16.mxu0 0
        %3820 = vmatpush1.bf16.msra.mxu0 %v2879
        %3821 = vmatprep.subr.bf16.mxu0 0
        %3822 = vmatpush1.bf16.msra.mxu0 0
        %3823 = vmatprep.subr.bf16.mxu0 0
        %3824 = vmatpush1.bf16.msra.mxu0 0
        %3825 = vmatprep.subr.bf16.mxu0 0
        %3826 = vmatpush1.bf16.msra.mxu0 0
        %3827 = vmatprep.subr.bf16.mxu0 0
        %3828 = vmatpush1.bf16.msra.mxu0 0
        %3829 = vmatprep.subr.bf16.mxu0 0
        %3830 = vmatpush1.bf16.msra.mxu0 0
        %3831 = vmatprep.subr.bf16.mxu0 0
        %3832 = vmatpush1.bf16.msra.mxu0 0
        %3833 = vmatprep.subr.bf16.mxu0 0
        %3834 = vmatpush1.bf16.msra.mxu0 0
        %3835 = vmatprep.subr.bf16.mxu0 0
        %3836 = vmatpush1.bf16.msra.mxu0 0
        %3837 = vmatprep.subr.bf16.mxu0 0
        %3838 = vmatpush1.bf16.msra.mxu0 0
        %3839 = vmatprep.subr.bf16.mxu0 0
        %3840 = vmatpush1.bf16.msra.mxu0 0
        %3841 = vmatprep.subr.bf16.mxu0 0
        %3842 = vmatpush1.bf16.msra.mxu0 0
        %3843 = vmatprep.subr.bf16.mxu0 0
        %3844 = vmatpush1.bf16.msra.mxu0 0
        %3845 = vmatprep.mubr.bf16.mxu0 0
        %3846 = vmatmul.mubr.bf16.gmra.mrb[0].mxu0 %v3811
        %v3847 = vpop.f32.mrb[0].mxu0
        %v3848 = vadd.f32 0.0, %v3847
        %v3849 = vpop.f32.mrb[0].mxu0
        %v3850 = vpop.f32.mrb[0].mxu0
        %v3851 = vadd.f32 0.0, %v3850
        %v3852 = vpop.f32.mrb[0].mxu0
        %3853 = vdwg.mxu0
        %v3854 = vpack.c.bf16 %v3851, %v3848
        %s3855 = scalar_lea.vmem %s9, 128
        %v3856 = vld [vmem:[%s3855] sm:$0xf]
        %v3857 = vld [vmem:[%s3855 + $0x4] sm:$0xf]
        %v3858 = vld [vmem:[%s3855 + $0x8] sm:$0xf]
        %v3859 = vld [vmem:[%s3855 + $0xc] sm:$0xf]
        %v3864 = vunpack.c.l.b16 %v3856
        %v3865 = vunpack.c.l.b16 %v3857
        %v3866 = vunpack.c.l.b16 %v3858
        %v3867 = vunpack.c.l.b16 %v3859
        %v3868 = vpack.c.b16 %v3865, %v3864
        %v3869 = vpack.c.b16 %v3867, %v3866
        %v3873 = vsel %vm552, %v3854, 0
        %3875 = vmatprep.subr.bf16.mxu0 0
        %3876 = vmatpush1.bf16.msra.mxu0 %v3868
        %3877 = vmatprep.subr.bf16.mxu0 0
        %3878 = vmatpush1.bf16.msra.mxu0 %v3869
        %3879 = vmatprep.subr.bf16.mxu0 0
        %3880 = vmatpush1.bf16.msra.mxu0 0
        %3881 = vmatprep.subr.bf16.mxu0 0
        %3882 = vmatpush1.bf16.msra.mxu0 0
        %3883 = vmatprep.subr.bf16.mxu0 0
        %3884 = vmatpush1.bf16.msra.mxu0 0
        %3885 = vmatprep.subr.bf16.mxu0 0
        %3886 = vmatpush1.bf16.msra.mxu0 0
        %3887 = vmatprep.subr.bf16.mxu0 0
        %3888 = vmatpush1.bf16.msra.mxu0 0
        %3889 = vmatprep.subr.bf16.mxu0 0
        %3890 = vmatpush1.bf16.msra.mxu0 0
        %3891 = vmatprep.subr.bf16.mxu0 0
        %3892 = vmatpush1.bf16.msra.mxu0 0
        %3893 = vmatprep.subr.bf16.mxu0 0
        %3894 = vmatpush1.bf16.msra.mxu0 0
        %3895 = vmatprep.subr.bf16.mxu0 0
        %3896 = vmatpush1.bf16.msra.mxu0 0
        %3897 = vmatprep.subr.bf16.mxu0 0
        %3898 = vmatpush1.bf16.msra.mxu0 0
        %3899 = vmatprep.subr.bf16.mxu0 0
        %3900 = vmatpush1.bf16.msra.mxu0 0
        %3901 = vmatprep.subr.bf16.mxu0 0
        %3902 = vmatpush1.bf16.msra.mxu0 0
        %3903 = vmatprep.subr.bf16.mxu0 0
        %3904 = vmatpush1.bf16.msra.mxu0 0
        %3905 = vmatprep.subr.bf16.mxu0 0
        %3906 = vmatpush1.bf16.msra.mxu0 0
        %3907 = vmatprep.mubr.bf16.mxu0 0
        %3908 = vmatmul.mubr.bf16.gmra.mrb[0].mxu0 %v3873
        %v3909 = vpop.f32.mrb[0].mxu0
        %v3910 = vadd.f32 0.0, %v3909
        %v3911 = vpop.f32.mrb[0].mxu0
        %v3912 = vpop.f32.mrb[0].mxu0
        %v3913 = vadd.f32 0.0, %v3912
        %v3914 = vpop.f32.mrb[0].mxu0
        %3915 = vdwg.mxu0
        %v3916 = vadd.f32 %v3800, %v3910
        %v3917 = vadd.f32 %v3801, %v3913
        %v3918 = vld [vmem:[%s10] sm:$0x1]
        %v3919 = vlaneseq
        %v3920 = vshrl.u32 %v3919, 7
        %v3921 = vsub.s32 0, %v3920
        %v3922 = vrot.slane %v3918, %v3921
        %v3923 = vadd.f32 %v3916, %v3922
        %v3924 = vadd.f32 %v3917, %v3922
        %v3925 = vld [vmem:[%s11] sm:$0xff]
        %v3926 = vld [vmem:[%s11 + $0x8] sm:$0xff]
        %v3927 = vld [vmem:[%s11 + $0x10] sm:$0xff]
        %v3928 = vld [vmem:[%s11 + $0x18] sm:$0xff]
        %v3929 = vld [vmem:[%s11 + $0x20] sm:$0xff]
        %v3930 = vld [vmem:[%s11 + $0x28] sm:$0xff]
        %v3931 = vld [vmem:[%s11 + $0x30] sm:$0xff]
        %v3932 = vld [vmem:[%s11 + $0x38] sm:$0xff]
        %v3933 = vld [vmem:[%s10 + $0x1] sm:$0x1]
        %v3934 = vld [vmem:[%s10 + $0x2] sm:$0x1]
        %v3935 = vsel %vm790, %v3923, 0.0
        %v3936 = vsel %vm790, %v3924, 0.0
        %v3937 = vadd.f32 %v3935, %v3936
        %v3938 = vrot.slane %v3937, 4
        %v3939 = vadd.f32 %v3937, %v3938
        %v3940 = vrot.slane %v3939, 2
        %v3941 = vadd.f32 %v3939, %v3940
        %v3942 = vrot.slane %v3941, 1
        %v3943 = vadd.f32 %v3941, %v3942
        %v3944 = vmul.f32 %v3923, %v3923
        %v3945 = vmul.f32 %v3924, %v3924
        %v3946 = vsel %vm790, %v3944, 0.0
        %v3947 = vsel %vm790, %v3945, 0.0
        %v3948 = vadd.f32 %v3946, %v3947
        %v3949 = vrot.slane %v3948, 4
        %v3950 = vadd.f32 %v3948, %v3949
        %v3951 = vrot.slane %v3950, 2
        %v3952 = vadd.f32 %v3950, %v3951
        %v3953 = vrot.slane %v3952, 1
        %v3954 = vadd.f32 %v3952, %v3953
        %v3955 = vsel %vm603, %v3943, %v3954
        %v3957 = vsel %vm790, %v3955, 0
        %3959 = vmatprep.subr.mxu0 0.0
        %3960 = vmatpush1.msra.mxu0 %v3925
        %3961 = vmatprep.subr.mxu0 0.0
        %3962 = vmatpush1.msra.mxu0 %v3926
        %3963 = vmatprep.subr.mxu0 0.0
        %3964 = vmatpush1.msra.mxu0 %v3927
        %3965 = vmatprep.subr.mxu0 0.0
        %3966 = vmatpush1.msra.mxu0 %v3928
        %3967 = vmatprep.subr.mxu0 0.0
        %3968 = vmatpush1.msra.mxu0 %v3929
        %3969 = vmatprep.subr.mxu0 0.0
        %3970 = vmatpush1.msra.mxu0 %v3930
        %3971 = vmatprep.subr.mxu0 0.0
        %3972 = vmatpush1.msra.mxu0 %v3931
        %3973 = vmatprep.subr.mxu0 0.0
        %3974 = vmatpush1.msra.mxu0 %v3932
        %3975 = vmatprep.subr.mxu0 0.0
        %3976 = vmatpush1.msra.mxu0 0.0
        %3977 = vmatprep.subr.mxu0 0.0
        %3978 = vmatpush1.msra.mxu0 0.0
        %3979 = vmatprep.subr.mxu0 0.0
        %3980 = vmatpush1.msra.mxu0 0.0
        %3981 = vmatprep.subr.mxu0 0.0
        %3982 = vmatpush1.msra.mxu0 0.0
        %3983 = vmatprep.subr.mxu0 0.0
        %3984 = vmatpush1.msra.mxu0 0.0
        %3985 = vmatprep.subr.mxu0 0.0
        %3986 = vmatpush1.msra.mxu0 0.0
        %3987 = vmatprep.subr.mxu0 0.0
        %3988 = vmatpush1.msra.mxu0 0.0
        %3989 = vmatprep.subr.mxu0 0.0
        %3990 = vmatpush1.msra.mxu0 0.0
        %3991 = vmatprep.subr.mxu0 0.0
        %3992 = vmatpush1.msra.mxu0 0.0
        %3993 = vmatprep.subr.mxu0 0.0
        %3994 = vmatpush1.msra.mxu0 0.0
        %3995 = vmatprep.subr.mxu0 0.0
        %3996 = vmatpush1.msra.mxu0 0.0
        %3997 = vmatprep.subr.mxu0 0.0
        %3998 = vmatpush1.msra.mxu0 0.0
        %3999 = vmatprep.subr.mxu0 0.0
        %4000 = vmatpush1.msra.mxu0 0.0
        %4001 = vmatprep.subr.mxu0 0.0
        %4002 = vmatpush1.msra.mxu0 0.0
        %4003 = vmatprep.subr.mxu0 0.0
        %4004 = vmatpush1.msra.mxu0 0.0
        %4005 = vmatprep.subr.mxu0 0.0
        %4006 = vmatpush1.msra.mxu0 0.0
        %4007 = vmatprep.subr.mxu0 0.0
        %4008 = vmatpush1.msra.mxu0 0.0
        %4009 = vmatprep.subr.mxu0 0.0
        %4010 = vmatpush1.msra.mxu0 0.0
        %4011 = vmatprep.subr.mxu0 0.0
        %4012 = vmatpush1.msra.mxu0 0.0
        %4013 = vmatprep.subr.mxu0 0.0
        %4014 = vmatpush1.msra.mxu0 0.0
        %4015 = vmatprep.subr.mxu0 0.0
        %4016 = vmatpush1.msra.mxu0 0.0
        %4017 = vmatprep.subr.mxu0 0.0
        %4018 = vmatpush1.msra.mxu0 0.0
        %4019 = vmatprep.subr.mxu0 0.0
        %4020 = vmatpush1.msra.mxu0 0.0
        %4021 = vmatprep.subr.mxu0 0.0
        %4022 = vmatpush1.msra.mxu0 0.0
        %4023 = vmatprep.mubr.f32.mxu0 0.0
        %4024 = vmatmul.mubr.f32.gmra.mrb[0].mxu0 %v3957
        %v4025 = vpop.f32.mrb[0].mxu0
        %v4026 = vadd.f32 0.0, %v4025
        %v4027 = vpop.f32.mrb[0].mxu0
        %4028 = vdwg.mxu0
        %v4029 = vmul.f32 %v4026, %v4026
        %v4031 = vrot.slane %v4029, 7
        %v4033 = vsub.f32 %v4026, %v4031
        %v4034 = vmax.f32 %v4033, 0.0
        %v4035 = vadd.f32 %v4034, 1e-05
        %v4036 = vrsqrt.pop %v4035
        %v4037 = vlaneseq
        %v4038 = vshrl.u32 %v4037, 7
        %v4039 = vsub.s32 0, %v4038
        %v4040 = vrot.slane %v4026, %v4039
        %v4041 = vsub.f32 %v3923, %v4040
        %v4042 = vsub.f32 %v3924, %v4040
        %v4043 = vlaneseq
        %v4044 = vshrl.u32 %v4043, 7
        %v4045 = vsub.s32 1, %v4044
        %v4046 = vrot.slane %v4036, %v4045
        %v4047 = vmul.f32 %v4041, %v4046
        %v4048 = vmul.f32 %v4042, %v4046
        %v4049 = vlaneseq
        %v4050 = vshrl.u32 %v4049, 7
        %v4051 = vsub.s32 0, %v4050
        %v4052 = vrot.slane %v3933, %v4051
        %v4053 = vmul.f32 %v4047, %v4052
        %v4054 = vmul.f32 %v4048, %v4052
        %v4055 = vlaneseq
        %v4056 = vshrl.u32 %v4055, 7
        %v4057 = vsub.s32 0, %v4056
        %v4058 = vrot.slane %v3934, %v4057
        %v4059 = vadd.f32 %v4053, %v4058
        %v4060 = vadd.f32 %v4054, %v4058
        %vm4061 = vcmp.gt.f32.partialorder %v4059, 0.0
        %vm4062 = vcmp.gt.f32.partialorder %v4060, 0.0
        %v4063 = vmul.f32 %v4059, 0.2
        %v4064 = vmul.f32 %v4060, 0.2
        %v4065 = vsel %vm4061, %v4059, %v4063
        %v4066 = vsel %vm4062, %v4060, %v4064
        %4067 = vst.msk [vmem:[%s406] sm:$0xff] %vm790, %v4065
        %4068 = vst.msk [vmem:[%s406 + $0x8] sm:$0xff] %vm790, %v4066
        %s4069 = sand.u32 %s291, 1
        %s4070 = scalar_lea.sflag [#allocation3], %s4069
        %s4071 = sand.u32 %s291, 1
        %s4072 = smul.addr %s4071, 16
        %s4073 = scalar_lea.vmem [#allocation2], %s4072
        // Predicated region
        $region69: #{encoder_E_forward.1} parent=67 // pred_check
          %p4074 = pneg %p301
        $region70: #{encoder_E_forward.1} parent=67 // pred_check_branch
          %4076 = sbr.rel (%p4074) target = $region72
        $region71: #{encoder_E_forward.1} parent=67 // pred_region
          %s4078 = ssub.s32 256, 256
          %4079 = vsyncadd %s4070, %s4078
          %s4080 = smul.addr %s26, 2
          %s4081 = smul.addr %s4080, 128
          %s4082 = scalar_lea.hbm %s12, %s4081
          %s4083 = sshll.u32 %s4073, 4
          %s4084 = int_to_ptr.vmem [resolvable:$true] %s4083
          %4089 = dma.vmem_to_hbm [thread:$0]  %s4084, 256, %s4082, %s4070, 128, 128, 8
        $region72: #{encoder_E_forward.1} parent=67 // pred_fallthru
          _
      $region68: #{encoder_E_forward.1} parent=5 // pred_fallthru
        _
      %p4090 = scmp.le.s32.totalorder 2, %s21
      // Predicated region
      $region73: #{encoder_E_forward.1} parent=5 // pred_check
        %p4091 = pneg %p4090
      $region74: #{encoder_E_forward.1} parent=5 // pred_check_branch
        %4093 = sbr.rel (%p4091) target = $region76
      $region75: #{encoder_E_forward.1} parent=5 // pred_region
        %s4094 = ssub.s32 %s21, 2
        // Predicated region
        $region77: #{encoder_E_forward.1} parent=75 // pred_check
          %p4095 = pneg %p307
        $region78: #{encoder_E_forward.1} parent=75 // pred_check_branch
          %4097 = sbr.rel (%p4095) target = $region80
        $region79: #{encoder_E_forward.1} parent=75 // pred_region
          %s4098 = sand.u32 %s292, 1
          %s4099 = scalar_lea.sflag [#allocation3], %s4098
          %s4100 = sand.u32 %s292, 1
          %s4101 = smul.addr %s4100, 16
          %s4102 = scalar_lea.vmem [#allocation2], %s4101
          %4103 = dma.done %s4099, 256
        $region80: #{encoder_E_forward.1} parent=75 // pred_fallthru
          _
      $region76: #{encoder_E_forward.1} parent=5 // pred_fallthru
        _
    $region6: #{encoder_E_forward.1} parent=1 // loop_footer
      %s25 = sadd.s32 1, %s21
    $region7: #{encoder_E_forward.1} parent=1 // loop_footer_branch
      %20 = sbr.rel target = $region3
    $region8: #{encoder_E_forward.1} parent=1 // loop_exit
      _
    %4104 = vsyncpa [#allocation3], 1
    %s4105 = scalar_lea.sflag [#allocation3], 1
    %4106 = vsyncpa %s4105, 1

</llo_original>
